<compile_context>
chip_gen: v5e
topology: v5e:2x2
jax: 0.10.0
libtpu: 0.0.40
codegen_flags: <defaults>
</compile_context>

<pallas_src>
import functools

import jax
import jax.numpy as jnp
from jax import lax
from jax.experimental import pallas as pl
from jax.experimental.pallas import tpu as pltpu

# ----------------------- configuration (small, consistent with module) ---------------
EMBEDDING_DIM = 32
HIDDEN_DIM = 32                 # nn.LSTM hidden_size = HIDDEN_DIM // 2, bidirectional
H = HIDDEN_DIM // 2             # per-direction hidden size (16)
NUM_LAYERS = 4
TAGSET_SIZE = 4
BATCH = 8
SEQ = 8
BN_EPS = 1e-5

assert EMBEDDING_DIM == HIDDEN_DIM, "packing below assumes layer-0 input dim == 2H"


# ------------------------------ fused forward kernel ---------------------------------
def _tagger_kernel(x_ref,                      # (T*B, E)      time-major input seq
                   w1_ref, w2_ref,             # (L, 2H, 8H)   packed input-proj (bf16)
                   whh_ref,                    # (L, 2H, 8H)   packed recurrent  (bf16)
                   b_ref,                      # (L, 1, 8H)    packed gate biases (f32)
                   hw1_ref, hb1_ref,           # head Linear1 (BN folded)
                   hw2_ref, hb2_ref,           # head Linear2 (BN folded)
                   hw3_ref, hb3_ref,           # head Linear3
                   out_ref,                    # (T*B, TAGSET) log-probs (time-major)
                   seq_sc,                     # (T*B, 2H) current layer seq / raw state
                   gx_sc,                      # (T*B, 8H) hoisted input-proj gates
                   head_sc,                    # (T*B, 2H) time-aligned last-layer output
                   *, batch):
    f32 = jnp.float32
    bf16 = jnp.bfloat16
    L, H2, G = whh_ref.shape                   # num_layers, 2H, 8H
    Hd = H2 // 2                               # per-direction hidden
    B = batch
    T = x_ref.shape[0] // B

    for l in range(L):                         # static: fully unrolled
        w1 = w1_ref[l]                         # (2H, 8H) bf16, time-aligned part
        w2 = w2_ref[l]                         # (2H, 8H) bf16, time-reversed part
        whh = whh_ref[l]                       # (2H, 8H) bf16, block-diag by direction
        bias = b_ref[l]                        # (1, 8H)  f32

        # ---- hoisted input projection for BOTH directions (outside the recurrence) --
        seq = (x_ref[...] if l == 0 else seq_sc[...]).astype(bf16)   # (T*B, 2H)
        ga = jnp.dot(seq, w1, preferred_element_type=f32) + bias     # (T*B, 8H)
        gb = jnp.dot(seq, w2, preferred_element_type=f32)            # (T*B, 8H)
        # fused step s needs ga at time s and gb at time T-1-s
        for t in range(T):
            gx_sc[t * B:(t + 1) * B, :] = (ga[t * B:(t + 1) * B, :]
                                           + gb[(T - 1 - t) * B:(T - t) * B, :])

        # ---- fused bidirectional recurrence: gates tile is (B, 128) lane-dense ------
        h = jnp.zeros((B, H2), f32)            # [h_fwd | h_bwd]
        c = jnp.zeros((B, H2), f32)
        last = (l == L - 1)
        for s in range(T):                     # static: fully unrolled
            gates = gx_sc[s * B:(s + 1) * B, :] + jnp.dot(
                h.astype(bf16), whh, preferred_element_type=f32)     # (B, 8H)
            sig = jax.nn.sigmoid(gates)        # full-width EUP
            tnh = jnp.tanh(gates)              # full-width EUP
            i_g = sig[:, 0 * H2:1 * H2]        # [i_fwd | i_bwd]
            f_g = sig[:, 1 * H2:2 * H2]
            g_g = tnh[:, 2 * H2:3 * H2]
            o_g = sig[:, 3 * H2:4 * H2]
            c = f_g * c + i_g * g_g
            h = o_g * jnp.tanh(c)
            if not last:
                # store raw [h_fwd(s) | h_bwd(T-1-s)] with one dense store; the next
                # layer's packed W1/W2 absorb the time un-scrambling.
                seq_sc[s * B:(s + 1) * B, :] = h
            else:
                # time-aligned output for the tag head: fwd at time s, bwd at T-1-s
                head_sc[s * B:(s + 1) * B, 0:Hd] = h[:, 0:Hd]
                head_sc[(T - 1 - s) * B:(T - s) * B, Hd:H2] = h[:, Hd:H2]

    # ---- tag head: (Linear+BN+ReLU) x2 folded into Linear+ReLU, Linear, log_softmax -
    xh = head_sc[...]                                                  # (T*B, 2H)
    h1 = jnp.maximum(jnp.dot(xh, hw1_ref[...], preferred_element_type=f32)
                     + hb1_ref[...], 0.0)
    h2 = jnp.maximum(jnp.dot(h1, hw2_ref[...], preferred_element_type=f32)
                     + hb2_ref[...], 0.0)
    logits = jnp.dot(h2, hw3_ref[...], preferred_element_type=f32) + hb3_ref[...]
    z = logits - jnp.max(logits, axis=1, keepdims=True)
    out_ref[...] = z - jnp.log(jnp.sum(jnp.exp(z), axis=1, keepdims=True))


# ------------------------------- host-side wrapper ------------------------------------
@jax.jit
def lstm_tagger_forward(sentence, packed):
    """sentence: (B, T, EMBEDDING_DIM) f32 -> (B*T, TAGSET_SIZE) log-probs."""
    (w1_all, w2_all, whh_all, b_all, hw1, hb1, hw2, hb2, hw3, hb3) = packed
    Bb, Tt, Ee = sentence.shape
    x_tm = jnp.transpose(sentence, (1, 0, 2)).reshape(Tt * Bb, Ee)     # time-major

    kernel = functools.partial(_tagger_kernel, batch=Bb)
    out_tm = pl.pallas_call(
        kernel,
        out_shape=jax.ShapeDtypeStruct((Tt * Bb, TAGSET_SIZE), jnp.float32),
        in_specs=[pl.BlockSpec(memory_space=pltpu.MemorySpace.VMEM)] * 11,
        out_specs=pl.BlockSpec(memory_space=pltpu.MemorySpace.VMEM),
        scratch_shapes=[
            pltpu.VMEM((Tt * Bb, HIDDEN_DIM), jnp.float32),     # seq_sc
            pltpu.VMEM((Tt * Bb, 8 * H), jnp.float32),          # gx_sc
            pltpu.VMEM((Tt * Bb, HIDDEN_DIM), jnp.float32),     # head_sc
        ],
    )(x_tm, w1_all, w2_all, whh_all, b_all, hw1, hb1, hw2, hb2, hw3, hb3)

    # back to PyTorch row order (b*T + t)
    scores = jnp.transpose(out_tm.reshape(Tt, Bb, TAGSET_SIZE), (1, 0, 2))
    return scores.reshape(Bb * Tt, TAGSET_SIZE)


# ------------------------------ parameter packing --------------------------------------
def _colpack(m, half):
    """m: (rows, 4H) torch-gate-order [i f g o] -> (rows, 8H) packed gate columns.
    half=0 -> forward-direction slots, half=1 -> backward-direction slots."""
    rows = m.shape[0]
    out = jnp.zeros((rows, 8 * H), jnp.float32)
    for k in range(4):
        c0 = k * 2 * H + half * H
        out = out.at[:, c0:c0 + H].set(m[:, k * H:(k + 1) * H])
    return out


def pack_params(lstm_raw, head_raw):
    """Pack torch-layout params into the fused-kernel layout (runs once on host)."""
    w1_l, w2_l, whh_l, b_l = [], [], [], []
    for l in range(NUM_LAYERS):
        wih_f, whh_f, bih_f, bhh_f = lstm_raw[l][0]
        wih_b, whh_b, bih_b, bhh_b = lstm_raw[l][1]
        Pf = _colpack(wih_f.T, 0)                       # (Din, 8H)
        Pb = _colpack(wih_b.T, 1)                       # (Din, 8H)
        if l == 0:
            W1, W2 = Pf, Pb                             # layer-0 input is the sentence
        else:
            # layer input arrives as raw [h_fwd(s) | h_bwd(T-1-s)]; W1 is applied at
            # row s, W2 at row T-1-s, which exactly undoes the scrambling.
            W1 = jnp.concatenate([Pf[:H], Pb[H:]], axis=0)
            W2 = jnp.concatenate([Pb[:H], Pf[H:]], axis=0)
        Whh = jnp.concatenate([_colpack(whh_f.T, 0), _colpack(whh_b.T, 1)], axis=0)
        b_f, b_b = bih_f + bhh_f, bih_b + bhh_b
        bias = jnp.zeros((8 * H,), jnp.float32)
        for k in range(4):
            bias = bias.at[k * 2 * H:k * 2 * H + H].set(b_f[k * H:(k + 1) * H])
            bias = bias.at[k * 2 * H + H:(k + 1) * 2 * H].set(b_b[k * H:(k + 1) * H])
        w1_l.append(W1); w2_l.append(W2); whh_l.append(Whh)
        b_l.append(bias.reshape(1, 8 * H))

    w1_all = jnp.stack(w1_l).astype(jnp.bfloat16)       # (L, 2H, 8H)
    w2_all = jnp.stack(w2_l).astype(jnp.bfloat16)
    whh_all = jnp.stack(whh_l).astype(jnp.bfloat16)
    b_all = jnp.stack(b_l)                              # (L, 1, 8H) f32

    # fold eval-mode BatchNorm1d into the preceding Linear
    def fold(lin, bnp):
        w, b = lin
        gamma, beta, rmean, rvar = bnp
        scale = gamma * lax.rsqrt(rvar + BN_EPS)
        return (w.T * scale[None, :]).astype(jnp.float32), \
               ((b - rmean) * scale + beta).reshape(1, -1).astype(jnp.float32)

    hw1, hb1 = fold(head_raw["w1"], head_raw["bn1"])
    hw2, hb2 = fold(head_raw["w2"], head_raw["bn2"])
    w3, b3 = head_raw["w3"]
    hw3, hb3 = w3.T.astype(jnp.float32), b3.reshape(1, -1).astype(jnp.float32)
    return (w1_all, w2_all, whh_all, b_all, hw1, hb1, hw2, hb2, hw3, hb3)


# ------------------------------- parameter init ----------------------------------------
def init_params(key):
    keys = jax.random.split(key, 64)
    kit = iter(range(64))

    def rnd(shape, scale=0.1):
        return (scale * jax.random.normal(keys[next(kit)], shape)).astype(jnp.float32)

    def bf16_round(a):          # LSTM weights live in bf16 inside the kernel
        return a.astype(jnp.bfloat16).astype(jnp.float32)

    lstm_raw = []               # lstm_raw[l][d] = (w_ih, w_hh, b_ih, b_hh) torch layout
    for layer in range(NUM_LAYERS):
        din = EMBEDDING_DIM if layer == 0 else HIDDEN_DIM
        per_dir = []
        for _d in range(2):
            w_ih = bf16_round(rnd((4 * H, din)))
            w_hh = bf16_round(rnd((4 * H, H)))
            b_ih = rnd((4 * H,))
            b_hh = rnd((4 * H,))
            per_dir.append((w_ih, w_hh, b_ih, b_hh))
        lstm_raw.append(per_dir)

    def linear(din, dout):
        return rnd((dout, din)), rnd((dout,))

    def bn(dim):
        gamma = 1.0 + rnd((dim,), 0.05)
        beta = rnd((dim,), 0.05)
        rmean = rnd((dim,), 0.05)
        rvar = 1.0 + 0.1 * jnp.abs(rnd((dim,), 1.0))
        return gamma, beta, rmean, rvar

    head_raw = dict(w1=linear(HIDDEN_DIM, HIDDEN_DIM), bn1=bn(HIDDEN_DIM),
                    w2=linear(HIDDEN_DIM, HIDDEN_DIM), bn2=bn(HIDDEN_DIM),
                    w3=linear(HIDDEN_DIM, TAGSET_SIZE))
    return lstm_raw, head_raw


# --------------------------- pure-JAX reference (for checking) -------------------------
@jax.jit
def reference_forward(sentence, lstm_raw, head_raw):
    x = sentence                                            # (B, T, E)
    for l in range(NUM_LAYERS):
        outs = []
        for d in range(2):
            w_ih, w_hh, b_ih, b_hh = lstm_raw[l][d]
            xs = x if d == 0 else x[:, ::-1, :]
            h = jnp.zeros((x.shape[0], H), jnp.float32)
            c = jnp.zeros((x.shape[0], H), jnp.float32)
            hs = []
            for t in range(x.shape[1]):
                g = xs[:, t, :] @ w_ih.T + h @ w_hh.T + b_ih + b_hh
                i = jax.nn.sigmoid(g[:, 0:H]);      f = jax.nn.sigmoid(g[:, H:2 * H])
                gg = jnp.tanh(g[:, 2 * H:3 * H]);   o = jax.nn.sigmoid(g[:, 3 * H:4 * H])
                c = f * c + i * gg
                h = o * jnp.tanh(c)
                hs.append(h)
            out = jnp.stack(hs, axis=1)
            if d == 1:
                out = out[:, ::-1, :]
            outs.append(out)
        x = jnp.concatenate(outs, axis=-1)                  # (B, T, 2H)
    flat = x.reshape(-1, x.shape[-1])
    (w1, b1), (g1, be1, m1, v1) = head_raw["w1"], head_raw["bn1"]
    (w2, b2), (g2, be2, m2, v2) = head_raw["w2"], head_raw["bn2"]
    (w3, b3) = head_raw["w3"]
    h1 = flat @ w1.T + b1
    h1 = jnp.maximum((h1 - m1) * g1 * lax.rsqrt(v1 + BN_EPS) + be1, 0.0)
    h2 = h1 @ w2.T + b2
    h2 = jnp.maximum((h2 - m2) * g2 * lax.rsqrt(v2 + BN_EPS) + be2, 0.0)
    logits = h2 @ w3.T + b3
    return jax.nn.log_softmax(logits, axis=1)


if __name__ == "__main__":
    key = jax.random.PRNGKey(0)
    k_x, k_p = jax.random.split(key)
    sentence = jax.random.normal(k_x, (BATCH, SEQ, EMBEDDING_DIM), dtype=jnp.float32)
    lstm_raw, head_raw = init_params(k_p)
    packed = pack_params(lstm_raw, head_raw)

    scores = lstm_tagger_forward(sentence, packed)
    scores = jax.block_until_ready(scores)

    assert scores.shape == (BATCH * SEQ, TAGSET_SIZE)
    assert scores.dtype == jnp.float32
    # log_softmax rows must (approximately) sum to 1 after exp
    row_sums = jnp.exp(scores).sum(axis=1)
    assert jnp.allclose(row_sums, 1.0, atol=1e-4)
    # cross-check against a pure-JAX reference (bf16 operand rounding -> loose atol)
    ref = jax.block_until_ready(reference_forward(sentence, lstm_raw, head_raw))
    assert jnp.allclose(scores, ref, atol=5e-2), float(jnp.max(jnp.abs(scores - ref)))
    print("KERNEL_OK")
</pallas_src>

<mosaic_0001>
module attributes {stable_mosaic.version = 11 : i64} {
  func.func @_tagger_kernel(%arg0: memref<64x32xf32, #tpu.memory_space<vmem>>, %arg1: memref<4x32x128xbf16, #tpu.memory_space<vmem>>, %arg2: memref<4x32x128xbf16, #tpu.memory_space<vmem>>, %arg3: memref<4x32x128xbf16, #tpu.memory_space<vmem>>, %arg4: memref<4x1x128xf32, #tpu.memory_space<vmem>>, %arg5: memref<32x32xf32, #tpu.memory_space<vmem>>, %arg6: memref<1x32xf32, #tpu.memory_space<vmem>>, %arg7: memref<32x32xf32, #tpu.memory_space<vmem>>, %arg8: memref<1x32xf32, #tpu.memory_space<vmem>>, %arg9: memref<32x4xf32, #tpu.memory_space<vmem>>, %arg10: memref<1x4xf32, #tpu.memory_space<vmem>>, %arg11: memref<64x4xf32, #tpu.memory_space<vmem>>, %arg12: memref<64x32xf32, #tpu.memory_space<vmem>>, %arg13: memref<64x128xf32, #tpu.memory_space<vmem>>, %arg14: memref<64x32xf32, #tpu.memory_space<vmem>>) attributes {dimension_semantics = [], scalar_prefetch = 0 : i64, scratch_operands = 3 : i64, tpu.core_type = #tpu.core_type<tc>} {
    %c0 = arith.constant 0 : index
    %c0_0 = arith.constant 0 : index
    %c0_1 = arith.constant 0 : index
    %0 = vector.load %arg1[%c0, %c0_0, %c0_1] : memref<4x32x128xbf16, #tpu.memory_space<vmem>>, vector<1x32x128xbf16>
    %1 = vector.shape_cast %0 : vector<1x32x128xbf16> to vector<32x128xbf16>
    %c0_2 = arith.constant 0 : index
    %c0_3 = arith.constant 0 : index
    %c0_4 = arith.constant 0 : index
    %2 = vector.load %arg2[%c0_2, %c0_3, %c0_4] : memref<4x32x128xbf16, #tpu.memory_space<vmem>>, vector<1x32x128xbf16>
    %3 = vector.shape_cast %2 : vector<1x32x128xbf16> to vector<32x128xbf16>
    %c0_5 = arith.constant 0 : index
    %c0_6 = arith.constant 0 : index
    %c0_7 = arith.constant 0 : index
    %4 = vector.load %arg3[%c0_5, %c0_6, %c0_7] : memref<4x32x128xbf16, #tpu.memory_space<vmem>>, vector<1x32x128xbf16>
    %5 = vector.shape_cast %4 : vector<1x32x128xbf16> to vector<32x128xbf16>
    %c0_8 = arith.constant 0 : index
    %c0_9 = arith.constant 0 : index
    %c0_10 = arith.constant 0 : index
    %6 = vector.load %arg4[%c0_8, %c0_9, %c0_10] : memref<4x1x128xf32, #tpu.memory_space<vmem>>, vector<1x1x128xf32>
    %7 = vector.shape_cast %6 : vector<1x1x128xf32> to vector<1x128xf32>
    %c0_11 = arith.constant 0 : index
    %c0_12 = arith.constant 0 : index
    %8 = vector.load %arg0[%c0_11, %c0_12] : memref<64x32xf32, #tpu.memory_space<vmem>>, vector<64x32xf32>
    %9 = arith.truncf %8 : vector<64x32xf32> to vector<64x32xbf16>
    %cst = arith.constant dense<0.000000e+00> : vector<64x128xf32>
    %10 = tpu.matmul %9, %1, %cst {dimension_numbers = #tpu.dot_dimension_numbers<[1], [0], [0], [1], [0, 0, 1, 1], [], []>} : vector<64x32xbf16>, vector<32x128xbf16>, vector<64x128xf32> -> vector<64x128xf32>
    %11 = vector.broadcast %7 : vector<1x128xf32> to vector<64x128xf32>
    %12 = arith.addf %10, %11 : vector<64x128xf32>
    %cst_13 = arith.constant dense<0.000000e+00> : vector<64x128xf32>
    %13 = tpu.matmul %9, %3, %cst_13 {dimension_numbers = #tpu.dot_dimension_numbers<[1], [0], [0], [1], [0, 0, 1, 1], [], []>} : vector<64x32xbf16>, vector<32x128xbf16>, vector<64x128xf32> -> vector<64x128xf32>
    %14 = vector.extract_strided_slice %12 {offsets = [0, 0], sizes = [8, 128], strides = [1, 1]} : vector<64x128xf32> to vector<8x128xf32>
    %15 = vector.extract_strided_slice %13 {offsets = [56, 0], sizes = [8, 128], strides = [1, 1]} : vector<64x128xf32> to vector<8x128xf32>
    %16 = arith.addf %14, %15 : vector<8x128xf32>
    %c0_14 = arith.constant 0 : index
    %c0_15 = arith.constant 0 : index
    %17 = vector.load %arg13[%c0_14, %c0_15] : memref<64x128xf32, #tpu.memory_space<vmem>>, vector<8x128xf32>
    tpu.vector_store %arg13[%c0_14, %c0_15], %16 {strides = array<i32>} : memref<64x128xf32, #tpu.memory_space<vmem>>, vector<8x128xf32>,
    %18 = vector.extract_strided_slice %12 {offsets = [8, 0], sizes = [8, 128], strides = [1, 1]} : vector<64x128xf32> to vector<8x128xf32>
    %19 = vector.extract_strided_slice %13 {offsets = [48, 0], sizes = [8, 128], strides = [1, 1]} : vector<64x128xf32> to vector<8x128xf32>
    %20 = arith.addf %18, %19 : vector<8x128xf32>
    %c8 = arith.constant 8 : index
    %c0_16 = arith.constant 0 : index
    %21 = vector.load %arg13[%c8, %c0_16] : memref<64x128xf32, #tpu.memory_space<vmem>>, vector<8x128xf32>
    tpu.vector_store %arg13[%c8, %c0_16], %20 {strides = array<i32>} : memref<64x128xf32, #tpu.memory_space<vmem>>, vector<8x128xf32>,
    %22 = vector.extract_strided_slice %12 {offsets = [16, 0], sizes = [8, 128], strides = [1, 1]} : vector<64x128xf32> to vector<8x128xf32>
    %23 = vector.extract_strided_slice %13 {offsets = [40, 0], sizes = [8, 128], strides = [1, 1]} : vector<64x128xf32> to vector<8x128xf32>
    %24 = arith.addf %22, %23 : vector<8x128xf32>
    %c16 = arith.constant 16 : index
    %c0_17 = arith.constant 0 : index
    %25 = vector.load %arg13[%c16, %c0_17] : memref<64x128xf32, #tpu.memory_space<vmem>>, vector<8x128xf32>
    tpu.vector_store %arg13[%c16, %c0_17], %24 {strides = array<i32>} : memref<64x128xf32, #tpu.memory_space<vmem>>, vector<8x128xf32>,
    %26 = vector.extract_strided_slice %12 {offsets = [24, 0], sizes = [8, 128], strides = [1, 1]} : vector<64x128xf32> to vector<8x128xf32>
    %27 = vector.extract_strided_slice %13 {offsets = [32, 0], sizes = [8, 128], strides = [1, 1]} : vector<64x128xf32> to vector<8x128xf32>
    %28 = arith.addf %26, %27 : vector<8x128xf32>
    %c24 = arith.constant 24 : index
    %c0_18 = arith.constant 0 : index
    %29 = vector.load %arg13[%c24, %c0_18] : memref<64x128xf32, #tpu.memory_space<vmem>>, vector<8x128xf32>
    tpu.vector_store %arg13[%c24, %c0_18], %28 {strides = array<i32>} : memref<64x128xf32, #tpu.memory_space<vmem>>, vector<8x128xf32>,
    %30 = vector.extract_strided_slice %12 {offsets = [32, 0], sizes = [8, 128], strides = [1, 1]} : vector<64x128xf32> to vector<8x128xf32>
    %31 = vector.extract_strided_slice %13 {offsets = [24, 0], sizes = [8, 128], strides = [1, 1]} : vector<64x128xf32> to vector<8x128xf32>
    %32 = arith.addf %30, %31 : vector<8x128xf32>
    %c32 = arith.constant 32 : index
    %c0_19 = arith.constant 0 : index
    %33 = vector.load %arg13[%c32, %c0_19] : memref<64x128xf32, #tpu.memory_space<vmem>>, vector<8x128xf32>
    tpu.vector_store %arg13[%c32, %c0_19], %32 {strides = array<i32>} : memref<64x128xf32, #tpu.memory_space<vmem>>, vector<8x128xf32>,
    %34 = vector.extract_strided_slice %12 {offsets = [40, 0], sizes = [8, 128], strides = [1, 1]} : vector<64x128xf32> to vector<8x128xf32>
    %35 = vector.extract_strided_slice %13 {offsets = [16, 0], sizes = [8, 128], strides = [1, 1]} : vector<64x128xf32> to vector<8x128xf32>
    %36 = arith.addf %34, %35 : vector<8x128xf32>
    %c40 = arith.constant 40 : index
    %c0_20 = arith.constant 0 : index
    %37 = vector.load %arg13[%c40, %c0_20] : memref<64x128xf32, #tpu.memory_space<vmem>>, vector<8x128xf32>
    tpu.vector_store %arg13[%c40, %c0_20], %36 {strides = array<i32>} : memref<64x128xf32, #tpu.memory_space<vmem>>, vector<8x128xf32>,
    %38 = vector.extract_strided_slice %12 {offsets = [48, 0], sizes = [8, 128], strides = [1, 1]} : vector<64x128xf32> to vector<8x128xf32>
    %39 = vector.extract_strided_slice %13 {offsets = [8, 0], sizes = [8, 128], strides = [1, 1]} : vector<64x128xf32> to vector<8x128xf32>
    %40 = arith.addf %38, %39 : vector<8x128xf32>
    %c48 = arith.constant 48 : index
    %c0_21 = arith.constant 0 : index
    %41 = vector.load %arg13[%c48, %c0_21] : memref<64x128xf32, #tpu.memory_space<vmem>>, vector<8x128xf32>
    tpu.vector_store %arg13[%c48, %c0_21], %40 {strides = array<i32>} : memref<64x128xf32, #tpu.memory_space<vmem>>, vector<8x128xf32>,
    %42 = vector.extract_strided_slice %12 {offsets = [56, 0], sizes = [8, 128], strides = [1, 1]} : vector<64x128xf32> to vector<8x128xf32>
    %43 = vector.extract_strided_slice %13 {offsets = [0, 0], sizes = [8, 128], strides = [1, 1]} : vector<64x128xf32> to vector<8x128xf32>
    %44 = arith.addf %42, %43 : vector<8x128xf32>
    %c56 = arith.constant 56 : index
    %c0_22 = arith.constant 0 : index
    %45 = vector.load %arg13[%c56, %c0_22] : memref<64x128xf32, #tpu.memory_space<vmem>>, vector<8x128xf32>
    tpu.vector_store %arg13[%c56, %c0_22], %44 {strides = array<i32>} : memref<64x128xf32, #tpu.memory_space<vmem>>, vector<8x128xf32>,
    %cst_23 = arith.constant 0.000000e+00 : f32
    %46 = vector.broadcast %cst_23 : f32 to vector<8x32xf32>
    %cst_24 = arith.constant 0.000000e+00 : f32
    %47 = vector.broadcast %cst_24 : f32 to vector<8x32xf32>
    %c0_25 = arith.constant 0 : index
    %c0_26 = arith.constant 0 : index
    %48 = vector.load %arg13[%c0_25, %c0_26] : memref<64x128xf32, #tpu.memory_space<vmem>>, vector<8x128xf32>
    %49 = arith.truncf %46 : vector<8x32xf32> to vector<8x32xbf16>
    %cst_27 = arith.constant dense<0.000000e+00> : vector<8x128xf32>
    %50 = tpu.matmul %49, %5, %cst_27 {dimension_numbers = #tpu.dot_dimension_numbers<[1], [0], [0], [1], [0, 0, 1, 1], [], []>} : vector<8x32xbf16>, vector<32x128xbf16>, vector<8x128xf32> -> vector<8x128xf32>
    %51 = arith.addf %48, %50 : vector<8x128xf32>
    %52 = arith.negf %51 : vector<8x128xf32>
    %53 = math.exp %52 : vector<8x128xf32>
    %cst_28 = arith.constant 1.000000e+00 : f32
    %54 = vector.broadcast %cst_28 : f32 to vector<8x128xf32>
    %55 = arith.addf %54, %53 : vector<8x128xf32>
    %56 = arith.divf %54, %55 : vector<8x128xf32>
    %57 = math.tanh %51 : vector<8x128xf32>
    %58 = vector.extract_strided_slice %56 {offsets = [0, 0], sizes = [8, 32], strides = [1, 1]} : vector<8x128xf32> to vector<8x32xf32>
    %59 = vector.extract_strided_slice %56 {offsets = [0, 32], sizes = [8, 32], strides = [1, 1]} : vector<8x128xf32> to vector<8x32xf32>
    %60 = vector.extract_strided_slice %57 {offsets = [0, 64], sizes = [8, 32], strides = [1, 1]} : vector<8x128xf32> to vector<8x32xf32>
    %61 = vector.extract_strided_slice %56 {offsets = [0, 96], sizes = [8, 32], strides = [1, 1]} : vector<8x128xf32> to vector<8x32xf32>
    %62 = arith.mulf %59, %47 : vector<8x32xf32>
    %63 = arith.mulf %58, %60 : vector<8x32xf32>
    %64 = arith.addf %62, %63 : vector<8x32xf32>
    %65 = math.tanh %64 : vector<8x32xf32>
    %66 = arith.mulf %61, %65 : vector<8x32xf32>
    %c0_29 = arith.constant 0 : index
    %c0_30 = arith.constant 0 : index
    %67 = vector.load %arg12[%c0_29, %c0_30] : memref<64x32xf32, #tpu.memory_space<vmem>>, vector<8x32xf32>
    tpu.vector_store %arg12[%c0_29, %c0_30], %66 {strides = array<i32>} : memref<64x32xf32, #tpu.memory_space<vmem>>, vector<8x32xf32>,
    %c8_31 = arith.constant 8 : index
    %c0_32 = arith.constant 0 : index
    %68 = vector.load %arg13[%c8_31, %c0_32] : memref<64x128xf32, #tpu.memory_space<vmem>>, vector<8x128xf32>
    %69 = arith.truncf %66 : vector<8x32xf32> to vector<8x32xbf16>
    %cst_33 = arith.constant dense<0.000000e+00> : vector<8x128xf32>
    %70 = tpu.matmul %69, %5, %cst_33 {dimension_numbers = #tpu.dot_dimension_numbers<[1], [0], [0], [1], [0, 0, 1, 1], [], []>} : vector<8x32xbf16>, vector<32x128xbf16>, vector<8x128xf32> -> vector<8x128xf32>
    %71 = arith.addf %68, %70 : vector<8x128xf32>
    %72 = arith.negf %71 : vector<8x128xf32>
    %73 = math.exp %72 : vector<8x128xf32>
    %cst_34 = arith.constant 1.000000e+00 : f32
    %74 = vector.broadcast %cst_34 : f32 to vector<8x128xf32>
    %75 = arith.addf %74, %73 : vector<8x128xf32>
    %76 = arith.divf %74, %75 : vector<8x128xf32>
    %77 = math.tanh %71 : vector<8x128xf32>
    %78 = vector.extract_strided_slice %76 {offsets = [0, 0], sizes = [8, 32], strides = [1, 1]} : vector<8x128xf32> to vector<8x32xf32>
    %79 = vector.extract_strided_slice %76 {offsets = [0, 32], sizes = [8, 32], strides = [1, 1]} : vector<8x128xf32> to vector<8x32xf32>
    %80 = vector.extract_strided_slice %77 {offsets = [0, 64], sizes = [8, 32], strides = [1, 1]} : vector<8x128xf32> to vector<8x32xf32>
    %81 = vector.extract_strided_slice %76 {offsets = [0, 96], sizes = [8, 32], strides = [1, 1]} : vector<8x128xf32> to vector<8x32xf32>
    %82 = arith.mulf %79, %64 : vector<8x32xf32>
    %83 = arith.mulf %78, %80 : vector<8x32xf32>
    %84 = arith.addf %82, %83 : vector<8x32xf32>
    %85 = math.tanh %84 : vector<8x32xf32>
    %86 = arith.mulf %81, %85 : vector<8x32xf32>
    %c8_35 = arith.constant 8 : index
    %c0_36 = arith.constant 0 : index
    %87 = vector.load %arg12[%c8_35, %c0_36] : memref<64x32xf32, #tpu.memory_space<vmem>>, vector<8x32xf32>
    tpu.vector_store %arg12[%c8_35, %c0_36], %86 {strides = array<i32>} : memref<64x32xf32, #tpu.memory_space<vmem>>, vector<8x32xf32>,
    %c16_37 = arith.constant 16 : index
    %c0_38 = arith.constant 0 : index
    %88 = vector.load %arg13[%c16_37, %c0_38] : memref<64x128xf32, #tpu.memory_space<vmem>>, vector<8x128xf32>
    %89 = arith.truncf %86 : vector<8x32xf32> to vector<8x32xbf16>
    %cst_39 = arith.constant dense<0.000000e+00> : vector<8x128xf32>
    %90 = tpu.matmul %89, %5, %cst_39 {dimension_numbers = #tpu.dot_dimension_numbers<[1], [0], [0], [1], [0, 0, 1, 1], [], []>} : vector<8x32xbf16>, vector<32x128xbf16>, vector<8x128xf32> -> vector<8x128xf32>
    %91 = arith.addf %88, %90 : vector<8x128xf32>
    %92 = arith.negf %91 : vector<8x128xf32>
    %93 = math.exp %92 : vector<8x128xf32>
    %cst_40 = arith.constant 1.000000e+00 : f32
    %94 = vector.broadcast %cst_40 : f32 to vector<8x128xf32>
    %95 = arith.addf %94, %93 : vector<8x128xf32>
    %96 = arith.divf %94, %95 : vector<8x128xf32>
    %97 = math.tanh %91 : vector<8x128xf32>
    %98 = vector.extract_strided_slice %96 {offsets = [0, 0], sizes = [8, 32], strides = [1, 1]} : vector<8x128xf32> to vector<8x32xf32>
    %99 = vector.extract_strided_slice %96 {offsets = [0, 32], sizes = [8, 32], strides = [1, 1]} : vector<8x128xf32> to vector<8x32xf32>
    %100 = vector.extract_strided_slice %97 {offsets = [0, 64], sizes = [8, 32], strides = [1, 1]} : vector<8x128xf32> to vector<8x32xf32>
    %101 = vector.extract_strided_slice %96 {offsets = [0, 96], sizes = [8, 32], strides = [1, 1]} : vector<8x128xf32> to vector<8x32xf32>
    %102 = arith.mulf %99, %84 : vector<8x32xf32>
    %103 = arith.mulf %98, %100 : vector<8x32xf32>
    %104 = arith.addf %102, %103 : vector<8x32xf32>
    %105 = math.tanh %104 : vector<8x32xf32>
    %106 = arith.mulf %101, %105 : vector<8x32xf32>
    %c16_41 = arith.constant 16 : index
    %c0_42 = arith.constant 0 : index
    %107 = vector.load %arg12[%c16_41, %c0_42] : memref<64x32xf32, #tpu.memory_space<vmem>>, vector<8x32xf32>
    tpu.vector_store %arg12[%c16_41, %c0_42], %106 {strides = array<i32>} : memref<64x32xf32, #tpu.memory_space<vmem>>, vector<8x32xf32>,
    %c24_43 = arith.constant 24 : index
    %c0_44 = arith.constant 0 : index
    %108 = vector.load %arg13[%c24_43, %c0_44] : memref<64x128xf32, #tpu.memory_space<vmem>>, vector<8x128xf32>
    %109 = arith.truncf %106 : vector<8x32xf32> to vector<8x32xbf16>
    %cst_45 = arith.constant dense<0.000000e+00> : vector<8x128xf32>
    %110 = tpu.matmul %109, %5, %cst_45 {dimension_numbers = #tpu.dot_dimension_numbers<[1], [0], [0], [1], [0, 0, 1, 1], [], []>} : vector<8x32xbf16>, vector<32x128xbf16>, vector<8x128xf32> -> vector<8x128xf32>
    %111 = arith.addf %108, %110 : vector<8x128xf32>
    %112 = arith.negf %111 : vector<8x128xf32>
    %113 = math.exp %112 : vector<8x128xf32>
    %cst_46 = arith.constant 1.000000e+00 : f32
    %114 = vector.broadcast %cst_46 : f32 to vector<8x128xf32>
    %115 = arith.addf %114, %113 : vector<8x128xf32>
    %116 = arith.divf %114, %115 : vector<8x128xf32>
    %117 = math.tanh %111 : vector<8x128xf32>
    %118 = vector.extract_strided_slice %116 {offsets = [0, 0], sizes = [8, 32], strides = [1, 1]} : vector<8x128xf32> to vector<8x32xf32>
    %119 = vector.extract_strided_slice %116 {offsets = [0, 32], sizes = [8, 32], strides = [1, 1]} : vector<8x128xf32> to vector<8x32xf32>
    %120 = vector.extract_strided_slice %117 {offsets = [0, 64], sizes = [8, 32], strides = [1, 1]} : vector<8x128xf32> to vector<8x32xf32>
    %121 = vector.extract_strided_slice %116 {offsets = [0, 96], sizes = [8, 32], strides = [1, 1]} : vector<8x128xf32> to vector<8x32xf32>
    %122 = arith.mulf %119, %104 : vector<8x32xf32>
    %123 = arith.mulf %118, %120 : vector<8x32xf32>
    %124 = arith.addf %122, %123 : vector<8x32xf32>
    %125 = math.tanh %124 : vector<8x32xf32>
    %126 = arith.mulf %121, %125 : vector<8x32xf32>
    %c24_47 = arith.constant 24 : index
    %c0_48 = arith.constant 0 : index
    %127 = vector.load %arg12[%c24_47, %c0_48] : memref<64x32xf32, #tpu.memory_space<vmem>>, vector<8x32xf32>
    tpu.vector_store %arg12[%c24_47, %c0_48], %126 {strides = array<i32>} : memref<64x32xf32, #tpu.memory_space<vmem>>, vector<8x32xf32>,
    %c32_49 = arith.constant 32 : index
    %c0_50 = arith.constant 0 : index
    %128 = vector.load %arg13[%c32_49, %c0_50] : memref<64x128xf32, #tpu.memory_space<vmem>>, vector<8x128xf32>
    %129 = arith.truncf %126 : vector<8x32xf32> to vector<8x32xbf16>
    %cst_51 = arith.constant dense<0.000000e+00> : vector<8x128xf32>
    %130 = tpu.matmul %129, %5, %cst_51 {dimension_numbers = #tpu.dot_dimension_numbers<[1], [0], [0], [1], [0, 0, 1, 1], [], []>} : vector<8x32xbf16>, vector<32x128xbf16>, vector<8x128xf32> -> vector<8x128xf32>
    %131 = arith.addf %128, %130 : vector<8x128xf32>
    %132 = arith.negf %131 : vector<8x128xf32>
    %133 = math.exp %132 : vector<8x128xf32>
    %cst_52 = arith.constant 1.000000e+00 : f32
    %134 = vector.broadcast %cst_52 : f32 to vector<8x128xf32>
    %135 = arith.addf %134, %133 : vector<8x128xf32>
    %136 = arith.divf %134, %135 : vector<8x128xf32>
    %137 = math.tanh %131 : vector<8x128xf32>
    %138 = vector.extract_strided_slice %136 {offsets = [0, 0], sizes = [8, 32], strides = [1, 1]} : vector<8x128xf32> to vector<8x32xf32>
    %139 = vector.extract_strided_slice %136 {offsets = [0, 32], sizes = [8, 32], strides = [1, 1]} : vector<8x128xf32> to vector<8x32xf32>
    %140 = vector.extract_strided_slice %137 {offsets = [0, 64], sizes = [8, 32], strides = [1, 1]} : vector<8x128xf32> to vector<8x32xf32>
    %141 = vector.extract_strided_slice %136 {offsets = [0, 96], sizes = [8, 32], strides = [1, 1]} : vector<8x128xf32> to vector<8x32xf32>
    %142 = arith.mulf %139, %124 : vector<8x32xf32>
    %143 = arith.mulf %138, %140 : vector<8x32xf32>
    %144 = arith.addf %142, %143 : vector<8x32xf32>
    %145 = math.tanh %144 : vector<8x32xf32>
    %146 = arith.mulf %141, %145 : vector<8x32xf32>
    %c32_53 = arith.constant 32 : index
    %c0_54 = arith.constant 0 : index
    %147 = vector.load %arg12[%c32_53, %c0_54] : memref<64x32xf32, #tpu.memory_space<vmem>>, vector<8x32xf32>
    tpu.vector_store %arg12[%c32_53, %c0_54], %146 {strides = array<i32>} : memref<64x32xf32, #tpu.memory_space<vmem>>, vector<8x32xf32>,
    %c40_55 = arith.constant 40 : index
    %c0_56 = arith.constant 0 : index
    %148 = vector.load %arg13[%c40_55, %c0_56] : memref<64x128xf32, #tpu.memory_space<vmem>>, vector<8x128xf32>
    %149 = arith.truncf %146 : vector<8x32xf32> to vector<8x32xbf16>
    %cst_57 = arith.constant dense<0.000000e+00> : vector<8x128xf32>
    %150 = tpu.matmul %149, %5, %cst_57 {dimension_numbers = #tpu.dot_dimension_numbers<[1], [0], [0], [1], [0, 0, 1, 1], [], []>} : vector<8x32xbf16>, vector<32x128xbf16>, vector<8x128xf32> -> vector<8x128xf32>
    %151 = arith.addf %148, %150 : vector<8x128xf32>
    %152 = arith.negf %151 : vector<8x128xf32>
    %153 = math.exp %152 : vector<8x128xf32>
    %cst_58 = arith.constant 1.000000e+00 : f32
    %154 = vector.broadcast %cst_58 : f32 to vector<8x128xf32>
    %155 = arith.addf %154, %153 : vector<8x128xf32>
    %156 = arith.divf %154, %155 : vector<8x128xf32>
    %157 = math.tanh %151 : vector<8x128xf32>
    %158 = vector.extract_strided_slice %156 {offsets = [0, 0], sizes = [8, 32], strides = [1, 1]} : vector<8x128xf32> to vector<8x32xf32>
    %159 = vector.extract_strided_slice %156 {offsets = [0, 32], sizes = [8, 32], strides = [1, 1]} : vector<8x128xf32> to vector<8x32xf32>
    %160 = vector.extract_strided_slice %157 {offsets = [0, 64], sizes = [8, 32], strides = [1, 1]} : vector<8x128xf32> to vector<8x32xf32>
    %161 = vector.extract_strided_slice %156 {offsets = [0, 96], sizes = [8, 32], strides = [1, 1]} : vector<8x128xf32> to vector<8x32xf32>
    %162 = arith.mulf %159, %144 : vector<8x32xf32>
    %163 = arith.mulf %158, %160 : vector<8x32xf32>
    %164 = arith.addf %162, %163 : vector<8x32xf32>
    %165 = math.tanh %164 : vector<8x32xf32>
    %166 = arith.mulf %161, %165 : vector<8x32xf32>
    %c40_59 = arith.constant 40 : index
    %c0_60 = arith.constant 0 : index
    %167 = vector.load %arg12[%c40_59, %c0_60] : memref<64x32xf32, #tpu.memory_space<vmem>>, vector<8x32xf32>
    tpu.vector_store %arg12[%c40_59, %c0_60], %166 {strides = array<i32>} : memref<64x32xf32, #tpu.memory_space<vmem>>, vector<8x32xf32>,
    %c48_61 = arith.constant 48 : index
    %c0_62 = arith.constant 0 : index
    %168 = vector.load %arg13[%c48_61, %c0_62] : memref<64x128xf32, #tpu.memory_space<vmem>>, vector<8x128xf32>
    %169 = arith.truncf %166 : vector<8x32xf32> to vector<8x32xbf16>
    %cst_63 = arith.constant dense<0.000000e+00> : vector<8x128xf32>
    %170 = tpu.matmul %169, %5, %cst_63 {dimension_numbers = #tpu.dot_dimension_numbers<[1], [0], [0], [1], [0, 0, 1, 1], [], []>} : vector<8x32xbf16>, vector<32x128xbf16>, vector<8x128xf32> -> vector<8x128xf32>
    %171 = arith.addf %168, %170 : vector<8x128xf32>
    %172 = arith.negf %171 : vector<8x128xf32>
    %173 = math.exp %172 : vector<8x128xf32>
    %cst_64 = arith.constant 1.000000e+00 : f32
    %174 = vector.broadcast %cst_64 : f32 to vector<8x128xf32>
    %175 = arith.addf %174, %173 : vector<8x128xf32>
    %176 = arith.divf %174, %175 : vector<8x128xf32>
    %177 = math.tanh %171 : vector<8x128xf32>
    %178 = vector.extract_strided_slice %176 {offsets = [0, 0], sizes = [8, 32], strides = [1, 1]} : vector<8x128xf32> to vector<8x32xf32>
    %179 = vector.extract_strided_slice %176 {offsets = [0, 32], sizes = [8, 32], strides = [1, 1]} : vector<8x128xf32> to vector<8x32xf32>
    %180 = vector.extract_strided_slice %177 {offsets = [0, 64], sizes = [8, 32], strides = [1, 1]} : vector<8x128xf32> to vector<8x32xf32>
    %181 = vector.extract_strided_slice %176 {offsets = [0, 96], sizes = [8, 32], strides = [1, 1]} : vector<8x128xf32> to vector<8x32xf32>
    %182 = arith.mulf %179, %164 : vector<8x32xf32>
    %183 = arith.mulf %178, %180 : vector<8x32xf32>
    %184 = arith.addf %182, %183 : vector<8x32xf32>
    %185 = math.tanh %184 : vector<8x32xf32>
    %186 = arith.mulf %181, %185 : vector<8x32xf32>
    %c48_65 = arith.constant 48 : index
    %c0_66 = arith.constant 0 : index
    %187 = vector.load %arg12[%c48_65, %c0_66] : memref<64x32xf32, #tpu.memory_space<vmem>>, vector<8x32xf32>
    tpu.vector_store %arg12[%c48_65, %c0_66], %186 {strides = array<i32>} : memref<64x32xf32, #tpu.memory_space<vmem>>, vector<8x32xf32>,
    %c56_67 = arith.constant 56 : index
    %c0_68 = arith.constant 0 : index
    %188 = vector.load %arg13[%c56_67, %c0_68] : memref<64x128xf32, #tpu.memory_space<vmem>>, vector<8x128xf32>
    %189 = arith.truncf %186 : vector<8x32xf32> to vector<8x32xbf16>
    %cst_69 = arith.constant dense<0.000000e+00> : vector<8x128xf32>
    %190 = tpu.matmul %189, %5, %cst_69 {dimension_numbers = #tpu.dot_dimension_numbers<[1], [0], [0], [1], [0, 0, 1, 1], [], []>} : vector<8x32xbf16>, vector<32x128xbf16>, vector<8x128xf32> -> vector<8x128xf32>
    %191 = arith.addf %188, %190 : vector<8x128xf32>
    %192 = arith.negf %191 : vector<8x128xf32>
    %193 = math.exp %192 : vector<8x128xf32>
    %cst_70 = arith.constant 1.000000e+00 : f32
    %194 = vector.broadcast %cst_70 : f32 to vector<8x128xf32>
    %195 = arith.addf %194, %193 : vector<8x128xf32>
    %196 = arith.divf %194, %195 : vector<8x128xf32>
    %197 = math.tanh %191 : vector<8x128xf32>
    %198 = vector.extract_strided_slice %196 {offsets = [0, 0], sizes = [8, 32], strides = [1, 1]} : vector<8x128xf32> to vector<8x32xf32>
    %199 = vector.extract_strided_slice %196 {offsets = [0, 32], sizes = [8, 32], strides = [1, 1]} : vector<8x128xf32> to vector<8x32xf32>
    %200 = vector.extract_strided_slice %197 {offsets = [0, 64], sizes = [8, 32], strides = [1, 1]} : vector<8x128xf32> to vector<8x32xf32>
    %201 = vector.extract_strided_slice %196 {offsets = [0, 96], sizes = [8, 32], strides = [1, 1]} : vector<8x128xf32> to vector<8x32xf32>
    %202 = arith.mulf %199, %184 : vector<8x32xf32>
    %203 = arith.mulf %198, %200 : vector<8x32xf32>
    %204 = arith.addf %202, %203 : vector<8x32xf32>
    %205 = math.tanh %204 : vector<8x32xf32>
    %206 = arith.mulf %201, %205 : vector<8x32xf32>
    %c56_71 = arith.constant 56 : index
    %c0_72 = arith.constant 0 : index
    %207 = vector.load %arg12[%c56_71, %c0_72] : memref<64x32xf32, #tpu.memory_space<vmem>>, vector<8x32xf32>
    tpu.vector_store %arg12[%c56_71, %c0_72], %206 {strides = array<i32>} : memref<64x32xf32, #tpu.memory_space<vmem>>, vector<8x32xf32>,
    %c1 = arith.constant 1 : index
    %c0_73 = arith.constant 0 : index
    %c0_74 = arith.constant 0 : index
    %208 = vector.load %arg1[%c1, %c0_73, %c0_74] : memref<4x32x128xbf16, #tpu.memory_space<vmem>>, vector<1x32x128xbf16>
    %209 = vector.shape_cast %208 : vector<1x32x128xbf16> to vector<32x128xbf16>
    %c1_75 = arith.constant 1 : index
    %c0_76 = arith.constant 0 : index
    %c0_77 = arith.constant 0 : index
    %210 = vector.load %arg2[%c1_75, %c0_76, %c0_77] : memref<4x32x128xbf16, #tpu.memory_space<vmem>>, vector<1x32x128xbf16>
    %211 = vector.shape_cast %210 : vector<1x32x128xbf16> to vector<32x128xbf16>
    %c1_78 = arith.constant 1 : index
    %c0_79 = arith.constant 0 : index
    %c0_80 = arith.constant 0 : index
    %212 = vector.load %arg3[%c1_78, %c0_79, %c0_80] : memref<4x32x128xbf16, #tpu.memory_space<vmem>>, vector<1x32x128xbf16>
    %213 = vector.shape_cast %212 : vector<1x32x128xbf16> to vector<32x128xbf16>
    %c1_81 = arith.constant 1 : index
    %c0_82 = arith.constant 0 : index
    %c0_83 = arith.constant 0 : index
    %214 = vector.load %arg4[%c1_81, %c0_82, %c0_83] : memref<4x1x128xf32, #tpu.memory_space<vmem>>, vector<1x1x128xf32>
    %215 = vector.shape_cast %214 : vector<1x1x128xf32> to vector<1x128xf32>
    %c0_84 = arith.constant 0 : index
    %c0_85 = arith.constant 0 : index
    %216 = vector.load %arg12[%c0_84, %c0_85] : memref<64x32xf32, #tpu.memory_space<vmem>>, vector<64x32xf32>
    %217 = arith.truncf %216 : vector<64x32xf32> to vector<64x32xbf16>
    %cst_86 = arith.constant dense<0.000000e+00> : vector<64x128xf32>
    %218 = tpu.matmul %217, %209, %cst_86 {dimension_numbers = #tpu.dot_dimension_numbers<[1], [0], [0], [1], [0, 0, 1, 1], [], []>} : vector<64x32xbf16>, vector<32x128xbf16>, vector<64x128xf32> -> vector<64x128xf32>
    %219 = vector.broadcast %215 : vector<1x128xf32> to vector<64x128xf32>
    %220 = arith.addf %218, %219 : vector<64x128xf32>
    %cst_87 = arith.constant dense<0.000000e+00> : vector<64x128xf32>
    %221 = tpu.matmul %217, %211, %cst_87 {dimension_numbers = #tpu.dot_dimension_numbers<[1], [0], [0], [1], [0, 0, 1, 1], [], []>} : vector<64x32xbf16>, vector<32x128xbf16>, vector<64x128xf32> -> vector<64x128xf32>
    %222 = vector.extract_strided_slice %220 {offsets = [0, 0], sizes = [8, 128], strides = [1, 1]} : vector<64x128xf32> to vector<8x128xf32>
    %223 = vector.extract_strided_slice %221 {offsets = [56, 0], sizes = [8, 128], strides = [1, 1]} : vector<64x128xf32> to vector<8x128xf32>
    %224 = arith.addf %222, %223 : vector<8x128xf32>
    %c0_88 = arith.constant 0 : index
    %c0_89 = arith.constant 0 : index
    %225 = vector.load %arg13[%c0_88, %c0_89] : memref<64x128xf32, #tpu.memory_space<vmem>>, vector<8x128xf32>
    tpu.vector_store %arg13[%c0_88, %c0_89], %224 {strides = array<i32>} : memref<64x128xf32, #tpu.memory_space<vmem>>, vector<8x128xf32>,
    %226 = vector.extract_strided_slice %220 {offsets = [8, 0], sizes = [8, 128], strides = [1, 1]} : vector<64x128xf32> to vector<8x128xf32>
    %227 = vector.extract_strided_slice %221 {offsets = [48, 0], sizes = [8, 128], strides = [1, 1]} : vector<64x128xf32> to vector<8x128xf32>
    %228 = arith.addf %226, %227 : vector<8x128xf32>
    %c8_90 = arith.constant 8 : index
    %c0_91 = arith.constant 0 : index
    %229 = vector.load %arg13[%c8_90, %c0_91] : memref<64x128xf32, #tpu.memory_space<vmem>>, vector<8x128xf32>
    tpu.vector_store %arg13[%c8_90, %c0_91], %228 {strides = array<i32>} : memref<64x128xf32, #tpu.memory_space<vmem>>, vector<8x128xf32>,
    %230 = vector.extract_strided_slice %220 {offsets = [16, 0], sizes = [8, 128], strides = [1, 1]} : vector<64x128xf32> to vector<8x128xf32>
    %231 = vector.extract_strided_slice %221 {offsets = [40, 0], sizes = [8, 128], strides = [1, 1]} : vector<64x128xf32> to vector<8x128xf32>
    %232 = arith.addf %230, %231 : vector<8x128xf32>
    %c16_92 = arith.constant 16 : index
    %c0_93 = arith.constant 0 : index
    %233 = vector.load %arg13[%c16_92, %c0_93] : memref<64x128xf32, #tpu.memory_space<vmem>>, vector<8x128xf32>
    tpu.vector_store %arg13[%c16_92, %c0_93], %232 {strides = array<i32>} : memref<64x128xf32, #tpu.memory_space<vmem>>, vector<8x128xf32>,
    %234 = vector.extract_strided_slice %220 {offsets = [24, 0], sizes = [8, 128], strides = [1, 1]} : vector<64x128xf32> to vector<8x128xf32>
    %235 = vector.extract_strided_slice %221 {offsets = [32, 0], sizes = [8, 128], strides = [1, 1]} : vector<64x128xf32> to vector<8x128xf32>
    %236 = arith.addf %234, %235 : vector<8x128xf32>
    %c24_94 = arith.constant 24 : index
    %c0_95 = arith.constant 0 : index
    %237 = vector.load %arg13[%c24_94, %c0_95] : memref<64x128xf32, #tpu.memory_space<vmem>>, vector<8x128xf32>
    tpu.vector_store %arg13[%c24_94, %c0_95], %236 {strides = array<i32>} : memref<64x128xf32, #tpu.memory_space<vmem>>, vector<8x128xf32>,
    %238 = vector.extract_strided_slice %220 {offsets = [32, 0], sizes = [8, 128], strides = [1, 1]} : vector<64x128xf32> to vector<8x128xf32>
    %239 = vector.extract_strided_slice %221 {offsets = [24, 0], sizes = [8, 128], strides = [1, 1]} : vector<64x128xf32> to vector<8x128xf32>
    %240 = arith.addf %238, %239 : vector<8x128xf32>
    %c32_96 = arith.constant 32 : index
    %c0_97 = arith.constant 0 : index
    %241 = vector.load %arg13[%c32_96, %c0_97] : memref<64x128xf32, #tpu.memory_space<vmem>>, vector<8x128xf32>
    tpu.vector_store %arg13[%c32_96, %c0_97], %240 {strides = array<i32>} : memref<64x128xf32, #tpu.memory_space<vmem>>, vector<8x128xf32>,
    %242 = vector.extract_strided_slice %220 {offsets = [40, 0], sizes = [8, 128], strides = [1, 1]} : vector<64x128xf32> to vector<8x128xf32>
    %243 = vector.extract_strided_slice %221 {offsets = [16, 0], sizes = [8, 128], strides = [1, 1]} : vector<64x128xf32> to vector<8x128xf32>
    %244 = arith.addf %242, %243 : vector<8x128xf32>
    %c40_98 = arith.constant 40 : index
    %c0_99 = arith.constant 0 : index
    %245 = vector.load %arg13[%c40_98, %c0_99] : memref<64x128xf32, #tpu.memory_space<vmem>>, vector<8x128xf32>
    tpu.vector_store %arg13[%c40_98, %c0_99], %244 {strides = array<i32>} : memref<64x128xf32, #tpu.memory_space<vmem>>, vector<8x128xf32>,
    %246 = vector.extract_strided_slice %220 {offsets = [48, 0], sizes = [8, 128], strides = [1, 1]} : vector<64x128xf32> to vector<8x128xf32>
    %247 = vector.extract_strided_slice %221 {offsets = [8, 0], sizes = [8, 128], strides = [1, 1]} : vector<64x128xf32> to vector<8x128xf32>
    %248 = arith.addf %246, %247 : vector<8x128xf32>
    %c48_100 = arith.constant 48 : index
    %c0_101 = arith.constant 0 : index
    %249 = vector.load %arg13[%c48_100, %c0_101] : memref<64x128xf32, #tpu.memory_space<vmem>>, vector<8x128xf32>
    tpu.vector_store %arg13[%c48_100, %c0_101], %248 {strides = array<i32>} : memref<64x128xf32, #tpu.memory_space<vmem>>, vector<8x128xf32>,
    %250 = vector.extract_strided_slice %220 {offsets = [56, 0], sizes = [8, 128], strides = [1, 1]} : vector<64x128xf32> to vector<8x128xf32>
    %251 = vector.extract_strided_slice %221 {offsets = [0, 0], sizes = [8, 128], strides = [1, 1]} : vector<64x128xf32> to vector<8x128xf32>
    %252 = arith.addf %250, %251 : vector<8x128xf32>
    %c56_102 = arith.constant 56 : index
    %c0_103 = arith.constant 0 : index
    %253 = vector.load %arg13[%c56_102, %c0_103] : memref<64x128xf32, #tpu.memory_space<vmem>>, vector<8x128xf32>
    tpu.vector_store %arg13[%c56_102, %c0_103], %252 {strides = array<i32>} : memref<64x128xf32, #tpu.memory_space<vmem>>, vector<8x128xf32>,
    %cst_104 = arith.constant 0.000000e+00 : f32
    %254 = vector.broadcast %cst_104 : f32 to vector<8x32xf32>
    %cst_105 = arith.constant 0.000000e+00 : f32
    %255 = vector.broadcast %cst_105 : f32 to vector<8x32xf32>
    %c0_106 = arith.constant 0 : index
    %c0_107 = arith.constant 0 : index
    %256 = vector.load %arg13[%c0_106, %c0_107] : memref<64x128xf32, #tpu.memory_space<vmem>>, vector<8x128xf32>
    %257 = arith.truncf %254 : vector<8x32xf32> to vector<8x32xbf16>
    %cst_108 = arith.constant dense<0.000000e+00> : vector<8x128xf32>
    %258 = tpu.matmul %257, %213, %cst_108 {dimension_numbers = #tpu.dot_dimension_numbers<[1], [0], [0], [1], [0, 0, 1, 1], [], []>} : vector<8x32xbf16>, vector<32x128xbf16>, vector<8x128xf32> -> vector<8x128xf32>
    %259 = arith.addf %256, %258 : vector<8x128xf32>
    %260 = arith.negf %259 : vector<8x128xf32>
    %261 = math.exp %260 : vector<8x128xf32>
    %cst_109 = arith.constant 1.000000e+00 : f32
    %262 = vector.broadcast %cst_109 : f32 to vector<8x128xf32>
    %263 = arith.addf %262, %261 : vector<8x128xf32>
    %264 = arith.divf %262, %263 : vector<8x128xf32>
    %265 = math.tanh %259 : vector<8x128xf32>
    %266 = vector.extract_strided_slice %264 {offsets = [0, 0], sizes = [8, 32], strides = [1, 1]} : vector<8x128xf32> to vector<8x32xf32>
    %267 = vector.extract_strided_slice %264 {offsets = [0, 32], sizes = [8, 32], strides = [1, 1]} : vector<8x128xf32> to vector<8x32xf32>
    %268 = vector.extract_strided_slice %265 {offsets = [0, 64], sizes = [8, 32], strides = [1, 1]} : vector<8x128xf32> to vector<8x32xf32>
    %269 = vector.extract_strided_slice %264 {offsets = [0, 96], sizes = [8, 32], strides = [1, 1]} : vector<8x128xf32> to vector<8x32xf32>
    %270 = arith.mulf %267, %255 : vector<8x32xf32>
    %271 = arith.mulf %266, %268 : vector<8x32xf32>
    %272 = arith.addf %270, %271 : vector<8x32xf32>
    %273 = math.tanh %272 : vector<8x32xf32>
    %274 = arith.mulf %269, %273 : vector<8x32xf32>
    %c0_110 = arith.constant 0 : index
    %c0_111 = arith.constant 0 : index
    %275 = vector.load %arg12[%c0_110, %c0_111] : memref<64x32xf32, #tpu.memory_space<vmem>>, vector<8x32xf32>
    tpu.vector_store %arg12[%c0_110, %c0_111], %274 {strides = array<i32>} : memref<64x32xf32, #tpu.memory_space<vmem>>, vector<8x32xf32>,
    %c8_112 = arith.constant 8 : index
    %c0_113 = arith.constant 0 : index
    %276 = vector.load %arg13[%c8_112, %c0_113] : memref<64x128xf32, #tpu.memory_space<vmem>>, vector<8x128xf32>
    %277 = arith.truncf %274 : vector<8x32xf32> to vector<8x32xbf16>
    %cst_114 = arith.constant dense<0.000000e+00> : vector<8x128xf32>
    %278 = tpu.matmul %277, %213, %cst_114 {dimension_numbers = #tpu.dot_dimension_numbers<[1], [0], [0], [1], [0, 0, 1, 1], [], []>} : vector<8x32xbf16>, vector<32x128xbf16>, vector<8x128xf32> -> vector<8x128xf32>
    %279 = arith.addf %276, %278 : vector<8x128xf32>
    %280 = arith.negf %279 : vector<8x128xf32>
    %281 = math.exp %280 : vector<8x128xf32>
    %cst_115 = arith.constant 1.000000e+00 : f32
    %282 = vector.broadcast %cst_115 : f32 to vector<8x128xf32>
    %283 = arith.addf %282, %281 : vector<8x128xf32>
    %284 = arith.divf %282, %283 : vector<8x128xf32>
    %285 = math.tanh %279 : vector<8x128xf32>
    %286 = vector.extract_strided_slice %284 {offsets = [0, 0], sizes = [8, 32], strides = [1, 1]} : vector<8x128xf32> to vector<8x32xf32>
    %287 = vector.extract_strided_slice %284 {offsets = [0, 32], sizes = [8, 32], strides = [1, 1]} : vector<8x128xf32> to vector<8x32xf32>
    %288 = vector.extract_strided_slice %285 {offsets = [0, 64], sizes = [8, 32], strides = [1, 1]} : vector<8x128xf32> to vector<8x32xf32>
    %289 = vector.extract_strided_slice %284 {offsets = [0, 96], sizes = [8, 32], strides = [1, 1]} : vector<8x128xf32> to vector<8x32xf32>
    %290 = arith.mulf %287, %272 : vector<8x32xf32>
    %291 = arith.mulf %286, %288 : vector<8x32xf32>
    %292 = arith.addf %290, %291 : vector<8x32xf32>
    %293 = math.tanh %292 : vector<8x32xf32>
    %294 = arith.mulf %289, %293 : vector<8x32xf32>
    %c8_116 = arith.constant 8 : index
    %c0_117 = arith.constant 0 : index
    %295 = vector.load %arg12[%c8_116, %c0_117] : memref<64x32xf32, #tpu.memory_space<vmem>>, vector<8x32xf32>
    tpu.vector_store %arg12[%c8_116, %c0_117], %294 {strides = array<i32>} : memref<64x32xf32, #tpu.memory_space<vmem>>, vector<8x32xf32>,
    %c16_118 = arith.constant 16 : index
    %c0_119 = arith.constant 0 : index
    %296 = vector.load %arg13[%c16_118, %c0_119] : memref<64x128xf32, #tpu.memory_space<vmem>>, vector<8x128xf32>
    %297 = arith.truncf %294 : vector<8x32xf32> to vector<8x32xbf16>
    %cst_120 = arith.constant dense<0.000000e+00> : vector<8x128xf32>
    %298 = tpu.matmul %297, %213, %cst_120 {dimension_numbers = #tpu.dot_dimension_numbers<[1], [0], [0], [1], [0, 0, 1, 1], [], []>} : vector<8x32xbf16>, vector<32x128xbf16>, vector<8x128xf32> -> vector<8x128xf32>
    %299 = arith.addf %296, %298 : vector<8x128xf32>
    %300 = arith.negf %299 : vector<8x128xf32>
    %301 = math.exp %300 : vector<8x128xf32>
    %cst_121 = arith.constant 1.000000e+00 : f32
    %302 = vector.broadcast %cst_121 : f32 to vector<8x128xf32>
    %303 = arith.addf %302, %301 : vector<8x128xf32>
    %304 = arith.divf %302, %303 : vector<8x128xf32>
    %305 = math.tanh %299 : vector<8x128xf32>
    %306 = vector.extract_strided_slice %304 {offsets = [0, 0], sizes = [8, 32], strides = [1, 1]} : vector<8x128xf32> to vector<8x32xf32>
    %307 = vector.extract_strided_slice %304 {offsets = [0, 32], sizes = [8, 32], strides = [1, 1]} : vector<8x128xf32> to vector<8x32xf32>
    %308 = vector.extract_strided_slice %305 {offsets = [0, 64], sizes = [8, 32], strides = [1, 1]} : vector<8x128xf32> to vector<8x32xf32>
    %309 = vector.extract_strided_slice %304 {offsets = [0, 96], sizes = [8, 32], strides = [1, 1]} : vector<8x128xf32> to vector<8x32xf32>
    %310 = arith.mulf %307, %292 : vector<8x32xf32>
    %311 = arith.mulf %306, %308 : vector<8x32xf32>
    %312 = arith.addf %310, %311 : vector<8x32xf32>
    %313 = math.tanh %312 : vector<8x32xf32>
    %314 = arith.mulf %309, %313 : vector<8x32xf32>
    %c16_122 = arith.constant 16 : index
    %c0_123 = arith.constant 0 : index
    %315 = vector.load %arg12[%c16_122, %c0_123] : memref<64x32xf32, #tpu.memory_space<vmem>>, vector<8x32xf32>
    tpu.vector_store %arg12[%c16_122, %c0_123], %314 {strides = array<i32>} : memref<64x32xf32, #tpu.memory_space<vmem>>, vector<8x32xf32>,
    %c24_124 = arith.constant 24 : index
    %c0_125 = arith.constant 0 : index
    %316 = vector.load %arg13[%c24_124, %c0_125] : memref<64x128xf32, #tpu.memory_space<vmem>>, vector<8x128xf32>
    %317 = arith.truncf %314 : vector<8x32xf32> to vector<8x32xbf16>
    %cst_126 = arith.constant dense<0.000000e+00> : vector<8x128xf32>
    %318 = tpu.matmul %317, %213, %cst_126 {dimension_numbers = #tpu.dot_dimension_numbers<[1], [0], [0], [1], [0, 0, 1, 1], [], []>} : vector<8x32xbf16>, vector<32x128xbf16>, vector<8x128xf32> -> vector<8x128xf32>
    %319 = arith.addf %316, %318 : vector<8x128xf32>
    %320 = arith.negf %319 : vector<8x128xf32>
    %321 = math.exp %320 : vector<8x128xf32>
    %cst_127 = arith.constant 1.000000e+00 : f32
    %322 = vector.broadcast %cst_127 : f32 to vector<8x128xf32>
    %323 = arith.addf %322, %321 : vector<8x128xf32>
    %324 = arith.divf %322, %323 : vector<8x128xf32>
    %325 = math.tanh %319 : vector<8x128xf32>
    %326 = vector.extract_strided_slice %324 {offsets = [0, 0], sizes = [8, 32], strides = [1, 1]} : vector<8x128xf32> to vector<8x32xf32>
    %327 = vector.extract_strided_slice %324 {offsets = [0, 32], sizes = [8, 32], strides = [1, 1]} : vector<8x128xf32> to vector<8x32xf32>
    %328 = vector.extract_strided_slice %325 {offsets = [0, 64], sizes = [8, 32], strides = [1, 1]} : vector<8x128xf32> to vector<8x32xf32>
    %329 = vector.extract_strided_slice %324 {offsets = [0, 96], sizes = [8, 32], strides = [1, 1]} : vector<8x128xf32> to vector<8x32xf32>
    %330 = arith.mulf %327, %312 : vector<8x32xf32>
    %331 = arith.mulf %326, %328 : vector<8x32xf32>
    %332 = arith.addf %330, %331 : vector<8x32xf32>
    %333 = math.tanh %332 : vector<8x32xf32>
    %334 = arith.mulf %329, %333 : vector<8x32xf32>
    %c24_128 = arith.constant 24 : index
    %c0_129 = arith.constant 0 : index
    %335 = vector.load %arg12[%c24_128, %c0_129] : memref<64x32xf32, #tpu.memory_space<vmem>>, vector<8x32xf32>
    tpu.vector_store %arg12[%c24_128, %c0_129], %334 {strides = array<i32>} : memref<64x32xf32, #tpu.memory_space<vmem>>, vector<8x32xf32>,
    %c32_130 = arith.constant 32 : index
    %c0_131 = arith.constant 0 : index
    %336 = vector.load %arg13[%c32_130, %c0_131] : memref<64x128xf32, #tpu.memory_space<vmem>>, vector<8x128xf32>
    %337 = arith.truncf %334 : vector<8x32xf32> to vector<8x32xbf16>
    %cst_132 = arith.constant dense<0.000000e+00> : vector<8x128xf32>
    %338 = tpu.matmul %337, %213, %cst_132 {dimension_numbers = #tpu.dot_dimension_numbers<[1], [0], [0], [1], [0, 0, 1, 1], [], []>} : vector<8x32xbf16>, vector<32x128xbf16>, vector<8x128xf32> -> vector<8x128xf32>
    %339 = arith.addf %336, %338 : vector<8x128xf32>
    %340 = arith.negf %339 : vector<8x128xf32>
    %341 = math.exp %340 : vector<8x128xf32>
    %cst_133 = arith.constant 1.000000e+00 : f32
    %342 = vector.broadcast %cst_133 : f32 to vector<8x128xf32>
    %343 = arith.addf %342, %341 : vector<8x128xf32>
    %344 = arith.divf %342, %343 : vector<8x128xf32>
    %345 = math.tanh %339 : vector<8x128xf32>
    %346 = vector.extract_strided_slice %344 {offsets = [0, 0], sizes = [8, 32], strides = [1, 1]} : vector<8x128xf32> to vector<8x32xf32>
    %347 = vector.extract_strided_slice %344 {offsets = [0, 32], sizes = [8, 32], strides = [1, 1]} : vector<8x128xf32> to vector<8x32xf32>
    %348 = vector.extract_strided_slice %345 {offsets = [0, 64], sizes = [8, 32], strides = [1, 1]} : vector<8x128xf32> to vector<8x32xf32>
    %349 = vector.extract_strided_slice %344 {offsets = [0, 96], sizes = [8, 32], strides = [1, 1]} : vector<8x128xf32> to vector<8x32xf32>
    %350 = arith.mulf %347, %332 : vector<8x32xf32>
    %351 = arith.mulf %346, %348 : vector<8x32xf32>
    %352 = arith.addf %350, %351 : vector<8x32xf32>
    %353 = math.tanh %352 : vector<8x32xf32>
    %354 = arith.mulf %349, %353 : vector<8x32xf32>
    %c32_134 = arith.constant 32 : index
    %c0_135 = arith.constant 0 : index
    %355 = vector.load %arg12[%c32_134, %c0_135] : memref<64x32xf32, #tpu.memory_space<vmem>>, vector<8x32xf32>
    tpu.vector_store %arg12[%c32_134, %c0_135], %354 {strides = array<i32>} : memref<64x32xf32, #tpu.memory_space<vmem>>, vector<8x32xf32>,
    %c40_136 = arith.constant 40 : index
    %c0_137 = arith.constant 0 : index
    %356 = vector.load %arg13[%c40_136, %c0_137] : memref<64x128xf32, #tpu.memory_space<vmem>>, vector<8x128xf32>
    %357 = arith.truncf %354 : vector<8x32xf32> to vector<8x32xbf16>
    %cst_138 = arith.constant dense<0.000000e+00> : vector<8x128xf32>
    %358 = tpu.matmul %357, %213, %cst_138 {dimension_numbers = #tpu.dot_dimension_numbers<[1], [0], [0], [1], [0, 0, 1, 1], [], []>} : vector<8x32xbf16>, vector<32x128xbf16>, vector<8x128xf32> -> vector<8x128xf32>
    %359 = arith.addf %356, %358 : vector<8x128xf32>
    %360 = arith.negf %359 : vector<8x128xf32>
    %361 = math.exp %360 : vector<8x128xf32>
    %cst_139 = arith.constant 1.000000e+00 : f32
    %362 = vector.broadcast %cst_139 : f32 to vector<8x128xf32>
    %363 = arith.addf %362, %361 : vector<8x128xf32>
    %364 = arith.divf %362, %363 : vector<8x128xf32>
    %365 = math.tanh %359 : vector<8x128xf32>
    %366 = vector.extract_strided_slice %364 {offsets = [0, 0], sizes = [8, 32], strides = [1, 1]} : vector<8x128xf32> to vector<8x32xf32>
    %367 = vector.extract_strided_slice %364 {offsets = [0, 32], sizes = [8, 32], strides = [1, 1]} : vector<8x128xf32> to vector<8x32xf32>
    %368 = vector.extract_strided_slice %365 {offsets = [0, 64], sizes = [8, 32], strides = [1, 1]} : vector<8x128xf32> to vector<8x32xf32>
    %369 = vector.extract_strided_slice %364 {offsets = [0, 96], sizes = [8, 32], strides = [1, 1]} : vector<8x128xf32> to vector<8x32xf32>
    %370 = arith.mulf %367, %352 : vector<8x32xf32>
    %371 = arith.mulf %366, %368 : vector<8x32xf32>
    %372 = arith.addf %370, %371 : vector<8x32xf32>
    %373 = math.tanh %372 : vector<8x32xf32>
    %374 = arith.mulf %369, %373 : vector<8x32xf32>
    %c40_140 = arith.constant 40 : index
    %c0_141 = arith.constant 0 : index
    %375 = vector.load %arg12[%c40_140, %c0_141] : memref<64x32xf32, #tpu.memory_space<vmem>>, vector<8x32xf32>
    tpu.vector_store %arg12[%c40_140, %c0_141], %374 {strides = array<i32>} : memref<64x32xf32, #tpu.memory_space<vmem>>, vector<8x32xf32>,
    %c48_142 = arith.constant 48 : index
    %c0_143 = arith.constant 0 : index
    %376 = vector.load %arg13[%c48_142, %c0_143] : memref<64x128xf32, #tpu.memory_space<vmem>>, vector<8x128xf32>
    %377 = arith.truncf %374 : vector<8x32xf32> to vector<8x32xbf16>
    %cst_144 = arith.constant dense<0.000000e+00> : vector<8x128xf32>
    %378 = tpu.matmul %377, %213, %cst_144 {dimension_numbers = #tpu.dot_dimension_numbers<[1], [0], [0], [1], [0, 0, 1, 1], [], []>} : vector<8x32xbf16>, vector<32x128xbf16>, vector<8x128xf32> -> vector<8x128xf32>
    %379 = arith.addf %376, %378 : vector<8x128xf32>
    %380 = arith.negf %379 : vector<8x128xf32>
    %381 = math.exp %380 : vector<8x128xf32>
    %cst_145 = arith.constant 1.000000e+00 : f32
    %382 = vector.broadcast %cst_145 : f32 to vector<8x128xf32>
    %383 = arith.addf %382, %381 : vector<8x128xf32>
    %384 = arith.divf %382, %383 : vector<8x128xf32>
    %385 = math.tanh %379 : vector<8x128xf32>
    %386 = vector.extract_strided_slice %384 {offsets = [0, 0], sizes = [8, 32], strides = [1, 1]} : vector<8x128xf32> to vector<8x32xf32>
    %387 = vector.extract_strided_slice %384 {offsets = [0, 32], sizes = [8, 32], strides = [1, 1]} : vector<8x128xf32> to vector<8x32xf32>
    %388 = vector.extract_strided_slice %385 {offsets = [0, 64], sizes = [8, 32], strides = [1, 1]} : vector<8x128xf32> to vector<8x32xf32>
    %389 = vector.extract_strided_slice %384 {offsets = [0, 96], sizes = [8, 32], strides = [1, 1]} : vector<8x128xf32> to vector<8x32xf32>
    %390 = arith.mulf %387, %372 : vector<8x32xf32>
    %391 = arith.mulf %386, %388 : vector<8x32xf32>
    %392 = arith.addf %390, %391 : vector<8x32xf32>
    %393 = math.tanh %392 : vector<8x32xf32>
    %394 = arith.mulf %389, %393 : vector<8x32xf32>
    %c48_146 = arith.constant 48 : index
    %c0_147 = arith.constant 0 : index
    %395 = vector.load %arg12[%c48_146, %c0_147] : memref<64x32xf32, #tpu.memory_space<vmem>>, vector<8x32xf32>
    tpu.vector_store %arg12[%c48_146, %c0_147], %394 {strides = array<i32>} : memref<64x32xf32, #tpu.memory_space<vmem>>, vector<8x32xf32>,
    %c56_148 = arith.constant 56 : index
    %c0_149 = arith.constant 0 : index
    %396 = vector.load %arg13[%c56_148, %c0_149] : memref<64x128xf32, #tpu.memory_space<vmem>>, vector<8x128xf32>
    %397 = arith.truncf %394 : vector<8x32xf32> to vector<8x32xbf16>
    %cst_150 = arith.constant dense<0.000000e+00> : vector<8x128xf32>
    %398 = tpu.matmul %397, %213, %cst_150 {dimension_numbers = #tpu.dot_dimension_numbers<[1], [0], [0], [1], [0, 0, 1, 1], [], []>} : vector<8x32xbf16>, vector<32x128xbf16>, vector<8x128xf32> -> vector<8x128xf32>
    %399 = arith.addf %396, %398 : vector<8x128xf32>
    %400 = arith.negf %399 : vector<8x128xf32>
    %401 = math.exp %400 : vector<8x128xf32>
    %cst_151 = arith.constant 1.000000e+00 : f32
    %402 = vector.broadcast %cst_151 : f32 to vector<8x128xf32>
    %403 = arith.addf %402, %401 : vector<8x128xf32>
    %404 = arith.divf %402, %403 : vector<8x128xf32>
    %405 = math.tanh %399 : vector<8x128xf32>
    %406 = vector.extract_strided_slice %404 {offsets = [0, 0], sizes = [8, 32], strides = [1, 1]} : vector<8x128xf32> to vector<8x32xf32>
    %407 = vector.extract_strided_slice %404 {offsets = [0, 32], sizes = [8, 32], strides = [1, 1]} : vector<8x128xf32> to vector<8x32xf32>
    %408 = vector.extract_strided_slice %405 {offsets = [0, 64], sizes = [8, 32], strides = [1, 1]} : vector<8x128xf32> to vector<8x32xf32>
    %409 = vector.extract_strided_slice %404 {offsets = [0, 96], sizes = [8, 32], strides = [1, 1]} : vector<8x128xf32> to vector<8x32xf32>
    %410 = arith.mulf %407, %392 : vector<8x32xf32>
    %411 = arith.mulf %406, %408 : vector<8x32xf32>
    %412 = arith.addf %410, %411 : vector<8x32xf32>
    %413 = math.tanh %412 : vector<8x32xf32>
    %414 = arith.mulf %409, %413 : vector<8x32xf32>
    %c56_152 = arith.constant 56 : index
    %c0_153 = arith.constant 0 : index
    %415 = vector.load %arg12[%c56_152, %c0_153] : memref<64x32xf32, #tpu.memory_space<vmem>>, vector<8x32xf32>
    tpu.vector_store %arg12[%c56_152, %c0_153], %414 {strides = array<i32>} : memref<64x32xf32, #tpu.memory_space<vmem>>, vector<8x32xf32>,
    %c2 = arith.constant 2 : index
    %c0_154 = arith.constant 0 : index
    %c0_155 = arith.constant 0 : index
    %416 = vector.load %arg1[%c2, %c0_154, %c0_155] : memref<4x32x128xbf16, #tpu.memory_space<vmem>>, vector<1x32x128xbf16>
    %417 = vector.shape_cast %416 : vector<1x32x128xbf16> to vector<32x128xbf16>
    %c2_156 = arith.constant 2 : index
    %c0_157 = arith.constant 0 : index
    %c0_158 = arith.constant 0 : index
    %418 = vector.load %arg2[%c2_156, %c0_157, %c0_158] : memref<4x32x128xbf16, #tpu.memory_space<vmem>>, vector<1x32x128xbf16>
    %419 = vector.shape_cast %418 : vector<1x32x128xbf16> to vector<32x128xbf16>
    %c2_159 = arith.constant 2 : index
    %c0_160 = arith.constant 0 : index
    %c0_161 = arith.constant 0 : index
    %420 = vector.load %arg3[%c2_159, %c0_160, %c0_161] : memref<4x32x128xbf16, #tpu.memory_space<vmem>>, vector<1x32x128xbf16>
    %421 = vector.shape_cast %420 : vector<1x32x128xbf16> to vector<32x128xbf16>
    %c2_162 = arith.constant 2 : index
    %c0_163 = arith.constant 0 : index
    %c0_164 = arith.constant 0 : index
    %422 = vector.load %arg4[%c2_162, %c0_163, %c0_164] : memref<4x1x128xf32, #tpu.memory_space<vmem>>, vector<1x1x128xf32>
    %423 = vector.shape_cast %422 : vector<1x1x128xf32> to vector<1x128xf32>
    %c0_165 = arith.constant 0 : index
    %c0_166 = arith.constant 0 : index
    %424 = vector.load %arg12[%c0_165, %c0_166] : memref<64x32xf32, #tpu.memory_space<vmem>>, vector<64x32xf32>
    %425 = arith.truncf %424 : vector<64x32xf32> to vector<64x32xbf16>
    %cst_167 = arith.constant dense<0.000000e+00> : vector<64x128xf32>
    %426 = tpu.matmul %425, %417, %cst_167 {dimension_numbers = #tpu.dot_dimension_numbers<[1], [0], [0], [1], [0, 0, 1, 1], [], []>} : vector<64x32xbf16>, vector<32x128xbf16>, vector<64x128xf32> -> vector<64x128xf32>
    %427 = vector.broadcast %423 : vector<1x128xf32> to vector<64x128xf32>
    %428 = arith.addf %426, %427 : vector<64x128xf32>
    %cst_168 = arith.constant dense<0.000000e+00> : vector<64x128xf32>
    %429 = tpu.matmul %425, %419, %cst_168 {dimension_numbers = #tpu.dot_dimension_numbers<[1], [0], [0], [1], [0, 0, 1, 1], [], []>} : vector<64x32xbf16>, vector<32x128xbf16>, vector<64x128xf32> -> vector<64x128xf32>
    %430 = vector.extract_strided_slice %428 {offsets = [0, 0], sizes = [8, 128], strides = [1, 1]} : vector<64x128xf32> to vector<8x128xf32>
    %431 = vector.extract_strided_slice %429 {offsets = [56, 0], sizes = [8, 128], strides = [1, 1]} : vector<64x128xf32> to vector<8x128xf32>
    %432 = arith.addf %430, %431 : vector<8x128xf32>
    %c0_169 = arith.constant 0 : index
    %c0_170 = arith.constant 0 : index
    %433 = vector.load %arg13[%c0_169, %c0_170] : memref<64x128xf32, #tpu.memory_space<vmem>>, vector<8x128xf32>
    tpu.vector_store %arg13[%c0_169, %c0_170], %432 {strides = array<i32>} : memref<64x128xf32, #tpu.memory_space<vmem>>, vector<8x128xf32>,
    %434 = vector.extract_strided_slice %428 {offsets = [8, 0], sizes = [8, 128], strides = [1, 1]} : vector<64x128xf32> to vector<8x128xf32>
    %435 = vector.extract_strided_slice %429 {offsets = [48, 0], sizes = [8, 128], strides = [1, 1]} : vector<64x128xf32> to vector<8x128xf32>
    %436 = arith.addf %434, %435 : vector<8x128xf32>
    %c8_171 = arith.constant 8 : index
    %c0_172 = arith.constant 0 : index
    %437 = vector.load %arg13[%c8_171, %c0_172] : memref<64x128xf32, #tpu.memory_space<vmem>>, vector<8x128xf32>
    tpu.vector_store %arg13[%c8_171, %c0_172], %436 {strides = array<i32>} : memref<64x128xf32, #tpu.memory_space<vmem>>, vector<8x128xf32>,
    %438 = vector.extract_strided_slice %428 {offsets = [16, 0], sizes = [8, 128], strides = [1, 1]} : vector<64x128xf32> to vector<8x128xf32>
    %439 = vector.extract_strided_slice %429 {offsets = [40, 0], sizes = [8, 128], strides = [1, 1]} : vector<64x128xf32> to vector<8x128xf32>
    %440 = arith.addf %438, %439 : vector<8x128xf32>
    %c16_173 = arith.constant 16 : index
    %c0_174 = arith.constant 0 : index
    %441 = vector.load %arg13[%c16_173, %c0_174] : memref<64x128xf32, #tpu.memory_space<vmem>>, vector<8x128xf32>
    tpu.vector_store %arg13[%c16_173, %c0_174], %440 {strides = array<i32>} : memref<64x128xf32, #tpu.memory_space<vmem>>, vector<8x128xf32>,
    %442 = vector.extract_strided_slice %428 {offsets = [24, 0], sizes = [8, 128], strides = [1, 1]} : vector<64x128xf32> to vector<8x128xf32>
    %443 = vector.extract_strided_slice %429 {offsets = [32, 0], sizes = [8, 128], strides = [1, 1]} : vector<64x128xf32> to vector<8x128xf32>
    %444 = arith.addf %442, %443 : vector<8x128xf32>
    %c24_175 = arith.constant 24 : index
    %c0_176 = arith.constant 0 : index
    %445 = vector.load %arg13[%c24_175, %c0_176] : memref<64x128xf32, #tpu.memory_space<vmem>>, vector<8x128xf32>
    tpu.vector_store %arg13[%c24_175, %c0_176], %444 {strides = array<i32>} : memref<64x128xf32, #tpu.memory_space<vmem>>, vector<8x128xf32>,
    %446 = vector.extract_strided_slice %428 {offsets = [32, 0], sizes = [8, 128], strides = [1, 1]} : vector<64x128xf32> to vector<8x128xf32>
    %447 = vector.extract_strided_slice %429 {offsets = [24, 0], sizes = [8, 128], strides = [1, 1]} : vector<64x128xf32> to vector<8x128xf32>
    %448 = arith.addf %446, %447 : vector<8x128xf32>
    %c32_177 = arith.constant 32 : index
    %c0_178 = arith.constant 0 : index
    %449 = vector.load %arg13[%c32_177, %c0_178] : memref<64x128xf32, #tpu.memory_space<vmem>>, vector<8x128xf32>
    tpu.vector_store %arg13[%c32_177, %c0_178], %448 {strides = array<i32>} : memref<64x128xf32, #tpu.memory_space<vmem>>, vector<8x128xf32>,
    %450 = vector.extract_strided_slice %428 {offsets = [40, 0], sizes = [8, 128], strides = [1, 1]} : vector<64x128xf32> to vector<8x128xf32>
    %451 = vector.extract_strided_slice %429 {offsets = [16, 0], sizes = [8, 128], strides = [1, 1]} : vector<64x128xf32> to vector<8x128xf32>
    %452 = arith.addf %450, %451 : vector<8x128xf32>
    %c40_179 = arith.constant 40 : index
    %c0_180 = arith.constant 0 : index
    %453 = vector.load %arg13[%c40_179, %c0_180] : memref<64x128xf32, #tpu.memory_space<vmem>>, vector<8x128xf32>
    tpu.vector_store %arg13[%c40_179, %c0_180], %452 {strides = array<i32>} : memref<64x128xf32, #tpu.memory_space<vmem>>, vector<8x128xf32>,
    %454 = vector.extract_strided_slice %428 {offsets = [48, 0], sizes = [8, 128], strides = [1, 1]} : vector<64x128xf32> to vector<8x128xf32>
    %455 = vector.extract_strided_slice %429 {offsets = [8, 0], sizes = [8, 128], strides = [1, 1]} : vector<64x128xf32> to vector<8x128xf32>
    %456 = arith.addf %454, %455 : vector<8x128xf32>
    %c48_181 = arith.constant 48 : index
    %c0_182 = arith.constant 0 : index
    %457 = vector.load %arg13[%c48_181, %c0_182] : memref<64x128xf32, #tpu.memory_space<vmem>>, vector<8x128xf32>
    tpu.vector_store %arg13[%c48_181, %c0_182], %456 {strides = array<i32>} : memref<64x128xf32, #tpu.memory_space<vmem>>, vector<8x128xf32>,
    %458 = vector.extract_strided_slice %428 {offsets = [56, 0], sizes = [8, 128], strides = [1, 1]} : vector<64x128xf32> to vector<8x128xf32>
    %459 = vector.extract_strided_slice %429 {offsets = [0, 0], sizes = [8, 128], strides = [1, 1]} : vector<64x128xf32> to vector<8x128xf32>
    %460 = arith.addf %458, %459 : vector<8x128xf32>
    %c56_183 = arith.constant 56 : index
    %c0_184 = arith.constant 0 : index
    %461 = vector.load %arg13[%c56_183, %c0_184] : memref<64x128xf32, #tpu.memory_space<vmem>>, vector<8x128xf32>
    tpu.vector_store %arg13[%c56_183, %c0_184], %460 {strides = array<i32>} : memref<64x128xf32, #tpu.memory_space<vmem>>, vector<8x128xf32>,
    %cst_185 = arith.constant 0.000000e+00 : f32
    %462 = vector.broadcast %cst_185 : f32 to vector<8x32xf32>
    %cst_186 = arith.constant 0.000000e+00 : f32
    %463 = vector.broadcast %cst_186 : f32 to vector<8x32xf32>
    %c0_187 = arith.constant 0 : index
    %c0_188 = arith.constant 0 : index
    %464 = vector.load %arg13[%c0_187, %c0_188] : memref<64x128xf32, #tpu.memory_space<vmem>>, vector<8x128xf32>
    %465 = arith.truncf %462 : vector<8x32xf32> to vector<8x32xbf16>
    %cst_189 = arith.constant dense<0.000000e+00> : vector<8x128xf32>
    %466 = tpu.matmul %465, %421, %cst_189 {dimension_numbers = #tpu.dot_dimension_numbers<[1], [0], [0], [1], [0, 0, 1, 1], [], []>} : vector<8x32xbf16>, vector<32x128xbf16>, vector<8x128xf32> -> vector<8x128xf32>
    %467 = arith.addf %464, %466 : vector<8x128xf32>
    %468 = arith.negf %467 : vector<8x128xf32>
    %469 = math.exp %468 : vector<8x128xf32>
    %cst_190 = arith.constant 1.000000e+00 : f32
    %470 = vector.broadcast %cst_190 : f32 to vector<8x128xf32>
    %471 = arith.addf %470, %469 : vector<8x128xf32>
    %472 = arith.divf %470, %471 : vector<8x128xf32>
    %473 = math.tanh %467 : vector<8x128xf32>
    %474 = vector.extract_strided_slice %472 {offsets = [0, 0], sizes = [8, 32], strides = [1, 1]} : vector<8x128xf32> to vector<8x32xf32>
    %475 = vector.extract_strided_slice %472 {offsets = [0, 32], sizes = [8, 32], strides = [1, 1]} : vector<8x128xf32> to vector<8x32xf32>
    %476 = vector.extract_strided_slice %473 {offsets = [0, 64], sizes = [8, 32], strides = [1, 1]} : vector<8x128xf32> to vector<8x32xf32>
    %477 = vector.extract_strided_slice %472 {offsets = [0, 96], sizes = [8, 32], strides = [1, 1]} : vector<8x128xf32> to vector<8x32xf32>
    %478 = arith.mulf %475, %463 : vector<8x32xf32>
    %479 = arith.mulf %474, %476 : vector<8x32xf32>
    %480 = arith.addf %478, %479 : vector<8x32xf32>
    %481 = math.tanh %480 : vector<8x32xf32>
    %482 = arith.mulf %477, %481 : vector<8x32xf32>
    %c0_191 = arith.constant 0 : index
    %c0_192 = arith.constant 0 : index
    %483 = vector.load %arg12[%c0_191, %c0_192] : memref<64x32xf32, #tpu.memory_space<vmem>>, vector<8x32xf32>
    tpu.vector_store %arg12[%c0_191, %c0_192], %482 {strides = array<i32>} : memref<64x32xf32, #tpu.memory_space<vmem>>, vector<8x32xf32>,
    %c8_193 = arith.constant 8 : index
    %c0_194 = arith.constant 0 : index
    %484 = vector.load %arg13[%c8_193, %c0_194] : memref<64x128xf32, #tpu.memory_space<vmem>>, vector<8x128xf32>
    %485 = arith.truncf %482 : vector<8x32xf32> to vector<8x32xbf16>
    %cst_195 = arith.constant dense<0.000000e+00> : vector<8x128xf32>
    %486 = tpu.matmul %485, %421, %cst_195 {dimension_numbers = #tpu.dot_dimension_numbers<[1], [0], [0], [1], [0, 0, 1, 1], [], []>} : vector<8x32xbf16>, vector<32x128xbf16>, vector<8x128xf32> -> vector<8x128xf32>
    %487 = arith.addf %484, %486 : vector<8x128xf32>
    %488 = arith.negf %487 : vector<8x128xf32>
    %489 = math.exp %488 : vector<8x128xf32>
    %cst_196 = arith.constant 1.000000e+00 : f32
    %490 = vector.broadcast %cst_196 : f32 to vector<8x128xf32>
    %491 = arith.addf %490, %489 : vector<8x128xf32>
    %492 = arith.divf %490, %491 : vector<8x128xf32>
    %493 = math.tanh %487 : vector<8x128xf32>
    %494 = vector.extract_strided_slice %492 {offsets = [0, 0], sizes = [8, 32], strides = [1, 1]} : vector<8x128xf32> to vector<8x32xf32>
    %495 = vector.extract_strided_slice %492 {offsets = [0, 32], sizes = [8, 32], strides = [1, 1]} : vector<8x128xf32> to vector<8x32xf32>
    %496 = vector.extract_strided_slice %493 {offsets = [0, 64], sizes = [8, 32], strides = [1, 1]} : vector<8x128xf32> to vector<8x32xf32>
    %497 = vector.extract_strided_slice %492 {offsets = [0, 96], sizes = [8, 32], strides = [1, 1]} : vector<8x128xf32> to vector<8x32xf32>
    %498 = arith.mulf %495, %480 : vector<8x32xf32>
    %499 = arith.mulf %494, %496 : vector<8x32xf32>
    %500 = arith.addf %498, %499 : vector<8x32xf32>
    %501 = math.tanh %500 : vector<8x32xf32>
    %502 = arith.mulf %497, %501 : vector<8x32xf32>
    %c8_197 = arith.constant 8 : index
    %c0_198 = arith.constant 0 : index
    %503 = vector.load %arg12[%c8_197, %c0_198] : memref<64x32xf32, #tpu.memory_space<vmem>>, vector<8x32xf32>
    tpu.vector_store %arg12[%c8_197, %c0_198], %502 {strides = array<i32>} : memref<64x32xf32, #tpu.memory_space<vmem>>, vector<8x32xf32>,
    %c16_199 = arith.constant 16 : index
    %c0_200 = arith.constant 0 : index
    %504 = vector.load %arg13[%c16_199, %c0_200] : memref<64x128xf32, #tpu.memory_space<vmem>>, vector<8x128xf32>
    %505 = arith.truncf %502 : vector<8x32xf32> to vector<8x32xbf16>
    %cst_201 = arith.constant dense<0.000000e+00> : vector<8x128xf32>
    %506 = tpu.matmul %505, %421, %cst_201 {dimension_numbers = #tpu.dot_dimension_numbers<[1], [0], [0], [1], [0, 0, 1, 1], [], []>} : vector<8x32xbf16>, vector<32x128xbf16>, vector<8x128xf32> -> vector<8x128xf32>
    %507 = arith.addf %504, %506 : vector<8x128xf32>
    %508 = arith.negf %507 : vector<8x128xf32>
    %509 = math.exp %508 : vector<8x128xf32>
    %cst_202 = arith.constant 1.000000e+00 : f32
    %510 = vector.broadcast %cst_202 : f32 to vector<8x128xf32>
    %511 = arith.addf %510, %509 : vector<8x128xf32>
    %512 = arith.divf %510, %511 : vector<8x128xf32>
    %513 = math.tanh %507 : vector<8x128xf32>
    %514 = vector.extract_strided_slice %512 {offsets = [0, 0], sizes = [8, 32], strides = [1, 1]} : vector<8x128xf32> to vector<8x32xf32>
    %515 = vector.extract_strided_slice %512 {offsets = [0, 32], sizes = [8, 32], strides = [1, 1]} : vector<8x128xf32> to vector<8x32xf32>
    %516 = vector.extract_strided_slice %513 {offsets = [0, 64], sizes = [8, 32], strides = [1, 1]} : vector<8x128xf32> to vector<8x32xf32>
    %517 = vector.extract_strided_slice %512 {offsets = [0, 96], sizes = [8, 32], strides = [1, 1]} : vector<8x128xf32> to vector<8x32xf32>
    %518 = arith.mulf %515, %500 : vector<8x32xf32>
    %519 = arith.mulf %514, %516 : vector<8x32xf32>
    %520 = arith.addf %518, %519 : vector<8x32xf32>
    %521 = math.tanh %520 : vector<8x32xf32>
    %522 = arith.mulf %517, %521 : vector<8x32xf32>
    %c16_203 = arith.constant 16 : index
    %c0_204 = arith.constant 0 : index
    %523 = vector.load %arg12[%c16_203, %c0_204] : memref<64x32xf32, #tpu.memory_space<vmem>>, vector<8x32xf32>
    tpu.vector_store %arg12[%c16_203, %c0_204], %522 {strides = array<i32>} : memref<64x32xf32, #tpu.memory_space<vmem>>, vector<8x32xf32>,
    %c24_205 = arith.constant 24 : index
    %c0_206 = arith.constant 0 : index
    %524 = vector.load %arg13[%c24_205, %c0_206] : memref<64x128xf32, #tpu.memory_space<vmem>>, vector<8x128xf32>
    %525 = arith.truncf %522 : vector<8x32xf32> to vector<8x32xbf16>
    %cst_207 = arith.constant dense<0.000000e+00> : vector<8x128xf32>
    %526 = tpu.matmul %525, %421, %cst_207 {dimension_numbers = #tpu.dot_dimension_numbers<[1], [0], [0], [1], [0, 0, 1, 1], [], []>} : vector<8x32xbf16>, vector<32x128xbf16>, vector<8x128xf32> -> vector<8x128xf32>
    %527 = arith.addf %524, %526 : vector<8x128xf32>
    %528 = arith.negf %527 : vector<8x128xf32>
    %529 = math.exp %528 : vector<8x128xf32>
    %cst_208 = arith.constant 1.000000e+00 : f32
    %530 = vector.broadcast %cst_208 : f32 to vector<8x128xf32>
    %531 = arith.addf %530, %529 : vector<8x128xf32>
    %532 = arith.divf %530, %531 : vector<8x128xf32>
    %533 = math.tanh %527 : vector<8x128xf32>
    %534 = vector.extract_strided_slice %532 {offsets = [0, 0], sizes = [8, 32], strides = [1, 1]} : vector<8x128xf32> to vector<8x32xf32>
    %535 = vector.extract_strided_slice %532 {offsets = [0, 32], sizes = [8, 32], strides = [1, 1]} : vector<8x128xf32> to vector<8x32xf32>
    %536 = vector.extract_strided_slice %533 {offsets = [0, 64], sizes = [8, 32], strides = [1, 1]} : vector<8x128xf32> to vector<8x32xf32>
    %537 = vector.extract_strided_slice %532 {offsets = [0, 96], sizes = [8, 32], strides = [1, 1]} : vector<8x128xf32> to vector<8x32xf32>
    %538 = arith.mulf %535, %520 : vector<8x32xf32>
    %539 = arith.mulf %534, %536 : vector<8x32xf32>
    %540 = arith.addf %538, %539 : vector<8x32xf32>
    %541 = math.tanh %540 : vector<8x32xf32>
    %542 = arith.mulf %537, %541 : vector<8x32xf32>
    %c24_209 = arith.constant 24 : index
    %c0_210 = arith.constant 0 : index
    %543 = vector.load %arg12[%c24_209, %c0_210] : memref<64x32xf32, #tpu.memory_space<vmem>>, vector<8x32xf32>
    tpu.vector_store %arg12[%c24_209, %c0_210], %542 {strides = array<i32>} : memref<64x32xf32, #tpu.memory_space<vmem>>, vector<8x32xf32>,
    %c32_211 = arith.constant 32 : index
    %c0_212 = arith.constant 0 : index
    %544 = vector.load %arg13[%c32_211, %c0_212] : memref<64x128xf32, #tpu.memory_space<vmem>>, vector<8x128xf32>
    %545 = arith.truncf %542 : vector<8x32xf32> to vector<8x32xbf16>
    %cst_213 = arith.constant dense<0.000000e+00> : vector<8x128xf32>
    %546 = tpu.matmul %545, %421, %cst_213 {dimension_numbers = #tpu.dot_dimension_numbers<[1], [0], [0], [1], [0, 0, 1, 1], [], []>} : vector<8x32xbf16>, vector<32x128xbf16>, vector<8x128xf32> -> vector<8x128xf32>
    %547 = arith.addf %544, %546 : vector<8x128xf32>
    %548 = arith.negf %547 : vector<8x128xf32>
    %549 = math.exp %548 : vector<8x128xf32>
    %cst_214 = arith.constant 1.000000e+00 : f32
    %550 = vector.broadcast %cst_214 : f32 to vector<8x128xf32>
    %551 = arith.addf %550, %549 : vector<8x128xf32>
    %552 = arith.divf %550, %551 : vector<8x128xf32>
    %553 = math.tanh %547 : vector<8x128xf32>
    %554 = vector.extract_strided_slice %552 {offsets = [0, 0], sizes = [8, 32], strides = [1, 1]} : vector<8x128xf32> to vector<8x32xf32>
    %555 = vector.extract_strided_slice %552 {offsets = [0, 32], sizes = [8, 32], strides = [1, 1]} : vector<8x128xf32> to vector<8x32xf32>
    %556 = vector.extract_strided_slice %553 {offsets = [0, 64], sizes = [8, 32], strides = [1, 1]} : vector<8x128xf32> to vector<8x32xf32>
    %557 = vector.extract_strided_slice %552 {offsets = [0, 96], sizes = [8, 32], strides = [1, 1]} : vector<8x128xf32> to vector<8x32xf32>
    %558 = arith.mulf %555, %540 : vector<8x32xf32>
    %559 = arith.mulf %554, %556 : vector<8x32xf32>
    %560 = arith.addf %558, %559 : vector<8x32xf32>
    %561 = math.tanh %560 : vector<8x32xf32>
    %562 = arith.mulf %557, %561 : vector<8x32xf32>
    %c32_215 = arith.constant 32 : index
    %c0_216 = arith.constant 0 : index
    %563 = vector.load %arg12[%c32_215, %c0_216] : memref<64x32xf32, #tpu.memory_space<vmem>>, vector<8x32xf32>
    tpu.vector_store %arg12[%c32_215, %c0_216], %562 {strides = array<i32>} : memref<64x32xf32, #tpu.memory_space<vmem>>, vector<8x32xf32>,
    %c40_217 = arith.constant 40 : index
    %c0_218 = arith.constant 0 : index
    %564 = vector.load %arg13[%c40_217, %c0_218] : memref<64x128xf32, #tpu.memory_space<vmem>>, vector<8x128xf32>
    %565 = arith.truncf %562 : vector<8x32xf32> to vector<8x32xbf16>
    %cst_219 = arith.constant dense<0.000000e+00> : vector<8x128xf32>
    %566 = tpu.matmul %565, %421, %cst_219 {dimension_numbers = #tpu.dot_dimension_numbers<[1], [0], [0], [1], [0, 0, 1, 1], [], []>} : vector<8x32xbf16>, vector<32x128xbf16>, vector<8x128xf32> -> vector<8x128xf32>
    %567 = arith.addf %564, %566 : vector<8x128xf32>
    %568 = arith.negf %567 : vector<8x128xf32>
    %569 = math.exp %568 : vector<8x128xf32>
    %cst_220 = arith.constant 1.000000e+00 : f32
    %570 = vector.broadcast %cst_220 : f32 to vector<8x128xf32>
    %571 = arith.addf %570, %569 : vector<8x128xf32>
    %572 = arith.divf %570, %571 : vector<8x128xf32>
    %573 = math.tanh %567 : vector<8x128xf32>
    %574 = vector.extract_strided_slice %572 {offsets = [0, 0], sizes = [8, 32], strides = [1, 1]} : vector<8x128xf32> to vector<8x32xf32>
    %575 = vector.extract_strided_slice %572 {offsets = [0, 32], sizes = [8, 32], strides = [1, 1]} : vector<8x128xf32> to vector<8x32xf32>
    %576 = vector.extract_strided_slice %573 {offsets = [0, 64], sizes = [8, 32], strides = [1, 1]} : vector<8x128xf32> to vector<8x32xf32>
    %577 = vector.extract_strided_slice %572 {offsets = [0, 96], sizes = [8, 32], strides = [1, 1]} : vector<8x128xf32> to vector<8x32xf32>
    %578 = arith.mulf %575, %560 : vector<8x32xf32>
    %579 = arith.mulf %574, %576 : vector<8x32xf32>
    %580 = arith.addf %578, %579 : vector<8x32xf32>
    %581 = math.tanh %580 : vector<8x32xf32>
    %582 = arith.mulf %577, %581 : vector<8x32xf32>
    %c40_221 = arith.constant 40 : index
    %c0_222 = arith.constant 0 : index
    %583 = vector.load %arg12[%c40_221, %c0_222] : memref<64x32xf32, #tpu.memory_space<vmem>>, vector<8x32xf32>
    tpu.vector_store %arg12[%c40_221, %c0_222], %582 {strides = array<i32>} : memref<64x32xf32, #tpu.memory_space<vmem>>, vector<8x32xf32>,
    %c48_223 = arith.constant 48 : index
    %c0_224 = arith.constant 0 : index
    %584 = vector.load %arg13[%c48_223, %c0_224] : memref<64x128xf32, #tpu.memory_space<vmem>>, vector<8x128xf32>
    %585 = arith.truncf %582 : vector<8x32xf32> to vector<8x32xbf16>
    %cst_225 = arith.constant dense<0.000000e+00> : vector<8x128xf32>
    %586 = tpu.matmul %585, %421, %cst_225 {dimension_numbers = #tpu.dot_dimension_numbers<[1], [0], [0], [1], [0, 0, 1, 1], [], []>} : vector<8x32xbf16>, vector<32x128xbf16>, vector<8x128xf32> -> vector<8x128xf32>
    %587 = arith.addf %584, %586 : vector<8x128xf32>
    %588 = arith.negf %587 : vector<8x128xf32>
    %589 = math.exp %588 : vector<8x128xf32>
    %cst_226 = arith.constant 1.000000e+00 : f32
    %590 = vector.broadcast %cst_226 : f32 to vector<8x128xf32>
    %591 = arith.addf %590, %589 : vector<8x128xf32>
    %592 = arith.divf %590, %591 : vector<8x128xf32>
    %593 = math.tanh %587 : vector<8x128xf32>
    %594 = vector.extract_strided_slice %592 {offsets = [0, 0], sizes = [8, 32], strides = [1, 1]} : vector<8x128xf32> to vector<8x32xf32>
    %595 = vector.extract_strided_slice %592 {offsets = [0, 32], sizes = [8, 32], strides = [1, 1]} : vector<8x128xf32> to vector<8x32xf32>
    %596 = vector.extract_strided_slice %593 {offsets = [0, 64], sizes = [8, 32], strides = [1, 1]} : vector<8x128xf32> to vector<8x32xf32>
    %597 = vector.extract_strided_slice %592 {offsets = [0, 96], sizes = [8, 32], strides = [1, 1]} : vector<8x128xf32> to vector<8x32xf32>
    %598 = arith.mulf %595, %580 : vector<8x32xf32>
    %599 = arith.mulf %594, %596 : vector<8x32xf32>
    %600 = arith.addf %598, %599 : vector<8x32xf32>
    %601 = math.tanh %600 : vector<8x32xf32>
    %602 = arith.mulf %597, %601 : vector<8x32xf32>
    %c48_227 = arith.constant 48 : index
    %c0_228 = arith.constant 0 : index
    %603 = vector.load %arg12[%c48_227, %c0_228] : memref<64x32xf32, #tpu.memory_space<vmem>>, vector<8x32xf32>
    tpu.vector_store %arg12[%c48_227, %c0_228], %602 {strides = array<i32>} : memref<64x32xf32, #tpu.memory_space<vmem>>, vector<8x32xf32>,
    %c56_229 = arith.constant 56 : index
    %c0_230 = arith.constant 0 : index
    %604 = vector.load %arg13[%c56_229, %c0_230] : memref<64x128xf32, #tpu.memory_space<vmem>>, vector<8x128xf32>
    %605 = arith.truncf %602 : vector<8x32xf32> to vector<8x32xbf16>
    %cst_231 = arith.constant dense<0.000000e+00> : vector<8x128xf32>
    %606 = tpu.matmul %605, %421, %cst_231 {dimension_numbers = #tpu.dot_dimension_numbers<[1], [0], [0], [1], [0, 0, 1, 1], [], []>} : vector<8x32xbf16>, vector<32x128xbf16>, vector<8x128xf32> -> vector<8x128xf32>
    %607 = arith.addf %604, %606 : vector<8x128xf32>
    %608 = arith.negf %607 : vector<8x128xf32>
    %609 = math.exp %608 : vector<8x128xf32>
    %cst_232 = arith.constant 1.000000e+00 : f32
    %610 = vector.broadcast %cst_232 : f32 to vector<8x128xf32>
    %611 = arith.addf %610, %609 : vector<8x128xf32>
    %612 = arith.divf %610, %611 : vector<8x128xf32>
    %613 = math.tanh %607 : vector<8x128xf32>
    %614 = vector.extract_strided_slice %612 {offsets = [0, 0], sizes = [8, 32], strides = [1, 1]} : vector<8x128xf32> to vector<8x32xf32>
    %615 = vector.extract_strided_slice %612 {offsets = [0, 32], sizes = [8, 32], strides = [1, 1]} : vector<8x128xf32> to vector<8x32xf32>
    %616 = vector.extract_strided_slice %613 {offsets = [0, 64], sizes = [8, 32], strides = [1, 1]} : vector<8x128xf32> to vector<8x32xf32>
    %617 = vector.extract_strided_slice %612 {offsets = [0, 96], sizes = [8, 32], strides = [1, 1]} : vector<8x128xf32> to vector<8x32xf32>
    %618 = arith.mulf %615, %600 : vector<8x32xf32>
    %619 = arith.mulf %614, %616 : vector<8x32xf32>
    %620 = arith.addf %618, %619 : vector<8x32xf32>
    %621 = math.tanh %620 : vector<8x32xf32>
    %622 = arith.mulf %617, %621 : vector<8x32xf32>
    %c56_233 = arith.constant 56 : index
    %c0_234 = arith.constant 0 : index
    %623 = vector.load %arg12[%c56_233, %c0_234] : memref<64x32xf32, #tpu.memory_space<vmem>>, vector<8x32xf32>
    tpu.vector_store %arg12[%c56_233, %c0_234], %622 {strides = array<i32>} : memref<64x32xf32, #tpu.memory_space<vmem>>, vector<8x32xf32>,
    %c3 = arith.constant 3 : index
    %c0_235 = arith.constant 0 : index
    %c0_236 = arith.constant 0 : index
    %624 = vector.load %arg1[%c3, %c0_235, %c0_236] : memref<4x32x128xbf16, #tpu.memory_space<vmem>>, vector<1x32x128xbf16>
    %625 = vector.shape_cast %624 : vector<1x32x128xbf16> to vector<32x128xbf16>
    %c3_237 = arith.constant 3 : index
    %c0_238 = arith.constant 0 : index
    %c0_239 = arith.constant 0 : index
    %626 = vector.load %arg2[%c3_237, %c0_238, %c0_239] : memref<4x32x128xbf16, #tpu.memory_space<vmem>>, vector<1x32x128xbf16>
    %627 = vector.shape_cast %626 : vector<1x32x128xbf16> to vector<32x128xbf16>
    %c3_240 = arith.constant 3 : index
    %c0_241 = arith.constant 0 : index
    %c0_242 = arith.constant 0 : index
    %628 = vector.load %arg3[%c3_240, %c0_241, %c0_242] : memref<4x32x128xbf16, #tpu.memory_space<vmem>>, vector<1x32x128xbf16>
    %629 = vector.shape_cast %628 : vector<1x32x128xbf16> to vector<32x128xbf16>
    %c3_243 = arith.constant 3 : index
    %c0_244 = arith.constant 0 : index
    %c0_245 = arith.constant 0 : index
    %630 = vector.load %arg4[%c3_243, %c0_244, %c0_245] : memref<4x1x128xf32, #tpu.memory_space<vmem>>, vector<1x1x128xf32>
    %631 = vector.shape_cast %630 : vector<1x1x128xf32> to vector<1x128xf32>
    %c0_246 = arith.constant 0 : index
    %c0_247 = arith.constant 0 : index
    %632 = vector.load %arg12[%c0_246, %c0_247] : memref<64x32xf32, #tpu.memory_space<vmem>>, vector<64x32xf32>
    %633 = arith.truncf %632 : vector<64x32xf32> to vector<64x32xbf16>
    %cst_248 = arith.constant dense<0.000000e+00> : vector<64x128xf32>
    %634 = tpu.matmul %633, %625, %cst_248 {dimension_numbers = #tpu.dot_dimension_numbers<[1], [0], [0], [1], [0, 0, 1, 1], [], []>} : vector<64x32xbf16>, vector<32x128xbf16>, vector<64x128xf32> -> vector<64x128xf32>
    %635 = vector.broadcast %631 : vector<1x128xf32> to vector<64x128xf32>
    %636 = arith.addf %634, %635 : vector<64x128xf32>
    %cst_249 = arith.constant dense<0.000000e+00> : vector<64x128xf32>
    %637 = tpu.matmul %633, %627, %cst_249 {dimension_numbers = #tpu.dot_dimension_numbers<[1], [0], [0], [1], [0, 0, 1, 1], [], []>} : vector<64x32xbf16>, vector<32x128xbf16>, vector<64x128xf32> -> vector<64x128xf32>
    %638 = vector.extract_strided_slice %636 {offsets = [0, 0], sizes = [8, 128], strides = [1, 1]} : vector<64x128xf32> to vector<8x128xf32>
    %639 = vector.extract_strided_slice %637 {offsets = [56, 0], sizes = [8, 128], strides = [1, 1]} : vector<64x128xf32> to vector<8x128xf32>
    %640 = arith.addf %638, %639 : vector<8x128xf32>
    %c0_250 = arith.constant 0 : index
    %c0_251 = arith.constant 0 : index
    %641 = vector.load %arg13[%c0_250, %c0_251] : memref<64x128xf32, #tpu.memory_space<vmem>>, vector<8x128xf32>
    tpu.vector_store %arg13[%c0_250, %c0_251], %640 {strides = array<i32>} : memref<64x128xf32, #tpu.memory_space<vmem>>, vector<8x128xf32>,
    %642 = vector.extract_strided_slice %636 {offsets = [8, 0], sizes = [8, 128], strides = [1, 1]} : vector<64x128xf32> to vector<8x128xf32>
    %643 = vector.extract_strided_slice %637 {offsets = [48, 0], sizes = [8, 128], strides = [1, 1]} : vector<64x128xf32> to vector<8x128xf32>
    %644 = arith.addf %642, %643 : vector<8x128xf32>
    %c8_252 = arith.constant 8 : index
    %c0_253 = arith.constant 0 : index
    %645 = vector.load %arg13[%c8_252, %c0_253] : memref<64x128xf32, #tpu.memory_space<vmem>>, vector<8x128xf32>
    tpu.vector_store %arg13[%c8_252, %c0_253], %644 {strides = array<i32>} : memref<64x128xf32, #tpu.memory_space<vmem>>, vector<8x128xf32>,
    %646 = vector.extract_strided_slice %636 {offsets = [16, 0], sizes = [8, 128], strides = [1, 1]} : vector<64x128xf32> to vector<8x128xf32>
    %647 = vector.extract_strided_slice %637 {offsets = [40, 0], sizes = [8, 128], strides = [1, 1]} : vector<64x128xf32> to vector<8x128xf32>
    %648 = arith.addf %646, %647 : vector<8x128xf32>
    %c16_254 = arith.constant 16 : index
    %c0_255 = arith.constant 0 : index
    %649 = vector.load %arg13[%c16_254, %c0_255] : memref<64x128xf32, #tpu.memory_space<vmem>>, vector<8x128xf32>
    tpu.vector_store %arg13[%c16_254, %c0_255], %648 {strides = array<i32>} : memref<64x128xf32, #tpu.memory_space<vmem>>, vector<8x128xf32>,
    %650 = vector.extract_strided_slice %636 {offsets = [24, 0], sizes = [8, 128], strides = [1, 1]} : vector<64x128xf32> to vector<8x128xf32>
    %651 = vector.extract_strided_slice %637 {offsets = [32, 0], sizes = [8, 128], strides = [1, 1]} : vector<64x128xf32> to vector<8x128xf32>
    %652 = arith.addf %650, %651 : vector<8x128xf32>
    %c24_256 = arith.constant 24 : index
    %c0_257 = arith.constant 0 : index
    %653 = vector.load %arg13[%c24_256, %c0_257] : memref<64x128xf32, #tpu.memory_space<vmem>>, vector<8x128xf32>
    tpu.vector_store %arg13[%c24_256, %c0_257], %652 {strides = array<i32>} : memref<64x128xf32, #tpu.memory_space<vmem>>, vector<8x128xf32>,
    %654 = vector.extract_strided_slice %636 {offsets = [32, 0], sizes = [8, 128], strides = [1, 1]} : vector<64x128xf32> to vector<8x128xf32>
    %655 = vector.extract_strided_slice %637 {offsets = [24, 0], sizes = [8, 128], strides = [1, 1]} : vector<64x128xf32> to vector<8x128xf32>
    %656 = arith.addf %654, %655 : vector<8x128xf32>
    %c32_258 = arith.constant 32 : index
    %c0_259 = arith.constant 0 : index
    %657 = vector.load %arg13[%c32_258, %c0_259] : memref<64x128xf32, #tpu.memory_space<vmem>>, vector<8x128xf32>
    tpu.vector_store %arg13[%c32_258, %c0_259], %656 {strides = array<i32>} : memref<64x128xf32, #tpu.memory_space<vmem>>, vector<8x128xf32>,
    %658 = vector.extract_strided_slice %636 {offsets = [40, 0], sizes = [8, 128], strides = [1, 1]} : vector<64x128xf32> to vector<8x128xf32>
    %659 = vector.extract_strided_slice %637 {offsets = [16, 0], sizes = [8, 128], strides = [1, 1]} : vector<64x128xf32> to vector<8x128xf32>
    %660 = arith.addf %658, %659 : vector<8x128xf32>
    %c40_260 = arith.constant 40 : index
    %c0_261 = arith.constant 0 : index
    %661 = vector.load %arg13[%c40_260, %c0_261] : memref<64x128xf32, #tpu.memory_space<vmem>>, vector<8x128xf32>
    tpu.vector_store %arg13[%c40_260, %c0_261], %660 {strides = array<i32>} : memref<64x128xf32, #tpu.memory_space<vmem>>, vector<8x128xf32>,
    %662 = vector.extract_strided_slice %636 {offsets = [48, 0], sizes = [8, 128], strides = [1, 1]} : vector<64x128xf32> to vector<8x128xf32>
    %663 = vector.extract_strided_slice %637 {offsets = [8, 0], sizes = [8, 128], strides = [1, 1]} : vector<64x128xf32> to vector<8x128xf32>
    %664 = arith.addf %662, %663 : vector<8x128xf32>
    %c48_262 = arith.constant 48 : index
    %c0_263 = arith.constant 0 : index
    %665 = vector.load %arg13[%c48_262, %c0_263] : memref<64x128xf32, #tpu.memory_space<vmem>>, vector<8x128xf32>
    tpu.vector_store %arg13[%c48_262, %c0_263], %664 {strides = array<i32>} : memref<64x128xf32, #tpu.memory_space<vmem>>, vector<8x128xf32>,
    %666 = vector.extract_strided_slice %636 {offsets = [56, 0], sizes = [8, 128], strides = [1, 1]} : vector<64x128xf32> to vector<8x128xf32>
    %667 = vector.extract_strided_slice %637 {offsets = [0, 0], sizes = [8, 128], strides = [1, 1]} : vector<64x128xf32> to vector<8x128xf32>
    %668 = arith.addf %666, %667 : vector<8x128xf32>
    %c56_264 = arith.constant 56 : index
    %c0_265 = arith.constant 0 : index
    %669 = vector.load %arg13[%c56_264, %c0_265] : memref<64x128xf32, #tpu.memory_space<vmem>>, vector<8x128xf32>
    tpu.vector_store %arg13[%c56_264, %c0_265], %668 {strides = array<i32>} : memref<64x128xf32, #tpu.memory_space<vmem>>, vector<8x128xf32>,
    %cst_266 = arith.constant 0.000000e+00 : f32
    %670 = vector.broadcast %cst_266 : f32 to vector<8x32xf32>
    %cst_267 = arith.constant 0.000000e+00 : f32
    %671 = vector.broadcast %cst_267 : f32 to vector<8x32xf32>
    %c0_268 = arith.constant 0 : index
    %c0_269 = arith.constant 0 : index
    %672 = vector.load %arg13[%c0_268, %c0_269] : memref<64x128xf32, #tpu.memory_space<vmem>>, vector<8x128xf32>
    %673 = arith.truncf %670 : vector<8x32xf32> to vector<8x32xbf16>
    %cst_270 = arith.constant dense<0.000000e+00> : vector<8x128xf32>
    %674 = tpu.matmul %673, %629, %cst_270 {dimension_numbers = #tpu.dot_dimension_numbers<[1], [0], [0], [1], [0, 0, 1, 1], [], []>} : vector<8x32xbf16>, vector<32x128xbf16>, vector<8x128xf32> -> vector<8x128xf32>
    %675 = arith.addf %672, %674 : vector<8x128xf32>
    %676 = arith.negf %675 : vector<8x128xf32>
    %677 = math.exp %676 : vector<8x128xf32>
    %cst_271 = arith.constant 1.000000e+00 : f32
    %678 = vector.broadcast %cst_271 : f32 to vector<8x128xf32>
    %679 = arith.addf %678, %677 : vector<8x128xf32>
    %680 = arith.divf %678, %679 : vector<8x128xf32>
    %681 = math.tanh %675 : vector<8x128xf32>
    %682 = vector.extract_strided_slice %680 {offsets = [0, 0], sizes = [8, 32], strides = [1, 1]} : vector<8x128xf32> to vector<8x32xf32>
    %683 = vector.extract_strided_slice %680 {offsets = [0, 32], sizes = [8, 32], strides = [1, 1]} : vector<8x128xf32> to vector<8x32xf32>
    %684 = vector.extract_strided_slice %681 {offsets = [0, 64], sizes = [8, 32], strides = [1, 1]} : vector<8x128xf32> to vector<8x32xf32>
    %685 = vector.extract_strided_slice %680 {offsets = [0, 96], sizes = [8, 32], strides = [1, 1]} : vector<8x128xf32> to vector<8x32xf32>
    %686 = arith.mulf %683, %671 : vector<8x32xf32>
    %687 = arith.mulf %682, %684 : vector<8x32xf32>
    %688 = arith.addf %686, %687 : vector<8x32xf32>
    %689 = math.tanh %688 : vector<8x32xf32>
    %690 = arith.mulf %685, %689 : vector<8x32xf32>
    %691 = vector.extract_strided_slice %690 {offsets = [0, 0], sizes = [8, 16], strides = [1, 1]} : vector<8x32xf32> to vector<8x16xf32>
    %c0_272 = arith.constant 0 : index
    %c0_273 = arith.constant 0 : index
    %692 = vector.load %arg14[%c0_272, %c0_273] : memref<64x32xf32, #tpu.memory_space<vmem>>, vector<8x16xf32>
    tpu.vector_store %arg14[%c0_272, %c0_273], %691 {strides = array<i32>} : memref<64x32xf32, #tpu.memory_space<vmem>>, vector<8x16xf32>,
    %693 = vector.extract_strided_slice %690 {offsets = [0, 16], sizes = [8, 16], strides = [1, 1]} : vector<8x32xf32> to vector<8x16xf32>
    %c56_274 = arith.constant 56 : index
    %c16_275 = arith.constant 16 : index
    %694 = vector.load %arg14[%c56_274, %c16_275] : memref<64x32xf32, #tpu.memory_space<vmem>>, vector<8x16xf32>
    tpu.vector_store %arg14[%c56_274, %c16_275], %693 {strides = array<i32>} : memref<64x32xf32, #tpu.memory_space<vmem>>, vector<8x16xf32>,
    %c8_276 = arith.constant 8 : index
    %c0_277 = arith.constant 0 : index
    %695 = vector.load %arg13[%c8_276, %c0_277] : memref<64x128xf32, #tpu.memory_space<vmem>>, vector<8x128xf32>
    %696 = arith.truncf %690 : vector<8x32xf32> to vector<8x32xbf16>
    %cst_278 = arith.constant dense<0.000000e+00> : vector<8x128xf32>
    %697 = tpu.matmul %696, %629, %cst_278 {dimension_numbers = #tpu.dot_dimension_numbers<[1], [0], [0], [1], [0, 0, 1, 1], [], []>} : vector<8x32xbf16>, vector<32x128xbf16>, vector<8x128xf32> -> vector<8x128xf32>
    %698 = arith.addf %695, %697 : vector<8x128xf32>
    %699 = arith.negf %698 : vector<8x128xf32>
    %700 = math.exp %699 : vector<8x128xf32>
    %cst_279 = arith.constant 1.000000e+00 : f32
    %701 = vector.broadcast %cst_279 : f32 to vector<8x128xf32>
    %702 = arith.addf %701, %700 : vector<8x128xf32>
    %703 = arith.divf %701, %702 : vector<8x128xf32>
    %704 = math.tanh %698 : vector<8x128xf32>
    %705 = vector.extract_strided_slice %703 {offsets = [0, 0], sizes = [8, 32], strides = [1, 1]} : vector<8x128xf32> to vector<8x32xf32>
    %706 = vector.extract_strided_slice %703 {offsets = [0, 32], sizes = [8, 32], strides = [1, 1]} : vector<8x128xf32> to vector<8x32xf32>
    %707 = vector.extract_strided_slice %704 {offsets = [0, 64], sizes = [8, 32], strides = [1, 1]} : vector<8x128xf32> to vector<8x32xf32>
    %708 = vector.extract_strided_slice %703 {offsets = [0, 96], sizes = [8, 32], strides = [1, 1]} : vector<8x128xf32> to vector<8x32xf32>
    %709 = arith.mulf %706, %688 : vector<8x32xf32>
    %710 = arith.mulf %705, %707 : vector<8x32xf32>
    %711 = arith.addf %709, %710 : vector<8x32xf32>
    %712 = math.tanh %711 : vector<8x32xf32>
    %713 = arith.mulf %708, %712 : vector<8x32xf32>
    %714 = vector.extract_strided_slice %713 {offsets = [0, 0], sizes = [8, 16], strides = [1, 1]} : vector<8x32xf32> to vector<8x16xf32>
    %c8_280 = arith.constant 8 : index
    %c0_281 = arith.constant 0 : index
    %715 = vector.load %arg14[%c8_280, %c0_281] : memref<64x32xf32, #tpu.memory_space<vmem>>, vector<8x16xf32>
    tpu.vector_store %arg14[%c8_280, %c0_281], %714 {strides = array<i32>} : memref<64x32xf32, #tpu.memory_space<vmem>>, vector<8x16xf32>,
    %716 = vector.extract_strided_slice %713 {offsets = [0, 16], sizes = [8, 16], strides = [1, 1]} : vector<8x32xf32> to vector<8x16xf32>
    %c48_282 = arith.constant 48 : index
    %c16_283 = arith.constant 16 : index
    %717 = vector.load %arg14[%c48_282, %c16_283] : memref<64x32xf32, #tpu.memory_space<vmem>>, vector<8x16xf32>
    tpu.vector_store %arg14[%c48_282, %c16_283], %716 {strides = array<i32>} : memref<64x32xf32, #tpu.memory_space<vmem>>, vector<8x16xf32>,
    %c16_284 = arith.constant 16 : index
    %c0_285 = arith.constant 0 : index
    %718 = vector.load %arg13[%c16_284, %c0_285] : memref<64x128xf32, #tpu.memory_space<vmem>>, vector<8x128xf32>
    %719 = arith.truncf %713 : vector<8x32xf32> to vector<8x32xbf16>
    %cst_286 = arith.constant dense<0.000000e+00> : vector<8x128xf32>
    %720 = tpu.matmul %719, %629, %cst_286 {dimension_numbers = #tpu.dot_dimension_numbers<[1], [0], [0], [1], [0, 0, 1, 1], [], []>} : vector<8x32xbf16>, vector<32x128xbf16>, vector<8x128xf32> -> vector<8x128xf32>
    %721 = arith.addf %718, %720 : vector<8x128xf32>
    %722 = arith.negf %721 : vector<8x128xf32>
    %723 = math.exp %722 : vector<8x128xf32>
    %cst_287 = arith.constant 1.000000e+00 : f32
    %724 = vector.broadcast %cst_287 : f32 to vector<8x128xf32>
    %725 = arith.addf %724, %723 : vector<8x128xf32>
    %726 = arith.divf %724, %725 : vector<8x128xf32>
    %727 = math.tanh %721 : vector<8x128xf32>
    %728 = vector.extract_strided_slice %726 {offsets = [0, 0], sizes = [8, 32], strides = [1, 1]} : vector<8x128xf32> to vector<8x32xf32>
    %729 = vector.extract_strided_slice %726 {offsets = [0, 32], sizes = [8, 32], strides = [1, 1]} : vector<8x128xf32> to vector<8x32xf32>
    %730 = vector.extract_strided_slice %727 {offsets = [0, 64], sizes = [8, 32], strides = [1, 1]} : vector<8x128xf32> to vector<8x32xf32>
    %731 = vector.extract_strided_slice %726 {offsets = [0, 96], sizes = [8, 32], strides = [1, 1]} : vector<8x128xf32> to vector<8x32xf32>
    %732 = arith.mulf %729, %711 : vector<8x32xf32>
    %733 = arith.mulf %728, %730 : vector<8x32xf32>
    %734 = arith.addf %732, %733 : vector<8x32xf32>
    %735 = math.tanh %734 : vector<8x32xf32>
    %736 = arith.mulf %731, %735 : vector<8x32xf32>
    %737 = vector.extract_strided_slice %736 {offsets = [0, 0], sizes = [8, 16], strides = [1, 1]} : vector<8x32xf32> to vector<8x16xf32>
    %c16_288 = arith.constant 16 : index
    %c0_289 = arith.constant 0 : index
    %738 = vector.load %arg14[%c16_288, %c0_289] : memref<64x32xf32, #tpu.memory_space<vmem>>, vector<8x16xf32>
    tpu.vector_store %arg14[%c16_288, %c0_289], %737 {strides = array<i32>} : memref<64x32xf32, #tpu.memory_space<vmem>>, vector<8x16xf32>,
    %739 = vector.extract_strided_slice %736 {offsets = [0, 16], sizes = [8, 16], strides = [1, 1]} : vector<8x32xf32> to vector<8x16xf32>
    %c40_290 = arith.constant 40 : index
    %c16_291 = arith.constant 16 : index
    %740 = vector.load %arg14[%c40_290, %c16_291] : memref<64x32xf32, #tpu.memory_space<vmem>>, vector<8x16xf32>
    tpu.vector_store %arg14[%c40_290, %c16_291], %739 {strides = array<i32>} : memref<64x32xf32, #tpu.memory_space<vmem>>, vector<8x16xf32>,
    %c24_292 = arith.constant 24 : index
    %c0_293 = arith.constant 0 : index
    %741 = vector.load %arg13[%c24_292, %c0_293] : memref<64x128xf32, #tpu.memory_space<vmem>>, vector<8x128xf32>
    %742 = arith.truncf %736 : vector<8x32xf32> to vector<8x32xbf16>
    %cst_294 = arith.constant dense<0.000000e+00> : vector<8x128xf32>
    %743 = tpu.matmul %742, %629, %cst_294 {dimension_numbers = #tpu.dot_dimension_numbers<[1], [0], [0], [1], [0, 0, 1, 1], [], []>} : vector<8x32xbf16>, vector<32x128xbf16>, vector<8x128xf32> -> vector<8x128xf32>
    %744 = arith.addf %741, %743 : vector<8x128xf32>
    %745 = arith.negf %744 : vector<8x128xf32>
    %746 = math.exp %745 : vector<8x128xf32>
    %cst_295 = arith.constant 1.000000e+00 : f32
    %747 = vector.broadcast %cst_295 : f32 to vector<8x128xf32>
    %748 = arith.addf %747, %746 : vector<8x128xf32>
    %749 = arith.divf %747, %748 : vector<8x128xf32>
    %750 = math.tanh %744 : vector<8x128xf32>
    %751 = vector.extract_strided_slice %749 {offsets = [0, 0], sizes = [8, 32], strides = [1, 1]} : vector<8x128xf32> to vector<8x32xf32>
    %752 = vector.extract_strided_slice %749 {offsets = [0, 32], sizes = [8, 32], strides = [1, 1]} : vector<8x128xf32> to vector<8x32xf32>
    %753 = vector.extract_strided_slice %750 {offsets = [0, 64], sizes = [8, 32], strides = [1, 1]} : vector<8x128xf32> to vector<8x32xf32>
    %754 = vector.extract_strided_slice %749 {offsets = [0, 96], sizes = [8, 32], strides = [1, 1]} : vector<8x128xf32> to vector<8x32xf32>
    %755 = arith.mulf %752, %734 : vector<8x32xf32>
    %756 = arith.mulf %751, %753 : vector<8x32xf32>
    %757 = arith.addf %755, %756 : vector<8x32xf32>
    %758 = math.tanh %757 : vector<8x32xf32>
    %759 = arith.mulf %754, %758 : vector<8x32xf32>
    %760 = vector.extract_strided_slice %759 {offsets = [0, 0], sizes = [8, 16], strides = [1, 1]} : vector<8x32xf32> to vector<8x16xf32>
    %c24_296 = arith.constant 24 : index
    %c0_297 = arith.constant 0 : index
    %761 = vector.load %arg14[%c24_296, %c0_297] : memref<64x32xf32, #tpu.memory_space<vmem>>, vector<8x16xf32>
    tpu.vector_store %arg14[%c24_296, %c0_297], %760 {strides = array<i32>} : memref<64x32xf32, #tpu.memory_space<vmem>>, vector<8x16xf32>,
    %762 = vector.extract_strided_slice %759 {offsets = [0, 16], sizes = [8, 16], strides = [1, 1]} : vector<8x32xf32> to vector<8x16xf32>
    %c32_298 = arith.constant 32 : index
    %c16_299 = arith.constant 16 : index
    %763 = vector.load %arg14[%c32_298, %c16_299] : memref<64x32xf32, #tpu.memory_space<vmem>>, vector<8x16xf32>
    tpu.vector_store %arg14[%c32_298, %c16_299], %762 {strides = array<i32>} : memref<64x32xf32, #tpu.memory_space<vmem>>, vector<8x16xf32>,
    %c32_300 = arith.constant 32 : index
    %c0_301 = arith.constant 0 : index
    %764 = vector.load %arg13[%c32_300, %c0_301] : memref<64x128xf32, #tpu.memory_space<vmem>>, vector<8x128xf32>
    %765 = arith.truncf %759 : vector<8x32xf32> to vector<8x32xbf16>
    %cst_302 = arith.constant dense<0.000000e+00> : vector<8x128xf32>
    %766 = tpu.matmul %765, %629, %cst_302 {dimension_numbers = #tpu.dot_dimension_numbers<[1], [0], [0], [1], [0, 0, 1, 1], [], []>} : vector<8x32xbf16>, vector<32x128xbf16>, vector<8x128xf32> -> vector<8x128xf32>
    %767 = arith.addf %764, %766 : vector<8x128xf32>
    %768 = arith.negf %767 : vector<8x128xf32>
    %769 = math.exp %768 : vector<8x128xf32>
    %cst_303 = arith.constant 1.000000e+00 : f32
    %770 = vector.broadcast %cst_303 : f32 to vector<8x128xf32>
    %771 = arith.addf %770, %769 : vector<8x128xf32>
    %772 = arith.divf %770, %771 : vector<8x128xf32>
    %773 = math.tanh %767 : vector<8x128xf32>
    %774 = vector.extract_strided_slice %772 {offsets = [0, 0], sizes = [8, 32], strides = [1, 1]} : vector<8x128xf32> to vector<8x32xf32>
    %775 = vector.extract_strided_slice %772 {offsets = [0, 32], sizes = [8, 32], strides = [1, 1]} : vector<8x128xf32> to vector<8x32xf32>
    %776 = vector.extract_strided_slice %773 {offsets = [0, 64], sizes = [8, 32], strides = [1, 1]} : vector<8x128xf32> to vector<8x32xf32>
    %777 = vector.extract_strided_slice %772 {offsets = [0, 96], sizes = [8, 32], strides = [1, 1]} : vector<8x128xf32> to vector<8x32xf32>
    %778 = arith.mulf %775, %757 : vector<8x32xf32>
    %779 = arith.mulf %774, %776 : vector<8x32xf32>
    %780 = arith.addf %778, %779 : vector<8x32xf32>
    %781 = math.tanh %780 : vector<8x32xf32>
    %782 = arith.mulf %777, %781 : vector<8x32xf32>
    %783 = vector.extract_strided_slice %782 {offsets = [0, 0], sizes = [8, 16], strides = [1, 1]} : vector<8x32xf32> to vector<8x16xf32>
    %c32_304 = arith.constant 32 : index
    %c0_305 = arith.constant 0 : index
    %784 = vector.load %arg14[%c32_304, %c0_305] : memref<64x32xf32, #tpu.memory_space<vmem>>, vector<8x16xf32>
    tpu.vector_store %arg14[%c32_304, %c0_305], %783 {strides = array<i32>} : memref<64x32xf32, #tpu.memory_space<vmem>>, vector<8x16xf32>,
    %785 = vector.extract_strided_slice %782 {offsets = [0, 16], sizes = [8, 16], strides = [1, 1]} : vector<8x32xf32> to vector<8x16xf32>
    %c24_306 = arith.constant 24 : index
    %c16_307 = arith.constant 16 : index
    %786 = vector.load %arg14[%c24_306, %c16_307] : memref<64x32xf32, #tpu.memory_space<vmem>>, vector<8x16xf32>
    tpu.vector_store %arg14[%c24_306, %c16_307], %785 {strides = array<i32>} : memref<64x32xf32, #tpu.memory_space<vmem>>, vector<8x16xf32>,
    %c40_308 = arith.constant 40 : index
    %c0_309 = arith.constant 0 : index
    %787 = vector.load %arg13[%c40_308, %c0_309] : memref<64x128xf32, #tpu.memory_space<vmem>>, vector<8x128xf32>
    %788 = arith.truncf %782 : vector<8x32xf32> to vector<8x32xbf16>
    %cst_310 = arith.constant dense<0.000000e+00> : vector<8x128xf32>
    %789 = tpu.matmul %788, %629, %cst_310 {dimension_numbers = #tpu.dot_dimension_numbers<[1], [0], [0], [1], [0, 0, 1, 1], [], []>} : vector<8x32xbf16>, vector<32x128xbf16>, vector<8x128xf32> -> vector<8x128xf32>
    %790 = arith.addf %787, %789 : vector<8x128xf32>
    %791 = arith.negf %790 : vector<8x128xf32>
    %792 = math.exp %791 : vector<8x128xf32>
    %cst_311 = arith.constant 1.000000e+00 : f32
    %793 = vector.broadcast %cst_311 : f32 to vector<8x128xf32>
    %794 = arith.addf %793, %792 : vector<8x128xf32>
    %795 = arith.divf %793, %794 : vector<8x128xf32>
    %796 = math.tanh %790 : vector<8x128xf32>
    %797 = vector.extract_strided_slice %795 {offsets = [0, 0], sizes = [8, 32], strides = [1, 1]} : vector<8x128xf32> to vector<8x32xf32>
    %798 = vector.extract_strided_slice %795 {offsets = [0, 32], sizes = [8, 32], strides = [1, 1]} : vector<8x128xf32> to vector<8x32xf32>
    %799 = vector.extract_strided_slice %796 {offsets = [0, 64], sizes = [8, 32], strides = [1, 1]} : vector<8x128xf32> to vector<8x32xf32>
    %800 = vector.extract_strided_slice %795 {offsets = [0, 96], sizes = [8, 32], strides = [1, 1]} : vector<8x128xf32> to vector<8x32xf32>
    %801 = arith.mulf %798, %780 : vector<8x32xf32>
    %802 = arith.mulf %797, %799 : vector<8x32xf32>
    %803 = arith.addf %801, %802 : vector<8x32xf32>
    %804 = math.tanh %803 : vector<8x32xf32>
    %805 = arith.mulf %800, %804 : vector<8x32xf32>
    %806 = vector.extract_strided_slice %805 {offsets = [0, 0], sizes = [8, 16], strides = [1, 1]} : vector<8x32xf32> to vector<8x16xf32>
    %c40_312 = arith.constant 40 : index
    %c0_313 = arith.constant 0 : index
    %807 = vector.load %arg14[%c40_312, %c0_313] : memref<64x32xf32, #tpu.memory_space<vmem>>, vector<8x16xf32>
    tpu.vector_store %arg14[%c40_312, %c0_313], %806 {strides = array<i32>} : memref<64x32xf32, #tpu.memory_space<vmem>>, vector<8x16xf32>,
    %808 = vector.extract_strided_slice %805 {offsets = [0, 16], sizes = [8, 16], strides = [1, 1]} : vector<8x32xf32> to vector<8x16xf32>
    %c16_314 = arith.constant 16 : index
    %c16_315 = arith.constant 16 : index
    %809 = vector.load %arg14[%c16_314, %c16_315] : memref<64x32xf32, #tpu.memory_space<vmem>>, vector<8x16xf32>
    tpu.vector_store %arg14[%c16_314, %c16_315], %808 {strides = array<i32>} : memref<64x32xf32, #tpu.memory_space<vmem>>, vector<8x16xf32>,
    %c48_316 = arith.constant 48 : index
    %c0_317 = arith.constant 0 : index
    %810 = vector.load %arg13[%c48_316, %c0_317] : memref<64x128xf32, #tpu.memory_space<vmem>>, vector<8x128xf32>
    %811 = arith.truncf %805 : vector<8x32xf32> to vector<8x32xbf16>
    %cst_318 = arith.constant dense<0.000000e+00> : vector<8x128xf32>
    %812 = tpu.matmul %811, %629, %cst_318 {dimension_numbers = #tpu.dot_dimension_numbers<[1], [0], [0], [1], [0, 0, 1, 1], [], []>} : vector<8x32xbf16>, vector<32x128xbf16>, vector<8x128xf32> -> vector<8x128xf32>
    %813 = arith.addf %810, %812 : vector<8x128xf32>
    %814 = arith.negf %813 : vector<8x128xf32>
    %815 = math.exp %814 : vector<8x128xf32>
    %cst_319 = arith.constant 1.000000e+00 : f32
    %816 = vector.broadcast %cst_319 : f32 to vector<8x128xf32>
    %817 = arith.addf %816, %815 : vector<8x128xf32>
    %818 = arith.divf %816, %817 : vector<8x128xf32>
    %819 = math.tanh %813 : vector<8x128xf32>
    %820 = vector.extract_strided_slice %818 {offsets = [0, 0], sizes = [8, 32], strides = [1, 1]} : vector<8x128xf32> to vector<8x32xf32>
    %821 = vector.extract_strided_slice %818 {offsets = [0, 32], sizes = [8, 32], strides = [1, 1]} : vector<8x128xf32> to vector<8x32xf32>
    %822 = vector.extract_strided_slice %819 {offsets = [0, 64], sizes = [8, 32], strides = [1, 1]} : vector<8x128xf32> to vector<8x32xf32>
    %823 = vector.extract_strided_slice %818 {offsets = [0, 96], sizes = [8, 32], strides = [1, 1]} : vector<8x128xf32> to vector<8x32xf32>
    %824 = arith.mulf %821, %803 : vector<8x32xf32>
    %825 = arith.mulf %820, %822 : vector<8x32xf32>
    %826 = arith.addf %824, %825 : vector<8x32xf32>
    %827 = math.tanh %826 : vector<8x32xf32>
    %828 = arith.mulf %823, %827 : vector<8x32xf32>
    %829 = vector.extract_strided_slice %828 {offsets = [0, 0], sizes = [8, 16], strides = [1, 1]} : vector<8x32xf32> to vector<8x16xf32>
    %c48_320 = arith.constant 48 : index
    %c0_321 = arith.constant 0 : index
    %830 = vector.load %arg14[%c48_320, %c0_321] : memref<64x32xf32, #tpu.memory_space<vmem>>, vector<8x16xf32>
    tpu.vector_store %arg14[%c48_320, %c0_321], %829 {strides = array<i32>} : memref<64x32xf32, #tpu.memory_space<vmem>>, vector<8x16xf32>,
    %831 = vector.extract_strided_slice %828 {offsets = [0, 16], sizes = [8, 16], strides = [1, 1]} : vector<8x32xf32> to vector<8x16xf32>
    %c8_322 = arith.constant 8 : index
    %c16_323 = arith.constant 16 : index
    %832 = vector.load %arg14[%c8_322, %c16_323] : memref<64x32xf32, #tpu.memory_space<vmem>>, vector<8x16xf32>
    tpu.vector_store %arg14[%c8_322, %c16_323], %831 {strides = array<i32>} : memref<64x32xf32, #tpu.memory_space<vmem>>, vector<8x16xf32>,
    %c56_324 = arith.constant 56 : index
    %c0_325 = arith.constant 0 : index
    %833 = vector.load %arg13[%c56_324, %c0_325] : memref<64x128xf32, #tpu.memory_space<vmem>>, vector<8x128xf32>
    %834 = arith.truncf %828 : vector<8x32xf32> to vector<8x32xbf16>
    %cst_326 = arith.constant dense<0.000000e+00> : vector<8x128xf32>
    %835 = tpu.matmul %834, %629, %cst_326 {dimension_numbers = #tpu.dot_dimension_numbers<[1], [0], [0], [1], [0, 0, 1, 1], [], []>} : vector<8x32xbf16>, vector<32x128xbf16>, vector<8x128xf32> -> vector<8x128xf32>
    %836 = arith.addf %833, %835 : vector<8x128xf32>
    %837 = arith.negf %836 : vector<8x128xf32>
    %838 = math.exp %837 : vector<8x128xf32>
    %cst_327 = arith.constant 1.000000e+00 : f32
    %839 = vector.broadcast %cst_327 : f32 to vector<8x128xf32>
    %840 = arith.addf %839, %838 : vector<8x128xf32>
    %841 = arith.divf %839, %840 : vector<8x128xf32>
    %842 = math.tanh %836 : vector<8x128xf32>
    %843 = vector.extract_strided_slice %841 {offsets = [0, 0], sizes = [8, 32], strides = [1, 1]} : vector<8x128xf32> to vector<8x32xf32>
    %844 = vector.extract_strided_slice %841 {offsets = [0, 32], sizes = [8, 32], strides = [1, 1]} : vector<8x128xf32> to vector<8x32xf32>
    %845 = vector.extract_strided_slice %842 {offsets = [0, 64], sizes = [8, 32], strides = [1, 1]} : vector<8x128xf32> to vector<8x32xf32>
    %846 = vector.extract_strided_slice %841 {offsets = [0, 96], sizes = [8, 32], strides = [1, 1]} : vector<8x128xf32> to vector<8x32xf32>
    %847 = arith.mulf %844, %826 : vector<8x32xf32>
    %848 = arith.mulf %843, %845 : vector<8x32xf32>
    %849 = arith.addf %847, %848 : vector<8x32xf32>
    %850 = math.tanh %849 : vector<8x32xf32>
    %851 = arith.mulf %846, %850 : vector<8x32xf32>
    %852 = vector.extract_strided_slice %851 {offsets = [0, 0], sizes = [8, 16], strides = [1, 1]} : vector<8x32xf32> to vector<8x16xf32>
    %c56_328 = arith.constant 56 : index
    %c0_329 = arith.constant 0 : index
    %853 = vector.load %arg14[%c56_328, %c0_329] : memref<64x32xf32, #tpu.memory_space<vmem>>, vector<8x16xf32>
    tpu.vector_store %arg14[%c56_328, %c0_329], %852 {strides = array<i32>} : memref<64x32xf32, #tpu.memory_space<vmem>>, vector<8x16xf32>,
    %854 = vector.extract_strided_slice %851 {offsets = [0, 16], sizes = [8, 16], strides = [1, 1]} : vector<8x32xf32> to vector<8x16xf32>
    %c0_330 = arith.constant 0 : index
    %c16_331 = arith.constant 16 : index
    %855 = vector.load %arg14[%c0_330, %c16_331] : memref<64x32xf32, #tpu.memory_space<vmem>>, vector<8x16xf32>
    tpu.vector_store %arg14[%c0_330, %c16_331], %854 {strides = array<i32>} : memref<64x32xf32, #tpu.memory_space<vmem>>, vector<8x16xf32>,
    %c0_332 = arith.constant 0 : index
    %c0_333 = arith.constant 0 : index
    %856 = vector.load %arg14[%c0_332, %c0_333] : memref<64x32xf32, #tpu.memory_space<vmem>>, vector<64x32xf32>
    %c0_334 = arith.constant 0 : index
    %c0_335 = arith.constant 0 : index
    %857 = vector.load %arg5[%c0_334, %c0_335] : memref<32x32xf32, #tpu.memory_space<vmem>>, vector<32x32xf32>
    %cst_336 = arith.constant dense<0.000000e+00> : vector<64x32xf32>
    %858 = tpu.matmul %856, %857, %cst_336 {dimension_numbers = #tpu.dot_dimension_numbers<[1], [0], [0], [1], [0, 0, 1, 1], [], []>} : vector<64x32xf32>, vector<32x32xf32>, vector<64x32xf32> -> vector<64x32xf32>
    %c0_337 = arith.constant 0 : index
    %c0_338 = arith.constant 0 : index
    %859 = vector.load %arg6[%c0_337, %c0_338] : memref<1x32xf32, #tpu.memory_space<vmem>>, vector<1x32xf32>
    %860 = vector.broadcast %859 : vector<1x32xf32> to vector<64x32xf32>
    %861 = arith.addf %858, %860 : vector<64x32xf32>
    %cst_339 = arith.constant 0.000000e+00 : f32
    %862 = vector.broadcast %cst_339 : f32 to vector<64x32xf32>
    %863 = arith.maximumf %861, %862 : vector<64x32xf32>
    %c0_340 = arith.constant 0 : index
    %c0_341 = arith.constant 0 : index
    %864 = vector.load %arg7[%c0_340, %c0_341] : memref<32x32xf32, #tpu.memory_space<vmem>>, vector<32x32xf32>
    %cst_342 = arith.constant dense<0.000000e+00> : vector<64x32xf32>
    %865 = tpu.matmul %863, %864, %cst_342 {dimension_numbers = #tpu.dot_dimension_numbers<[1], [0], [0], [1], [0, 0, 1, 1], [], []>} : vector<64x32xf32>, vector<32x32xf32>, vector<64x32xf32> -> vector<64x32xf32>
    %c0_343 = arith.constant 0 : index
    %c0_344 = arith.constant 0 : index
    %866 = vector.load %arg8[%c0_343, %c0_344] : memref<1x32xf32, #tpu.memory_space<vmem>>, vector<1x32xf32>
    %867 = vector.broadcast %866 : vector<1x32xf32> to vector<64x32xf32>
    %868 = arith.addf %865, %867 : vector<64x32xf32>
    %cst_345 = arith.constant 0.000000e+00 : f32
    %869 = vector.broadcast %cst_345 : f32 to vector<64x32xf32>
    %870 = arith.maximumf %868, %869 : vector<64x32xf32>
    %c0_346 = arith.constant 0 : index
    %c0_347 = arith.constant 0 : index
    %871 = vector.load %arg9[%c0_346, %c0_347] : memref<32x4xf32, #tpu.memory_space<vmem>>, vector<32x4xf32>
    %cst_348 = arith.constant dense<0.000000e+00> : vector<64x4xf32>
    %872 = tpu.matmul %870, %871, %cst_348 {dimension_numbers = #tpu.dot_dimension_numbers<[1], [0], [0], [1], [0, 0, 1, 1], [], []>} : vector<64x32xf32>, vector<32x4xf32>, vector<64x4xf32> -> vector<64x4xf32>
    %c0_349 = arith.constant 0 : index
    %c0_350 = arith.constant 0 : index
    %873 = vector.load %arg10[%c0_349, %c0_350] : memref<1x4xf32, #tpu.memory_space<vmem>>, vector<1x4xf32>
    %874 = vector.broadcast %873 : vector<1x4xf32> to vector<64x4xf32>
    %875 = arith.addf %872, %874 : vector<64x4xf32>
    %cst_351 = arith.constant dense<0xFF800000> : vector<64xf32>
    %876 = vector.multi_reduction <maximumf>, %875, %cst_351 [1] : vector<64x4xf32> to vector<64xf32>
    %877 = vector.shape_cast %876 : vector<64xf32> to vector<64x1xf32>
    %878 = vector.broadcast %877 : vector<64x1xf32> to vector<64x4xf32>
    %879 = arith.subf %875, %878 : vector<64x4xf32>
    %880 = math.exp %879 : vector<64x4xf32>
    %cst_352 = arith.constant dense<0.000000e+00> : vector<64xf32>
    %881 = vector.multi_reduction <add>, %880, %cst_352 [1] : vector<64x4xf32> to vector<64xf32>
    %882 = vector.shape_cast %881 : vector<64xf32> to vector<64x1xf32>
    %883 = math.log %882 : vector<64x1xf32>
    %884 = vector.broadcast %883 : vector<64x1xf32> to vector<64x4xf32>
    %885 = arith.subf %879, %884 : vector<64x4xf32>
    %c0_353 = arith.constant 0 : index
    %c0_354 = arith.constant 0 : index
    %886 = vector.load %arg11[%c0_353, %c0_354] : memref<64x4xf32, #tpu.memory_space<vmem>>, vector<64x4xf32>
    tpu.vector_store %arg11[%c0_353, %c0_354], %885 {strides = array<i32>} : memref<64x4xf32, #tpu.memory_space<vmem>>, vector<64x4xf32>,
    return
  }
}

</mosaic_0001>

<llo_original>
// kernel: lstm_tagger_forward.1
$region0: #{lstm_tagger_forward.1}
  #allocation0 [shape = 'u32[]', space=smem, size = 0x4, offset = 0x4, fixed_abs, tag = 'smem constant byte address 0x4 - core index']
  #allocation1 [shape = 'u32[72,128]{1,0:T(1,128)}', space=vmem, size = 0x9000, scoped, tag = 'internal scratch']
  #allocation2 [shape = 'f32[64,32]{1,0:T(8,128)}', space=vmem, size = 0x8000, scoped, tag = 'scratch operand']
  #allocation3 [shape = 'f32[64,128]{1,0:T(8,128)}', space=vmem, size = 0x8000, scoped, tag = 'scratch operand']
  #allocation4 [shape = 'f32[64,32]{1,0:T(8,128)}', space=vmem, size = 0x8000, scoped, tag = 'scratch operand']
  %s0 = inlined_call_operand.vmem [shape: f32[64,32], index: 0, kind: input, shape index: {}]
  %s1 = inlined_call_operand.vmem [shape: bf16[4,32,128], index: 1, kind: input, shape index: {}]
  %s2 = inlined_call_operand.vmem [shape: bf16[4,32,128], index: 2, kind: input, shape index: {}]
  %s3 = inlined_call_operand.hbm [shape: bf16[4,32,128], index: 3, kind: input, shape index: {}]
  %s4 = inlined_call_operand.vmem [shape: f32[4,1,128], index: 4, kind: input, shape index: {}]
  %s5 = inlined_call_operand.vmem [shape: f32[32,32], index: 5, kind: input, shape index: {}]
  %s6 = inlined_call_operand.vmem [shape: f32[1,32], index: 6, kind: input, shape index: {}]
  %s7 = inlined_call_operand.hbm [shape: f32[32,32], index: 7, kind: input, shape index: {}]
  %s8 = inlined_call_operand.vmem [shape: f32[1,32], index: 8, kind: input, shape index: {}]
  %s9 = inlined_call_operand.vmem [shape: f32[32,4], index: 9, kind: input, shape index: {}]
  %s10 = inlined_call_operand.vmem [shape: f32[1,4], index: 10, kind: input, shape index: {}]
  %s11 = inlined_call_operand.vmem [shape: f32[64,4], index: 11, kind: output, shape index: {}]
  %s12 = sld [smem:[#allocation0]]
  $region62: #{lstm_tagger_forward.1} parent=0
    _
  %s14 = ssub.s32 1, %s12
  %s15 = scalar_select 0, %s14, %s12
  $region1: #{lstm_tagger_forward.1} parent=0
    #allocation5 [shape = 'u8[32768]{0}', space=vmem, size = 0x8000, scoped, tag = 'input window, operand 3, single buffered']
    #allocation6 [shape = 's32[1]{0}', space=sflag, size = 0x4, scoped, tag = 'scoped memory for lstm_tagger_forward.1']
    #allocation7 [shape = 'u8[16384]{0}', space=vmem, size = 0x4000, scoped, tag = 'input window, operand 7, single buffered']
    #allocation8 [shape = 's32[1]{0}', space=sflag, size = 0x4, scoped, tag = 'scoped memory for lstm_tagger_forward.1']
    %16 = vsyncpa [#allocation6], 0
    %17 = vsyncpa [#allocation8], 0
    // Predicated region
    $region2: #{lstm_tagger_forward.1} parent=1 // pred_check
      _
    $region3: #{lstm_tagger_forward.1} parent=1 // pred_check_branch
      %19 = sbr.rel (0) target = $region5
    $region4: #{lstm_tagger_forward.1} parent=1 // pred_region
      _
    $region5: #{lstm_tagger_forward.1} parent=1 // pred_fallthru
      _
    // Predicated region
    $region6: #{lstm_tagger_forward.1} parent=1 // pred_check
      _
    $region7: #{lstm_tagger_forward.1} parent=1 // pred_check_branch
      %21 = sbr.rel (0) target = $region9
    $region8: #{lstm_tagger_forward.1} parent=1 // pred_region
      _
    $region9: #{lstm_tagger_forward.1} parent=1 // pred_fallthru
      _
    // Predicated region
    $region10: #{lstm_tagger_forward.1} parent=1 // pred_check
      _
    $region11: #{lstm_tagger_forward.1} parent=1 // pred_check_branch
      %23 = sbr.rel (0) target = $region13
    $region12: #{lstm_tagger_forward.1} parent=1 // pred_region
      _
    $region13: #{lstm_tagger_forward.1} parent=1 // pred_fallthru
      _
    // Predicated region
    $region14: #{lstm_tagger_forward.1} parent=1 // pred_check
      _
    $region15: #{lstm_tagger_forward.1} parent=1 // pred_check_branch
      %25 = sbr.rel (0) target = $region17
    $region16: #{lstm_tagger_forward.1} parent=1 // pred_region
      %27 = vsyncadd [#allocation6], 0
      %s28 = sshll.u32 %s3, 4
      %s29 = int_to_ptr.hbm [resolvable:$true] %s28
      %s30 = sshll.u32 [#allocation5], 4
      %s31 = int_to_ptr.vmem [resolvable:$true] %s30
      %36 = dma.hbm_to_vmem [thread:$0]  %s29, 1024, %s31, [#allocation6], 64, 64, 4
    $region17: #{lstm_tagger_forward.1} parent=1 // pred_fallthru
      _
    // Predicated region
    $region18: #{lstm_tagger_forward.1} parent=1 // pred_check
      _
    $region19: #{lstm_tagger_forward.1} parent=1 // pred_check_branch
      %38 = sbr.rel (0) target = $region21
    $region20: #{lstm_tagger_forward.1} parent=1 // pred_region
      _
    $region21: #{lstm_tagger_forward.1} parent=1 // pred_fallthru
      _
    // Predicated region
    $region22: #{lstm_tagger_forward.1} parent=1 // pred_check
      _
    $region23: #{lstm_tagger_forward.1} parent=1 // pred_check_branch
      %40 = sbr.rel (0) target = $region25
    $region24: #{lstm_tagger_forward.1} parent=1 // pred_region
      _
    $region25: #{lstm_tagger_forward.1} parent=1 // pred_fallthru
      _
    // Predicated region
    $region26: #{lstm_tagger_forward.1} parent=1 // pred_check
      _
    $region27: #{lstm_tagger_forward.1} parent=1 // pred_check_branch
      %42 = sbr.rel (0) target = $region29
    $region28: #{lstm_tagger_forward.1} parent=1 // pred_region
      _
    $region29: #{lstm_tagger_forward.1} parent=1 // pred_fallthru
      _
    // Predicated region
    $region30: #{lstm_tagger_forward.1} parent=1 // pred_check
      _
    $region31: #{lstm_tagger_forward.1} parent=1 // pred_check_branch
      %44 = sbr.rel (0) target = $region33
    $region32: #{lstm_tagger_forward.1} parent=1 // pred_region
      %46 = vsyncadd [#allocation8], 0
      %s47 = sshll.u32 %s7, 4
      %s48 = int_to_ptr.hbm [resolvable:$true] %s47
      %s49 = sshll.u32 [#allocation7], 4
      %s50 = int_to_ptr.vmem [resolvable:$true] %s49
      %55 = dma.hbm_to_vmem [thread:$0]  %s48, 512, %s50, [#allocation8], 128, 128, 8
    $region33: #{lstm_tagger_forward.1} parent=1 // pred_fallthru
      _
    // Predicated region
    $region34: #{lstm_tagger_forward.1} parent=1 // pred_check
      _
    $region35: #{lstm_tagger_forward.1} parent=1 // pred_check_branch
      %57 = sbr.rel (0) target = $region37
    $region36: #{lstm_tagger_forward.1} parent=1 // pred_region
      _
    $region37: #{lstm_tagger_forward.1} parent=1 // pred_fallthru
      _
    // Predicated region
    $region38: #{lstm_tagger_forward.1} parent=1 // pred_check
      _
    $region39: #{lstm_tagger_forward.1} parent=1 // pred_check_branch
      %59 = sbr.rel (0) target = $region41
    $region40: #{lstm_tagger_forward.1} parent=1 // pred_region
      _
    $region41: #{lstm_tagger_forward.1} parent=1 // pred_fallthru
      _
    // Predicated region
    $region42: #{lstm_tagger_forward.1} parent=1 // pred_check
      _
    $region43: #{lstm_tagger_forward.1} parent=1 // pred_check_branch
      %61 = sbr.rel (0) target = $region45
    $region44: #{lstm_tagger_forward.1} parent=1 // pred_region
      _
    $region45: #{lstm_tagger_forward.1} parent=1 // pred_fallthru
      _
    // Predicated region
    $region46: #{lstm_tagger_forward.1} parent=1 // pred_check
      _
    $region47: #{lstm_tagger_forward.1} parent=1 // pred_check_branch
      %63 = sbr.rel (0) target = $region49
    $region48: #{lstm_tagger_forward.1} parent=1 // pred_region
      %65 = dma.done [#allocation6], 1024
    $region49: #{lstm_tagger_forward.1} parent=1 // pred_fallthru
      _
    // Predicated region
    $region50: #{lstm_tagger_forward.1} parent=1 // pred_check
      _
    $region51: #{lstm_tagger_forward.1} parent=1 // pred_check_branch
      %67 = sbr.rel (0) target = $region53
    $region52: #{lstm_tagger_forward.1} parent=1 // pred_region
      %69 = dma.done [#allocation8], 512
    $region53: #{lstm_tagger_forward.1} parent=1 // pred_fallthru
      _
    %v71 = vld [vmem:[%s1] sm:$0xf]
    %v72 = vld [vmem:[%s1 + $0x4] sm:$0xf]
    %v73 = vld [vmem:[%s1 + $0x8] sm:$0xf]
    %v74 = vld [vmem:[%s1 + $0xc] sm:$0xf]
    %v75 = vld [vmem:[%s2] sm:$0xf]
    %v76 = vld [vmem:[%s2 + $0x4] sm:$0xf]
    %v77 = vld [vmem:[%s2 + $0x8] sm:$0xf]
    %v78 = vld [vmem:[%s2 + $0xc] sm:$0xf]
    %v79 = vld [vmem:[#allocation5] sm:$0xf]
    %v80 = vld [vmem:[#allocation5 + $0x4] sm:$0xf]
    %v81 = vld [vmem:[#allocation5 + $0x8] sm:$0xf]
    %v82 = vld [vmem:[#allocation5 + $0xc] sm:$0xf]
    %v83 = vld [vmem:[%s4] sm:$0x1]
    %v84 = vld [vmem:[%s0] sm:$0xff]
    %v85 = vld [vmem:[%s0 + $0x8] sm:$0xff]
    %v86 = vld [vmem:[%s0 + $0x10] sm:$0xff]
    %v87 = vld [vmem:[%s0 + $0x18] sm:$0xff]
    %v88 = vld [vmem:[%s0 + $0x20] sm:$0xff]
    %v89 = vld [vmem:[%s0 + $0x28] sm:$0xff]
    %v90 = vld [vmem:[%s0 + $0x30] sm:$0xff]
    %v91 = vld [vmem:[%s0 + $0x38] sm:$0xff]
    %v92 = vpack.c.bf16 %v85, %v84
    %v93 = vpack.c.bf16 %v87, %v86
    %v94 = vpack.c.bf16 %v89, %v88
    %v95 = vpack.c.bf16 %v91, %v90
    %v97 = vperm.slane %v83, 0
    %v103 = vunpack.c.l.b16 %v71
    %v104 = vunpack.c.l.b16 %v72
    %v105 = vunpack.c.l.b16 %v73
    %v106 = vunpack.c.l.b16 %v74
    %v107 = vpack.c.b16 %v104, %v103
    %v108 = vpack.c.b16 %v106, %v105
    %vm111 = vcmask 261120
    %v113 = vsel %vm111, %v92, 0
    %v116 = vsel %vm111, %v93, 0
    %v119 = vsel %vm111, %v94, 0
    %v122 = vsel %vm111, %v95, 0
    %124 = vmatpush.bf16.msra.mxu0 0
    %125 = vmatpush.bf16.msra.mxu0 0
    %126 = vmatpush.bf16.msra.mxu0 0
    %127 = vmatpush.bf16.msra.mxu0 0
    %128 = vmatpush.bf16.msra.mxu0 0
    %129 = vmatpush.bf16.msra.mxu0 0
    %130 = vmatpush.bf16.msra.mxu0 %v108
    %131 = vmatpush.bf16.msra.mxu0 %v107
    %132 = vmatmul.bf16.gmra.mxu0 %v113
    %v133 = vpop.f32.mrf.mxu0
    %v134 = vadd.f32 %v97, %v133
    %v135 = vpop.f32.mrf.mxu0
    %v136 = vadd.f32 %v97, %v135
    %137 = vmatmul.bf16.gmra.mxu0 %v116
    %v138 = vpop.f32.mrf.mxu0
    %v139 = vadd.f32 %v97, %v138
    %v140 = vpop.f32.mrf.mxu0
    %v141 = vadd.f32 %v97, %v140
    %142 = vmatmul.bf16.gmra.mxu0 %v119
    %v143 = vpop.f32.mrf.mxu0
    %v144 = vadd.f32 %v97, %v143
    %v145 = vpop.f32.mrf.mxu0
    %v146 = vadd.f32 %v97, %v145
    %147 = vmatmul.bf16.gmra.mxu0 %v122
    %v148 = vpop.f32.mrf.mxu0
    %v149 = vadd.f32 %v97, %v148
    %v150 = vpop.f32.mrf.mxu0
    %v151 = vadd.f32 %v97, %v150
    %152 = vdwg.mxu0
    %v157 = vunpack.c.l.b16 %v75
    %v158 = vunpack.c.l.b16 %v76
    %v159 = vunpack.c.l.b16 %v77
    %v160 = vunpack.c.l.b16 %v78
    %v161 = vpack.c.b16 %v158, %v157
    %v162 = vpack.c.b16 %v160, %v159
    %165 = vmatpush.bf16.msra.mxu0 0
    %166 = vmatpush.bf16.msra.mxu0 0
    %167 = vmatpush.bf16.msra.mxu0 0
    %168 = vmatpush.bf16.msra.mxu0 0
    %169 = vmatpush.bf16.msra.mxu0 0
    %170 = vmatpush.bf16.msra.mxu0 0
    %171 = vmatpush.bf16.msra.mxu0 %v162
    %172 = vmatpush.bf16.msra.mxu0 %v161
    %173 = vmatmul.bf16.gmra.mxu0 %v113
    %v174 = vpop.f32.mrf.mxu0
    %v175 = vadd.f32 0.0, %v174
    %v176 = vpop.f32.mrf.mxu0
    %v177 = vadd.f32 0.0, %v176
    %178 = vmatmul.bf16.gmra.mxu0 %v116
    %v179 = vpop.f32.mrf.mxu0
    %v180 = vadd.f32 0.0, %v179
    %v181 = vpop.f32.mrf.mxu0
    %v182 = vadd.f32 0.0, %v181
    %183 = vmatmul.bf16.gmra.mxu0 %v119
    %v184 = vpop.f32.mrf.mxu0
    %v185 = vadd.f32 0.0, %v184
    %v186 = vpop.f32.mrf.mxu0
    %v187 = vadd.f32 0.0, %v186
    %188 = vmatmul.bf16.gmra.mxu0 %v122
    %v189 = vpop.f32.mrf.mxu0
    %v190 = vadd.f32 0.0, %v189
    %v191 = vpop.f32.mrf.mxu0
    %v192 = vadd.f32 0.0, %v191
    %193 = vdwg.mxu0
    %v194 = vadd.f32 %v134, %v192
    %195 = vst [vmem:[#allocation3] sm:$0xff] %v194
    %v196 = vadd.f32 %v136, %v190
    %197 = vst [vmem:[#allocation3 + $0x8] sm:$0xff] %v196
    %v198 = vadd.f32 %v139, %v187
    %199 = vst [vmem:[#allocation3 + $0x10] sm:$0xff] %v198
    %v200 = vadd.f32 %v141, %v185
    %201 = vst [vmem:[#allocation3 + $0x18] sm:$0xff] %v200
    %v202 = vadd.f32 %v144, %v182
    %203 = vst [vmem:[#allocation3 + $0x20] sm:$0xff] %v202
    %v204 = vadd.f32 %v146, %v180
    %205 = vst [vmem:[#allocation3 + $0x28] sm:$0xff] %v204
    %v206 = vadd.f32 %v149, %v177
    %207 = vst [vmem:[#allocation3 + $0x30] sm:$0xff] %v206
    %v208 = vadd.f32 %v151, %v175
    %209 = vst [vmem:[#allocation3 + $0x38] sm:$0xff] %v208
    %v210 = vld [vmem:[#allocation3] sm:$0xff]
    %v215 = vunpack.c.l.b16 %v79
    %v216 = vunpack.c.l.b16 %v80
    %v217 = vunpack.c.l.b16 %v81
    %v218 = vunpack.c.l.b16 %v82
    %v219 = vpack.c.b16 %v216, %v215
    %v220 = vpack.c.b16 %v218, %v217
    %v224 = vsel %vm111, 0, 0
    %226 = vmatpush.bf16.msra.mxu0 0
    %227 = vmatpush.bf16.msra.mxu0 0
    %228 = vmatpush.bf16.msra.mxu0 0
    %229 = vmatpush.bf16.msra.mxu0 0
    %230 = vmatpush.bf16.msra.mxu0 0
    %231 = vmatpush.bf16.msra.mxu0 0
    %232 = vmatpush.bf16.msra.mxu0 %v220
    %233 = vmatpush.bf16.msra.mxu0 %v219
    %234 = vmatmul.bf16.gmra.mxu0 %v224
    %v235 = vpop.f32.mrf.mxu0
    %v236 = vadd.f32 0.0, %v235
    %v237 = vpop.f32.mrf.mxu0
    %238 = vdwg.mxu0
    %v239 = vadd.f32 %v210, %v236
    %v240 = vxor.u32 %v239, 2147483648
    %v241 = vmul.f32 %v240, 1.442695
    %v242 = vpow.pop %v241
    %v243 = vadd.f32 %v242, 1.0
    %v244 = vrcp.pop %v243
    %v245 = vmul.f32 %v243, %v244
    %v246 = vsub.f32 1.0, %v245
    %v247 = vmul.f32 %v244, %v246
    %v248 = vadd.f32 %v244, %v247
    %vm249 = vweird.f32 %v243
    %vm250 = vweird.f32 %v244
    %vm251 = vmor %vm249, %vm250
    %v252 = vsel %vm251, %v244, %v248
    %v253 = vand.u32 2147483647, %v243
    %vm254 = vcmp.eq.f32.partialorder %v253, 8.507059e+37
    %v255 = vand.u32 %v243, 2147483648
    %v256 = vor.u32 1.1754944e-38, %v255
    %v257 = vsel %vm254, %v256, %v252
    %v258 = vmul.f32 1.0, %v257
    %v259 = vtanh.pop %v239
    %v260 = vmul.f32 %v258, 0.0
    %262 = vrot.lane.b32.xlu0 %v259, 64
    %v263 = vpop.permute.xlu0 %262
    %v265 = vmul.f32 %v258, %v263
    %267 = vrot.lane.b32.xlu0 %v265, 32
    %v268 = vpop.permute.xlu0 %267
    %v270 = vadd.f32 %v260, %v268
    %v271 = vtanh.pop %v270
    %273 = vrot.lane.b32.xlu0 %v271, 64
    %v274 = vpop.permute.xlu0 %273
    %v276 = vmul.f32 %v258, %v274
    %278 = vrot.lane.b32.xlu0 %v276, 32
    %v279 = vpop.permute.xlu0 %278
    %281 = vst.msk [vmem:[#allocation2] sm:$0xff] %vm111, %v279
    %v282 = vld [vmem:[#allocation3 + $0x8] sm:$0xff]
    %v283 = vpack.c.bf16 %v276, %v276
    %285 = vrot.lane.b32.xlu0 %v283, 32
    %v286 = vpop.permute.xlu0 %285
    %v288 = vsel %vm111, %v286, 0
    %290 = vmatpush.bf16.msra.mxu0 0
    %291 = vmatpush.bf16.msra.mxu0 0
    %292 = vmatpush.bf16.msra.mxu0 0
    %293 = vmatpush.bf16.msra.mxu0 0
    %294 = vmatpush.bf16.msra.mxu0 0
    %295 = vmatpush.bf16.msra.mxu0 0
    %296 = vmatpush.bf16.msra.mxu0 %v220
    %297 = vmatpush.bf16.msra.mxu0 %v219
    %298 = vmatmul.bf16.gmra.mxu0 %v288
    %v299 = vpop.f32.mrf.mxu0
    %v300 = vadd.f32 0.0, %v299
    %v301 = vpop.f32.mrf.mxu0
    %302 = vdwg.mxu0
    %v303 = vadd.f32 %v282, %v300
    %v304 = vxor.u32 %v303, 2147483648
    %v305 = vmul.f32 %v304, 1.442695
    %v306 = vpow.pop %v305
    %v307 = vadd.f32 %v306, 1.0
    %v308 = vrcp.pop %v307
    %v309 = vmul.f32 %v307, %v308
    %v310 = vsub.f32 1.0, %v309
    %v311 = vmul.f32 %v308, %v310
    %v312 = vadd.f32 %v308, %v311
    %vm313 = vweird.f32 %v307
    %vm314 = vweird.f32 %v308
    %vm315 = vmor %vm313, %vm314
    %v316 = vsel %vm315, %v308, %v312
    %v317 = vand.u32 2147483647, %v307
    %vm318 = vcmp.eq.f32.partialorder %v317, 8.507059e+37
    %v319 = vand.u32 %v307, 2147483648
    %v320 = vor.u32 1.1754944e-38, %v319
    %v321 = vsel %vm318, %v320, %v316
    %v322 = vmul.f32 1.0, %v321
    %v323 = vtanh.pop %v303
    %v324 = vmul.f32 %v322, %v270
    %326 = vrot.lane.b32.xlu0 %v323, 64
    %v327 = vpop.permute.xlu0 %326
    %v329 = vmul.f32 %v322, %v327
    %331 = vrot.lane.b32.xlu0 %v329, 32
    %v332 = vpop.permute.xlu0 %331
    %v334 = vadd.f32 %v324, %v332
    %v335 = vtanh.pop %v334
    %337 = vrot.lane.b32.xlu0 %v335, 64
    %v338 = vpop.permute.xlu0 %337
    %v340 = vmul.f32 %v322, %v338
    %342 = vrot.lane.b32.xlu0 %v340, 32
    %v343 = vpop.permute.xlu0 %342
    %345 = vst.msk [vmem:[#allocation2 + $0x8] sm:$0xff] %vm111, %v343
    %v346 = vld [vmem:[#allocation3 + $0x10] sm:$0xff]
    %v347 = vpack.c.bf16 %v340, %v340
    %349 = vrot.lane.b32.xlu0 %v347, 32
    %v350 = vpop.permute.xlu0 %349
    %v352 = vsel %vm111, %v350, 0
    %354 = vmatpush.bf16.msra.mxu0 0
    %355 = vmatpush.bf16.msra.mxu0 0
    %356 = vmatpush.bf16.msra.mxu0 0
    %357 = vmatpush.bf16.msra.mxu0 0
    %358 = vmatpush.bf16.msra.mxu0 0
    %359 = vmatpush.bf16.msra.mxu0 0
    %360 = vmatpush.bf16.msra.mxu0 %v220
    %361 = vmatpush.bf16.msra.mxu0 %v219
    %362 = vmatmul.bf16.gmra.mxu0 %v352
    %v363 = vpop.f32.mrf.mxu0
    %v364 = vadd.f32 0.0, %v363
    %v365 = vpop.f32.mrf.mxu0
    %366 = vdwg.mxu0
    %v367 = vadd.f32 %v346, %v364
    %v368 = vxor.u32 %v367, 2147483648
    %v369 = vmul.f32 %v368, 1.442695
    %v370 = vpow.pop %v369
    %v371 = vadd.f32 %v370, 1.0
    %v372 = vrcp.pop %v371
    %v373 = vmul.f32 %v371, %v372
    %v374 = vsub.f32 1.0, %v373
    %v375 = vmul.f32 %v372, %v374
    %v376 = vadd.f32 %v372, %v375
    %vm377 = vweird.f32 %v371
    %vm378 = vweird.f32 %v372
    %vm379 = vmor %vm377, %vm378
    %v380 = vsel %vm379, %v372, %v376
    %v381 = vand.u32 2147483647, %v371
    %vm382 = vcmp.eq.f32.partialorder %v381, 8.507059e+37
    %v383 = vand.u32 %v371, 2147483648
    %v384 = vor.u32 1.1754944e-38, %v383
    %v385 = vsel %vm382, %v384, %v380
    %v386 = vmul.f32 1.0, %v385
    %v387 = vtanh.pop %v367
    %v388 = vmul.f32 %v386, %v334
    %390 = vrot.lane.b32.xlu0 %v387, 64
    %v391 = vpop.permute.xlu0 %390
    %v393 = vmul.f32 %v386, %v391
    %395 = vrot.lane.b32.xlu0 %v393, 32
    %v396 = vpop.permute.xlu0 %395
    %v398 = vadd.f32 %v388, %v396
    %v399 = vtanh.pop %v398
    %401 = vrot.lane.b32.xlu0 %v399, 64
    %v402 = vpop.permute.xlu0 %401
    %v404 = vmul.f32 %v386, %v402
    %406 = vrot.lane.b32.xlu0 %v404, 32
    %v407 = vpop.permute.xlu0 %406
    %409 = vst.msk [vmem:[#allocation2 + $0x10] sm:$0xff] %vm111, %v407
    %v410 = vld [vmem:[#allocation3 + $0x18] sm:$0xff]
    %v411 = vpack.c.bf16 %v404, %v404
    %413 = vrot.lane.b32.xlu0 %v411, 32
    %v414 = vpop.permute.xlu0 %413
    %v416 = vsel %vm111, %v414, 0
    %418 = vmatpush.bf16.msra.mxu0 0
    %419 = vmatpush.bf16.msra.mxu0 0
    %420 = vmatpush.bf16.msra.mxu0 0
    %421 = vmatpush.bf16.msra.mxu0 0
    %422 = vmatpush.bf16.msra.mxu0 0
    %423 = vmatpush.bf16.msra.mxu0 0
    %424 = vmatpush.bf16.msra.mxu0 %v220
    %425 = vmatpush.bf16.msra.mxu0 %v219
    %426 = vmatmul.bf16.gmra.mxu0 %v416
    %v427 = vpop.f32.mrf.mxu0
    %v428 = vadd.f32 0.0, %v427
    %v429 = vpop.f32.mrf.mxu0
    %430 = vdwg.mxu0
    %v431 = vadd.f32 %v410, %v428
    %v432 = vxor.u32 %v431, 2147483648
    %v433 = vmul.f32 %v432, 1.442695
    %v434 = vpow.pop %v433
    %v435 = vadd.f32 %v434, 1.0
    %v436 = vrcp.pop %v435
    %v437 = vmul.f32 %v435, %v436
    %v438 = vsub.f32 1.0, %v437
    %v439 = vmul.f32 %v436, %v438
    %v440 = vadd.f32 %v436, %v439
    %vm441 = vweird.f32 %v435
    %vm442 = vweird.f32 %v436
    %vm443 = vmor %vm441, %vm442
    %v444 = vsel %vm443, %v436, %v440
    %v445 = vand.u32 2147483647, %v435
    %vm446 = vcmp.eq.f32.partialorder %v445, 8.507059e+37
    %v447 = vand.u32 %v435, 2147483648
    %v448 = vor.u32 1.1754944e-38, %v447
    %v449 = vsel %vm446, %v448, %v444
    %v450 = vmul.f32 1.0, %v449
    %v451 = vtanh.pop %v431
    %v452 = vmul.f32 %v450, %v398
    %454 = vrot.lane.b32.xlu0 %v451, 64
    %v455 = vpop.permute.xlu0 %454
    %v457 = vmul.f32 %v450, %v455
    %459 = vrot.lane.b32.xlu0 %v457, 32
    %v460 = vpop.permute.xlu0 %459
    %v462 = vadd.f32 %v452, %v460
    %v463 = vtanh.pop %v462
    %465 = vrot.lane.b32.xlu0 %v463, 64
    %v466 = vpop.permute.xlu0 %465
    %v468 = vmul.f32 %v450, %v466
    %470 = vrot.lane.b32.xlu0 %v468, 32
    %v471 = vpop.permute.xlu0 %470
    %473 = vst.msk [vmem:[#allocation2 + $0x18] sm:$0xff] %vm111, %v471
    %v474 = vld [vmem:[#allocation3 + $0x20] sm:$0xff]
    %v475 = vpack.c.bf16 %v468, %v468
    %477 = vrot.lane.b32.xlu0 %v475, 32
    %v478 = vpop.permute.xlu0 %477
    %v480 = vsel %vm111, %v478, 0
    %482 = vmatpush.bf16.msra.mxu0 0
    %483 = vmatpush.bf16.msra.mxu0 0
    %484 = vmatpush.bf16.msra.mxu0 0
    %485 = vmatpush.bf16.msra.mxu0 0
    %486 = vmatpush.bf16.msra.mxu0 0
    %487 = vmatpush.bf16.msra.mxu0 0
    %488 = vmatpush.bf16.msra.mxu0 %v220
    %489 = vmatpush.bf16.msra.mxu0 %v219
    %490 = vmatmul.bf16.gmra.mxu0 %v480
    %v491 = vpop.f32.mrf.mxu0
    %v492 = vadd.f32 0.0, %v491
    %v493 = vpop.f32.mrf.mxu0
    %494 = vdwg.mxu0
    %v495 = vadd.f32 %v474, %v492
    %v496 = vxor.u32 %v495, 2147483648
    %v497 = vmul.f32 %v496, 1.442695
    %v498 = vpow.pop %v497
    %v499 = vadd.f32 %v498, 1.0
    %v500 = vrcp.pop %v499
    %v501 = vmul.f32 %v499, %v500
    %v502 = vsub.f32 1.0, %v501
    %v503 = vmul.f32 %v500, %v502
    %v504 = vadd.f32 %v500, %v503
    %vm505 = vweird.f32 %v499
    %vm506 = vweird.f32 %v500
    %vm507 = vmor %vm505, %vm506
    %v508 = vsel %vm507, %v500, %v504
    %v509 = vand.u32 2147483647, %v499
    %vm510 = vcmp.eq.f32.partialorder %v509, 8.507059e+37
    %v511 = vand.u32 %v499, 2147483648
    %v512 = vor.u32 1.1754944e-38, %v511
    %v513 = vsel %vm510, %v512, %v508
    %v514 = vmul.f32 1.0, %v513
    %v515 = vtanh.pop %v495
    %v516 = vmul.f32 %v514, %v462
    %518 = vrot.lane.b32.xlu0 %v515, 64
    %v519 = vpop.permute.xlu0 %518
    %v521 = vmul.f32 %v514, %v519
    %523 = vrot.lane.b32.xlu0 %v521, 32
    %v524 = vpop.permute.xlu0 %523
    %v526 = vadd.f32 %v516, %v524
    %v527 = vtanh.pop %v526
    %529 = vrot.lane.b32.xlu0 %v527, 64
    %v530 = vpop.permute.xlu0 %529
    %v532 = vmul.f32 %v514, %v530
    %534 = vrot.lane.b32.xlu0 %v532, 32
    %v535 = vpop.permute.xlu0 %534
    %537 = vst.msk [vmem:[#allocation2 + $0x20] sm:$0xff] %vm111, %v535
    %v538 = vld [vmem:[#allocation3 + $0x28] sm:$0xff]
    %v539 = vpack.c.bf16 %v532, %v532
    %541 = vrot.lane.b32.xlu0 %v539, 32
    %v542 = vpop.permute.xlu0 %541
    %v544 = vsel %vm111, %v542, 0
    %546 = vmatpush.bf16.msra.mxu0 0
    %547 = vmatpush.bf16.msra.mxu0 0
    %548 = vmatpush.bf16.msra.mxu0 0
    %549 = vmatpush.bf16.msra.mxu0 0
    %550 = vmatpush.bf16.msra.mxu0 0
    %551 = vmatpush.bf16.msra.mxu0 0
    %552 = vmatpush.bf16.msra.mxu0 %v220
    %553 = vmatpush.bf16.msra.mxu0 %v219
    %554 = vmatmul.bf16.gmra.mxu0 %v544
    %v555 = vpop.f32.mrf.mxu0
    %v556 = vadd.f32 0.0, %v555
    %v557 = vpop.f32.mrf.mxu0
    %558 = vdwg.mxu0
    %v559 = vadd.f32 %v538, %v556
    %v560 = vxor.u32 %v559, 2147483648
    %v561 = vmul.f32 %v560, 1.442695
    %v562 = vpow.pop %v561
    %v563 = vadd.f32 %v562, 1.0
    %v564 = vrcp.pop %v563
    %v565 = vmul.f32 %v563, %v564
    %v566 = vsub.f32 1.0, %v565
    %v567 = vmul.f32 %v564, %v566
    %v568 = vadd.f32 %v564, %v567
    %vm569 = vweird.f32 %v563
    %vm570 = vweird.f32 %v564
    %vm571 = vmor %vm569, %vm570
    %v572 = vsel %vm571, %v564, %v568
    %v573 = vand.u32 2147483647, %v563
    %vm574 = vcmp.eq.f32.partialorder %v573, 8.507059e+37
    %v575 = vand.u32 %v563, 2147483648
    %v576 = vor.u32 1.1754944e-38, %v575
    %v577 = vsel %vm574, %v576, %v572
    %v578 = vmul.f32 1.0, %v577
    %v579 = vtanh.pop %v559
    %v580 = vmul.f32 %v578, %v526
    %582 = vrot.lane.b32.xlu0 %v579, 64
    %v583 = vpop.permute.xlu0 %582
    %v585 = vmul.f32 %v578, %v583
    %587 = vrot.lane.b32.xlu0 %v585, 32
    %v588 = vpop.permute.xlu0 %587
    %v590 = vadd.f32 %v580, %v588
    %v591 = vtanh.pop %v590
    %593 = vrot.lane.b32.xlu0 %v591, 64
    %v594 = vpop.permute.xlu0 %593
    %v596 = vmul.f32 %v578, %v594
    %598 = vrot.lane.b32.xlu0 %v596, 32
    %v599 = vpop.permute.xlu0 %598
    %601 = vst.msk [vmem:[#allocation2 + $0x28] sm:$0xff] %vm111, %v599
    %v602 = vld [vmem:[#allocation3 + $0x30] sm:$0xff]
    %v603 = vpack.c.bf16 %v596, %v596
    %605 = vrot.lane.b32.xlu0 %v603, 32
    %v606 = vpop.permute.xlu0 %605
    %v608 = vsel %vm111, %v606, 0
    %610 = vmatpush.bf16.msra.mxu0 0
    %611 = vmatpush.bf16.msra.mxu0 0
    %612 = vmatpush.bf16.msra.mxu0 0
    %613 = vmatpush.bf16.msra.mxu0 0
    %614 = vmatpush.bf16.msra.mxu0 0
    %615 = vmatpush.bf16.msra.mxu0 0
    %616 = vmatpush.bf16.msra.mxu0 %v220
    %617 = vmatpush.bf16.msra.mxu0 %v219
    %618 = vmatmul.bf16.gmra.mxu0 %v608
    %v619 = vpop.f32.mrf.mxu0
    %v620 = vadd.f32 0.0, %v619
    %v621 = vpop.f32.mrf.mxu0
    %622 = vdwg.mxu0
    %v623 = vadd.f32 %v602, %v620
    %v624 = vxor.u32 %v623, 2147483648
    %v625 = vmul.f32 %v624, 1.442695
    %v626 = vpow.pop %v625
    %v627 = vadd.f32 %v626, 1.0
    %v628 = vrcp.pop %v627
    %v629 = vmul.f32 %v627, %v628
    %v630 = vsub.f32 1.0, %v629
    %v631 = vmul.f32 %v628, %v630
    %v632 = vadd.f32 %v628, %v631
    %vm633 = vweird.f32 %v627
    %vm634 = vweird.f32 %v628
    %vm635 = vmor %vm633, %vm634
    %v636 = vsel %vm635, %v628, %v632
    %v637 = vand.u32 2147483647, %v627
    %vm638 = vcmp.eq.f32.partialorder %v637, 8.507059e+37
    %v639 = vand.u32 %v627, 2147483648
    %v640 = vor.u32 1.1754944e-38, %v639
    %v641 = vsel %vm638, %v640, %v636
    %v642 = vmul.f32 1.0, %v641
    %v643 = vtanh.pop %v623
    %v644 = vmul.f32 %v642, %v590
    %646 = vrot.lane.b32.xlu0 %v643, 64
    %v647 = vpop.permute.xlu0 %646
    %v649 = vmul.f32 %v642, %v647
    %651 = vrot.lane.b32.xlu0 %v649, 32
    %v652 = vpop.permute.xlu0 %651
    %v654 = vadd.f32 %v644, %v652
    %v655 = vtanh.pop %v654
    %657 = vrot.lane.b32.xlu0 %v655, 64
    %v658 = vpop.permute.xlu0 %657
    %v660 = vmul.f32 %v642, %v658
    %662 = vrot.lane.b32.xlu0 %v660, 32
    %v663 = vpop.permute.xlu0 %662
    %665 = vst.msk [vmem:[#allocation2 + $0x30] sm:$0xff] %vm111, %v663
    %v666 = vld [vmem:[#allocation3 + $0x38] sm:$0xff]
    %v667 = vpack.c.bf16 %v660, %v660
    %669 = vrot.lane.b32.xlu0 %v667, 32
    %v670 = vpop.permute.xlu0 %669
    %v672 = vsel %vm111, %v670, 0
    %674 = vmatpush.bf16.msra.mxu0 0
    %675 = vmatpush.bf16.msra.mxu0 0
    %676 = vmatpush.bf16.msra.mxu0 0
    %677 = vmatpush.bf16.msra.mxu0 0
    %678 = vmatpush.bf16.msra.mxu0 0
    %679 = vmatpush.bf16.msra.mxu0 0
    %680 = vmatpush.bf16.msra.mxu0 %v220
    %681 = vmatpush.bf16.msra.mxu0 %v219
    %682 = vmatmul.bf16.gmra.mxu0 %v672
    %v683 = vpop.f32.mrf.mxu0
    %v684 = vadd.f32 0.0, %v683
    %v685 = vpop.f32.mrf.mxu0
    %686 = vdwg.mxu0
    %v687 = vadd.f32 %v666, %v684
    %v688 = vxor.u32 %v687, 2147483648
    %v689 = vmul.f32 %v688, 1.442695
    %v690 = vpow.pop %v689
    %v691 = vadd.f32 %v690, 1.0
    %v692 = vrcp.pop %v691
    %v693 = vmul.f32 %v691, %v692
    %v694 = vsub.f32 1.0, %v693
    %v695 = vmul.f32 %v692, %v694
    %v696 = vadd.f32 %v692, %v695
    %vm697 = vweird.f32 %v691
    %vm698 = vweird.f32 %v692
    %vm699 = vmor %vm697, %vm698
    %v700 = vsel %vm699, %v692, %v696
    %v701 = vand.u32 2147483647, %v691
    %vm702 = vcmp.eq.f32.partialorder %v701, 8.507059e+37
    %v703 = vand.u32 %v691, 2147483648
    %v704 = vor.u32 1.1754944e-38, %v703
    %v705 = vsel %vm702, %v704, %v700
    %v706 = vmul.f32 1.0, %v705
    %v707 = vtanh.pop %v687
    %v708 = vmul.f32 %v706, %v654
    %710 = vrot.lane.b32.xlu0 %v707, 64
    %v711 = vpop.permute.xlu0 %710
    %v713 = vmul.f32 %v706, %v711
    %715 = vrot.lane.b32.xlu0 %v713, 32
    %v716 = vpop.permute.xlu0 %715
    %v718 = vadd.f32 %v708, %v716
    %v719 = vtanh.pop %v718
    %721 = vrot.lane.b32.xlu0 %v719, 64
    %v722 = vpop.permute.xlu0 %721
    %v724 = vmul.f32 %v706, %v722
    %726 = vrot.lane.b32.xlu0 %v724, 32
    %v727 = vpop.permute.xlu0 %726
    %729 = vst.msk [vmem:[#allocation2 + $0x38] sm:$0xff] %vm111, %v727
    %s730 = scalar_lea.vmem %s1, 16
    %v731 = vld [vmem:[%s730] sm:$0xf]
    %v732 = vld [vmem:[%s730 + $0x4] sm:$0xf]
    %v733 = vld [vmem:[%s730 + $0x8] sm:$0xf]
    %v734 = vld [vmem:[%s730 + $0xc] sm:$0xf]
    %s735 = scalar_lea.vmem %s2, 16
    %v736 = vld [vmem:[%s735] sm:$0xf]
    %v737 = vld [vmem:[%s735 + $0x4] sm:$0xf]
    %v738 = vld [vmem:[%s735 + $0x8] sm:$0xf]
    %v739 = vld [vmem:[%s735 + $0xc] sm:$0xf]
    %s740 = scalar_lea.vmem [#allocation5], 16
    %v741 = vld [vmem:[%s740] sm:$0xf]
    %v742 = vld [vmem:[%s740 + $0x4] sm:$0xf]
    %v743 = vld [vmem:[%s740 + $0x8] sm:$0xf]
    %v744 = vld [vmem:[%s740 + $0xc] sm:$0xf]
    %s745 = scalar_lea.vmem %s4, 1
    %v746 = vld [vmem:[%s745] sm:$0x1]
    %v747 = vld [vmem:[#allocation2] sm:$0xff]
    %v748 = vld [vmem:[#allocation2 + $0x8] sm:$0xff]
    %v749 = vld [vmem:[#allocation2 + $0x10] sm:$0xff]
    %v750 = vld [vmem:[#allocation2 + $0x18] sm:$0xff]
    %v751 = vld [vmem:[#allocation2 + $0x20] sm:$0xff]
    %v752 = vld [vmem:[#allocation2 + $0x28] sm:$0xff]
    %v753 = vld [vmem:[#allocation2 + $0x30] sm:$0xff]
    %v754 = vld [vmem:[#allocation2 + $0x38] sm:$0xff]
    %v755 = vpack.c.bf16 %v748, %v747
    %v756 = vpack.c.bf16 %v750, %v749
    %v757 = vpack.c.bf16 %v752, %v751
    %v758 = vpack.c.bf16 %v754, %v753
    %v760 = vperm.slane %v746, 0
    %v766 = vunpack.c.l.b16 %v731
    %v767 = vunpack.c.l.b16 %v732
    %v768 = vunpack.c.l.b16 %v733
    %v769 = vunpack.c.l.b16 %v734
    %v770 = vpack.c.b16 %v767, %v766
    %v771 = vpack.c.b16 %v769, %v768
    %v775 = vsel %vm111, %v755, 0
    %v778 = vsel %vm111, %v756, 0
    %v781 = vsel %vm111, %v757, 0
    %v784 = vsel %vm111, %v758, 0
    %786 = vmatpush.bf16.msra.mxu0 0
    %787 = vmatpush.bf16.msra.mxu0 0
    %788 = vmatpush.bf16.msra.mxu0 0
    %789 = vmatpush.bf16.msra.mxu0 0
    %790 = vmatpush.bf16.msra.mxu0 0
    %791 = vmatpush.bf16.msra.mxu0 0
    %792 = vmatpush.bf16.msra.mxu0 %v771
    %793 = vmatpush.bf16.msra.mxu0 %v770
    %794 = vmatmul.bf16.gmra.mxu0 %v775
    %v795 = vpop.f32.mrf.mxu0
    %v796 = vadd.f32 %v760, %v795
    %v797 = vpop.f32.mrf.mxu0
    %v798 = vadd.f32 %v760, %v797
    %799 = vmatmul.bf16.gmra.mxu0 %v778
    %v800 = vpop.f32.mrf.mxu0
    %v801 = vadd.f32 %v760, %v800
    %v802 = vpop.f32.mrf.mxu0
    %v803 = vadd.f32 %v760, %v802
    %804 = vmatmul.bf16.gmra.mxu0 %v781
    %v805 = vpop.f32.mrf.mxu0
    %v806 = vadd.f32 %v760, %v805
    %v807 = vpop.f32.mrf.mxu0
    %v808 = vadd.f32 %v760, %v807
    %809 = vmatmul.bf16.gmra.mxu0 %v784
    %v810 = vpop.f32.mrf.mxu0
    %v811 = vadd.f32 %v760, %v810
    %v812 = vpop.f32.mrf.mxu0
    %v813 = vadd.f32 %v760, %v812
    %814 = vdwg.mxu0
    %v819 = vunpack.c.l.b16 %v736
    %v820 = vunpack.c.l.b16 %v737
    %v821 = vunpack.c.l.b16 %v738
    %v822 = vunpack.c.l.b16 %v739
    %v823 = vpack.c.b16 %v820, %v819
    %v824 = vpack.c.b16 %v822, %v821
    %827 = vmatpush.bf16.msra.mxu0 0
    %828 = vmatpush.bf16.msra.mxu0 0
    %829 = vmatpush.bf16.msra.mxu0 0
    %830 = vmatpush.bf16.msra.mxu0 0
    %831 = vmatpush.bf16.msra.mxu0 0
    %832 = vmatpush.bf16.msra.mxu0 0
    %833 = vmatpush.bf16.msra.mxu0 %v824
    %834 = vmatpush.bf16.msra.mxu0 %v823
    %835 = vmatmul.bf16.gmra.mxu0 %v775
    %v836 = vpop.f32.mrf.mxu0
    %v837 = vadd.f32 0.0, %v836
    %v838 = vpop.f32.mrf.mxu0
    %v839 = vadd.f32 0.0, %v838
    %840 = vmatmul.bf16.gmra.mxu0 %v778
    %v841 = vpop.f32.mrf.mxu0
    %v842 = vadd.f32 0.0, %v841
    %v843 = vpop.f32.mrf.mxu0
    %v844 = vadd.f32 0.0, %v843
    %845 = vmatmul.bf16.gmra.mxu0 %v781
    %v846 = vpop.f32.mrf.mxu0
    %v847 = vadd.f32 0.0, %v846
    %v848 = vpop.f32.mrf.mxu0
    %v849 = vadd.f32 0.0, %v848
    %850 = vmatmul.bf16.gmra.mxu0 %v784
    %v851 = vpop.f32.mrf.mxu0
    %v852 = vadd.f32 0.0, %v851
    %v853 = vpop.f32.mrf.mxu0
    %v854 = vadd.f32 0.0, %v853
    %855 = vdwg.mxu0
    %v856 = vadd.f32 %v796, %v854
    %857 = vst [vmem:[#allocation3] sm:$0xff] %v856
    %v858 = vadd.f32 %v798, %v852
    %859 = vst [vmem:[#allocation3 + $0x8] sm:$0xff] %v858
    %v860 = vadd.f32 %v801, %v849
    %861 = vst [vmem:[#allocation3 + $0x10] sm:$0xff] %v860
    %v862 = vadd.f32 %v803, %v847
    %863 = vst [vmem:[#allocation3 + $0x18] sm:$0xff] %v862
    %v864 = vadd.f32 %v806, %v844
    %865 = vst [vmem:[#allocation3 + $0x20] sm:$0xff] %v864
    %v866 = vadd.f32 %v808, %v842
    %867 = vst [vmem:[#allocation3 + $0x28] sm:$0xff] %v866
    %v868 = vadd.f32 %v811, %v839
    %869 = vst [vmem:[#allocation3 + $0x30] sm:$0xff] %v868
    %v870 = vadd.f32 %v813, %v837
    %871 = vst [vmem:[#allocation3 + $0x38] sm:$0xff] %v870
    %v872 = vld [vmem:[#allocation3] sm:$0xff]
    %v877 = vunpack.c.l.b16 %v741
    %v878 = vunpack.c.l.b16 %v742
    %v879 = vunpack.c.l.b16 %v743
    %v880 = vunpack.c.l.b16 %v744
    %v881 = vpack.c.b16 %v878, %v877
    %v882 = vpack.c.b16 %v880, %v879
    %885 = vmatpush.bf16.msra.mxu0 0
    %886 = vmatpush.bf16.msra.mxu0 0
    %887 = vmatpush.bf16.msra.mxu0 0
    %888 = vmatpush.bf16.msra.mxu0 0
    %889 = vmatpush.bf16.msra.mxu0 0
    %890 = vmatpush.bf16.msra.mxu0 0
    %891 = vmatpush.bf16.msra.mxu0 %v882
    %892 = vmatpush.bf16.msra.mxu0 %v881
    %893 = vmatmul.bf16.gmra.mxu0 %v224
    %v894 = vpop.f32.mrf.mxu0
    %v895 = vadd.f32 0.0, %v894
    %v896 = vpop.f32.mrf.mxu0
    %897 = vdwg.mxu0
    %v898 = vadd.f32 %v872, %v895
    %v899 = vxor.u32 %v898, 2147483648
    %v900 = vmul.f32 %v899, 1.442695
    %v901 = vpow.pop %v900
    %v902 = vadd.f32 %v901, 1.0
    %v903 = vrcp.pop %v902
    %v904 = vmul.f32 %v902, %v903
    %v905 = vsub.f32 1.0, %v904
    %v906 = vmul.f32 %v903, %v905
    %v907 = vadd.f32 %v903, %v906
    %vm908 = vweird.f32 %v902
    %vm909 = vweird.f32 %v903
    %vm910 = vmor %vm908, %vm909
    %v911 = vsel %vm910, %v903, %v907
    %v912 = vand.u32 2147483647, %v902
    %vm913 = vcmp.eq.f32.partialorder %v912, 8.507059e+37
    %v914 = vand.u32 %v902, 2147483648
    %v915 = vor.u32 1.1754944e-38, %v914
    %v916 = vsel %vm913, %v915, %v911
    %v917 = vmul.f32 1.0, %v916
    %v918 = vtanh.pop %v898
    %v919 = vmul.f32 %v917, 0.0
    %921 = vrot.lane.b32.xlu0 %v918, 64
    %v922 = vpop.permute.xlu0 %921
    %v924 = vmul.f32 %v917, %v922
    %926 = vrot.lane.b32.xlu0 %v924, 32
    %v927 = vpop.permute.xlu0 %926
    %v929 = vadd.f32 %v919, %v927
    %v930 = vtanh.pop %v929
    %932 = vrot.lane.b32.xlu0 %v930, 64
    %v933 = vpop.permute.xlu0 %932
    %v935 = vmul.f32 %v917, %v933
    %937 = vrot.lane.b32.xlu0 %v935, 32
    %v938 = vpop.permute.xlu0 %937
    %940 = vst.msk [vmem:[#allocation2] sm:$0xff] %vm111, %v938
    %v941 = vld [vmem:[#allocation3 + $0x8] sm:$0xff]
    %v942 = vpack.c.bf16 %v935, %v935
    %944 = vrot.lane.b32.xlu0 %v942, 32
    %v945 = vpop.permute.xlu0 %944
    %v947 = vsel %vm111, %v945, 0
    %949 = vmatpush.bf16.msra.mxu0 0
    %950 = vmatpush.bf16.msra.mxu0 0
    %951 = vmatpush.bf16.msra.mxu0 0
    %952 = vmatpush.bf16.msra.mxu0 0
    %953 = vmatpush.bf16.msra.mxu0 0
    %954 = vmatpush.bf16.msra.mxu0 0
    %955 = vmatpush.bf16.msra.mxu0 %v882
    %956 = vmatpush.bf16.msra.mxu0 %v881
    %957 = vmatmul.bf16.gmra.mxu0 %v947
    %v958 = vpop.f32.mrf.mxu0
    %v959 = vadd.f32 0.0, %v958
    %v960 = vpop.f32.mrf.mxu0
    %961 = vdwg.mxu0
    %v962 = vadd.f32 %v941, %v959
    %v963 = vxor.u32 %v962, 2147483648
    %v964 = vmul.f32 %v963, 1.442695
    %v965 = vpow.pop %v964
    %v966 = vadd.f32 %v965, 1.0
    %v967 = vrcp.pop %v966
    %v968 = vmul.f32 %v966, %v967
    %v969 = vsub.f32 1.0, %v968
    %v970 = vmul.f32 %v967, %v969
    %v971 = vadd.f32 %v967, %v970
    %vm972 = vweird.f32 %v966
    %vm973 = vweird.f32 %v967
    %vm974 = vmor %vm972, %vm973
    %v975 = vsel %vm974, %v967, %v971
    %v976 = vand.u32 2147483647, %v966
    %vm977 = vcmp.eq.f32.partialorder %v976, 8.507059e+37
    %v978 = vand.u32 %v966, 2147483648
    %v979 = vor.u32 1.1754944e-38, %v978
    %v980 = vsel %vm977, %v979, %v975
    %v981 = vmul.f32 1.0, %v980
    %v982 = vtanh.pop %v962
    %v983 = vmul.f32 %v981, %v929
    %985 = vrot.lane.b32.xlu0 %v982, 64
    %v986 = vpop.permute.xlu0 %985
    %v988 = vmul.f32 %v981, %v986
    %990 = vrot.lane.b32.xlu0 %v988, 32
    %v991 = vpop.permute.xlu0 %990
    %v993 = vadd.f32 %v983, %v991
    %v994 = vtanh.pop %v993
    %996 = vrot.lane.b32.xlu0 %v994, 64
    %v997 = vpop.permute.xlu0 %996
    %v999 = vmul.f32 %v981, %v997
    %1001 = vrot.lane.b32.xlu0 %v999, 32
    %v1002 = vpop.permute.xlu0 %1001
    %1004 = vst.msk [vmem:[#allocation2 + $0x8] sm:$0xff] %vm111, %v1002
    %v1005 = vld [vmem:[#allocation3 + $0x10] sm:$0xff]
    %v1006 = vpack.c.bf16 %v999, %v999
    %1008 = vrot.lane.b32.xlu0 %v1006, 32
    %v1009 = vpop.permute.xlu0 %1008
    %v1011 = vsel %vm111, %v1009, 0
    %1013 = vmatpush.bf16.msra.mxu0 0
    %1014 = vmatpush.bf16.msra.mxu0 0
    %1015 = vmatpush.bf16.msra.mxu0 0
    %1016 = vmatpush.bf16.msra.mxu0 0
    %1017 = vmatpush.bf16.msra.mxu0 0
    %1018 = vmatpush.bf16.msra.mxu0 0
    %1019 = vmatpush.bf16.msra.mxu0 %v882
    %1020 = vmatpush.bf16.msra.mxu0 %v881
    %1021 = vmatmul.bf16.gmra.mxu0 %v1011
    %v1022 = vpop.f32.mrf.mxu0
    %v1023 = vadd.f32 0.0, %v1022
    %v1024 = vpop.f32.mrf.mxu0
    %1025 = vdwg.mxu0
    %v1026 = vadd.f32 %v1005, %v1023
    %v1027 = vxor.u32 %v1026, 2147483648
    %v1028 = vmul.f32 %v1027, 1.442695
    %v1029 = vpow.pop %v1028
    %v1030 = vadd.f32 %v1029, 1.0
    %v1031 = vrcp.pop %v1030
    %v1032 = vmul.f32 %v1030, %v1031
    %v1033 = vsub.f32 1.0, %v1032
    %v1034 = vmul.f32 %v1031, %v1033
    %v1035 = vadd.f32 %v1031, %v1034
    %vm1036 = vweird.f32 %v1030
    %vm1037 = vweird.f32 %v1031
    %vm1038 = vmor %vm1036, %vm1037
    %v1039 = vsel %vm1038, %v1031, %v1035
    %v1040 = vand.u32 2147483647, %v1030
    %vm1041 = vcmp.eq.f32.partialorder %v1040, 8.507059e+37
    %v1042 = vand.u32 %v1030, 2147483648
    %v1043 = vor.u32 1.1754944e-38, %v1042
    %v1044 = vsel %vm1041, %v1043, %v1039
    %v1045 = vmul.f32 1.0, %v1044
    %v1046 = vtanh.pop %v1026
    %v1047 = vmul.f32 %v1045, %v993
    %1049 = vrot.lane.b32.xlu0 %v1046, 64
    %v1050 = vpop.permute.xlu0 %1049
    %v1052 = vmul.f32 %v1045, %v1050
    %1054 = vrot.lane.b32.xlu0 %v1052, 32
    %v1055 = vpop.permute.xlu0 %1054
    %v1057 = vadd.f32 %v1047, %v1055
    %v1058 = vtanh.pop %v1057
    %1060 = vrot.lane.b32.xlu0 %v1058, 64
    %v1061 = vpop.permute.xlu0 %1060
    %v1063 = vmul.f32 %v1045, %v1061
    %1065 = vrot.lane.b32.xlu0 %v1063, 32
    %v1066 = vpop.permute.xlu0 %1065
    %1068 = vst.msk [vmem:[#allocation2 + $0x10] sm:$0xff] %vm111, %v1066
    %v1069 = vld [vmem:[#allocation3 + $0x18] sm:$0xff]
    %v1070 = vpack.c.bf16 %v1063, %v1063
    %1072 = vrot.lane.b32.xlu0 %v1070, 32
    %v1073 = vpop.permute.xlu0 %1072
    %v1075 = vsel %vm111, %v1073, 0
    %1077 = vmatpush.bf16.msra.mxu0 0
    %1078 = vmatpush.bf16.msra.mxu0 0
    %1079 = vmatpush.bf16.msra.mxu0 0
    %1080 = vmatpush.bf16.msra.mxu0 0
    %1081 = vmatpush.bf16.msra.mxu0 0
    %1082 = vmatpush.bf16.msra.mxu0 0
    %1083 = vmatpush.bf16.msra.mxu0 %v882
    %1084 = vmatpush.bf16.msra.mxu0 %v881
    %1085 = vmatmul.bf16.gmra.mxu0 %v1075
    %v1086 = vpop.f32.mrf.mxu0
    %v1087 = vadd.f32 0.0, %v1086
    %v1088 = vpop.f32.mrf.mxu0
    %1089 = vdwg.mxu0
    %v1090 = vadd.f32 %v1069, %v1087
    %v1091 = vxor.u32 %v1090, 2147483648
    %v1092 = vmul.f32 %v1091, 1.442695
    %v1093 = vpow.pop %v1092
    %v1094 = vadd.f32 %v1093, 1.0
    %v1095 = vrcp.pop %v1094
    %v1096 = vmul.f32 %v1094, %v1095
    %v1097 = vsub.f32 1.0, %v1096
    %v1098 = vmul.f32 %v1095, %v1097
    %v1099 = vadd.f32 %v1095, %v1098
    %vm1100 = vweird.f32 %v1094
    %vm1101 = vweird.f32 %v1095
    %vm1102 = vmor %vm1100, %vm1101
    %v1103 = vsel %vm1102, %v1095, %v1099
    %v1104 = vand.u32 2147483647, %v1094
    %vm1105 = vcmp.eq.f32.partialorder %v1104, 8.507059e+37
    %v1106 = vand.u32 %v1094, 2147483648
    %v1107 = vor.u32 1.1754944e-38, %v1106
    %v1108 = vsel %vm1105, %v1107, %v1103
    %v1109 = vmul.f32 1.0, %v1108
    %v1110 = vtanh.pop %v1090
    %v1111 = vmul.f32 %v1109, %v1057
    %1113 = vrot.lane.b32.xlu0 %v1110, 64
    %v1114 = vpop.permute.xlu0 %1113
    %v1116 = vmul.f32 %v1109, %v1114
    %1118 = vrot.lane.b32.xlu0 %v1116, 32
    %v1119 = vpop.permute.xlu0 %1118
    %v1121 = vadd.f32 %v1111, %v1119
    %v1122 = vtanh.pop %v1121
    %1124 = vrot.lane.b32.xlu0 %v1122, 64
    %v1125 = vpop.permute.xlu0 %1124
    %v1127 = vmul.f32 %v1109, %v1125
    %1129 = vrot.lane.b32.xlu0 %v1127, 32
    %v1130 = vpop.permute.xlu0 %1129
    %1132 = vst.msk [vmem:[#allocation2 + $0x18] sm:$0xff] %vm111, %v1130
    %v1133 = vld [vmem:[#allocation3 + $0x20] sm:$0xff]
    %v1134 = vpack.c.bf16 %v1127, %v1127
    %1136 = vrot.lane.b32.xlu0 %v1134, 32
    %v1137 = vpop.permute.xlu0 %1136
    %v1139 = vsel %vm111, %v1137, 0
    %1141 = vmatpush.bf16.msra.mxu0 0
    %1142 = vmatpush.bf16.msra.mxu0 0
    %1143 = vmatpush.bf16.msra.mxu0 0
    %1144 = vmatpush.bf16.msra.mxu0 0
    %1145 = vmatpush.bf16.msra.mxu0 0
    %1146 = vmatpush.bf16.msra.mxu0 0
    %1147 = vmatpush.bf16.msra.mxu0 %v882
    %1148 = vmatpush.bf16.msra.mxu0 %v881
    %1149 = vmatmul.bf16.gmra.mxu0 %v1139
    %v1150 = vpop.f32.mrf.mxu0
    %v1151 = vadd.f32 0.0, %v1150
    %v1152 = vpop.f32.mrf.mxu0
    %1153 = vdwg.mxu0
    %v1154 = vadd.f32 %v1133, %v1151
    %v1155 = vxor.u32 %v1154, 2147483648
    %v1156 = vmul.f32 %v1155, 1.442695
    %v1157 = vpow.pop %v1156
    %v1158 = vadd.f32 %v1157, 1.0
    %v1159 = vrcp.pop %v1158
    %v1160 = vmul.f32 %v1158, %v1159
    %v1161 = vsub.f32 1.0, %v1160
    %v1162 = vmul.f32 %v1159, %v1161
    %v1163 = vadd.f32 %v1159, %v1162
    %vm1164 = vweird.f32 %v1158
    %vm1165 = vweird.f32 %v1159
    %vm1166 = vmor %vm1164, %vm1165
    %v1167 = vsel %vm1166, %v1159, %v1163
    %v1168 = vand.u32 2147483647, %v1158
    %vm1169 = vcmp.eq.f32.partialorder %v1168, 8.507059e+37
    %v1170 = vand.u32 %v1158, 2147483648
    %v1171 = vor.u32 1.1754944e-38, %v1170
    %v1172 = vsel %vm1169, %v1171, %v1167
    %v1173 = vmul.f32 1.0, %v1172
    %v1174 = vtanh.pop %v1154
    %v1175 = vmul.f32 %v1173, %v1121
    %1177 = vrot.lane.b32.xlu0 %v1174, 64
    %v1178 = vpop.permute.xlu0 %1177
    %v1180 = vmul.f32 %v1173, %v1178
    %1182 = vrot.lane.b32.xlu0 %v1180, 32
    %v1183 = vpop.permute.xlu0 %1182
    %v1185 = vadd.f32 %v1175, %v1183
    %v1186 = vtanh.pop %v1185
    %1188 = vrot.lane.b32.xlu0 %v1186, 64
    %v1189 = vpop.permute.xlu0 %1188
    %v1191 = vmul.f32 %v1173, %v1189
    %1193 = vrot.lane.b32.xlu0 %v1191, 32
    %v1194 = vpop.permute.xlu0 %1193
    %1196 = vst.msk [vmem:[#allocation2 + $0x20] sm:$0xff] %vm111, %v1194
    %v1197 = vld [vmem:[#allocation3 + $0x28] sm:$0xff]
    %v1198 = vpack.c.bf16 %v1191, %v1191
    %1200 = vrot.lane.b32.xlu0 %v1198, 32
    %v1201 = vpop.permute.xlu0 %1200
    %v1203 = vsel %vm111, %v1201, 0
    %1205 = vmatpush.bf16.msra.mxu0 0
    %1206 = vmatpush.bf16.msra.mxu0 0
    %1207 = vmatpush.bf16.msra.mxu0 0
    %1208 = vmatpush.bf16.msra.mxu0 0
    %1209 = vmatpush.bf16.msra.mxu0 0
    %1210 = vmatpush.bf16.msra.mxu0 0
    %1211 = vmatpush.bf16.msra.mxu0 %v882
    %1212 = vmatpush.bf16.msra.mxu0 %v881
    %1213 = vmatmul.bf16.gmra.mxu0 %v1203
    %v1214 = vpop.f32.mrf.mxu0
    %v1215 = vadd.f32 0.0, %v1214
    %v1216 = vpop.f32.mrf.mxu0
    %1217 = vdwg.mxu0
    %v1218 = vadd.f32 %v1197, %v1215
    %v1219 = vxor.u32 %v1218, 2147483648
    %v1220 = vmul.f32 %v1219, 1.442695
    %v1221 = vpow.pop %v1220
    %v1222 = vadd.f32 %v1221, 1.0
    %v1223 = vrcp.pop %v1222
    %v1224 = vmul.f32 %v1222, %v1223
    %v1225 = vsub.f32 1.0, %v1224
    %v1226 = vmul.f32 %v1223, %v1225
    %v1227 = vadd.f32 %v1223, %v1226
    %vm1228 = vweird.f32 %v1222
    %vm1229 = vweird.f32 %v1223
    %vm1230 = vmor %vm1228, %vm1229
    %v1231 = vsel %vm1230, %v1223, %v1227
    %v1232 = vand.u32 2147483647, %v1222
    %vm1233 = vcmp.eq.f32.partialorder %v1232, 8.507059e+37
    %v1234 = vand.u32 %v1222, 2147483648
    %v1235 = vor.u32 1.1754944e-38, %v1234
    %v1236 = vsel %vm1233, %v1235, %v1231
    %v1237 = vmul.f32 1.0, %v1236
    %v1238 = vtanh.pop %v1218
    %v1239 = vmul.f32 %v1237, %v1185
    %1241 = vrot.lane.b32.xlu0 %v1238, 64
    %v1242 = vpop.permute.xlu0 %1241
    %v1244 = vmul.f32 %v1237, %v1242
    %1246 = vrot.lane.b32.xlu0 %v1244, 32
    %v1247 = vpop.permute.xlu0 %1246
    %v1249 = vadd.f32 %v1239, %v1247
    %v1250 = vtanh.pop %v1249
    %1252 = vrot.lane.b32.xlu0 %v1250, 64
    %v1253 = vpop.permute.xlu0 %1252
    %v1255 = vmul.f32 %v1237, %v1253
    %1257 = vrot.lane.b32.xlu0 %v1255, 32
    %v1258 = vpop.permute.xlu0 %1257
    %1260 = vst.msk [vmem:[#allocation2 + $0x28] sm:$0xff] %vm111, %v1258
    %v1261 = vld [vmem:[#allocation3 + $0x30] sm:$0xff]
    %v1262 = vpack.c.bf16 %v1255, %v1255
    %1264 = vrot.lane.b32.xlu0 %v1262, 32
    %v1265 = vpop.permute.xlu0 %1264
    %v1267 = vsel %vm111, %v1265, 0
    %1269 = vmatpush.bf16.msra.mxu0 0
    %1270 = vmatpush.bf16.msra.mxu0 0
    %1271 = vmatpush.bf16.msra.mxu0 0
    %1272 = vmatpush.bf16.msra.mxu0 0
    %1273 = vmatpush.bf16.msra.mxu0 0
    %1274 = vmatpush.bf16.msra.mxu0 0
    %1275 = vmatpush.bf16.msra.mxu0 %v882
    %1276 = vmatpush.bf16.msra.mxu0 %v881
    %1277 = vmatmul.bf16.gmra.mxu0 %v1267
    %v1278 = vpop.f32.mrf.mxu0
    %v1279 = vadd.f32 0.0, %v1278
    %v1280 = vpop.f32.mrf.mxu0
    %1281 = vdwg.mxu0
    %v1282 = vadd.f32 %v1261, %v1279
    %v1283 = vxor.u32 %v1282, 2147483648
    %v1284 = vmul.f32 %v1283, 1.442695
    %v1285 = vpow.pop %v1284
    %v1286 = vadd.f32 %v1285, 1.0
    %v1287 = vrcp.pop %v1286
    %v1288 = vmul.f32 %v1286, %v1287
    %v1289 = vsub.f32 1.0, %v1288
    %v1290 = vmul.f32 %v1287, %v1289
    %v1291 = vadd.f32 %v1287, %v1290
    %vm1292 = vweird.f32 %v1286
    %vm1293 = vweird.f32 %v1287
    %vm1294 = vmor %vm1292, %vm1293
    %v1295 = vsel %vm1294, %v1287, %v1291
    %v1296 = vand.u32 2147483647, %v1286
    %vm1297 = vcmp.eq.f32.partialorder %v1296, 8.507059e+37
    %v1298 = vand.u32 %v1286, 2147483648
    %v1299 = vor.u32 1.1754944e-38, %v1298
    %v1300 = vsel %vm1297, %v1299, %v1295
    %v1301 = vmul.f32 1.0, %v1300
    %v1302 = vtanh.pop %v1282
    %v1303 = vmul.f32 %v1301, %v1249
    %1305 = vrot.lane.b32.xlu0 %v1302, 64
    %v1306 = vpop.permute.xlu0 %1305
    %v1308 = vmul.f32 %v1301, %v1306
    %1310 = vrot.lane.b32.xlu0 %v1308, 32
    %v1311 = vpop.permute.xlu0 %1310
    %v1313 = vadd.f32 %v1303, %v1311
    %v1314 = vtanh.pop %v1313
    %1316 = vrot.lane.b32.xlu0 %v1314, 64
    %v1317 = vpop.permute.xlu0 %1316
    %v1319 = vmul.f32 %v1301, %v1317
    %1321 = vrot.lane.b32.xlu0 %v1319, 32
    %v1322 = vpop.permute.xlu0 %1321
    %1324 = vst.msk [vmem:[#allocation2 + $0x30] sm:$0xff] %vm111, %v1322
    %v1325 = vld [vmem:[#allocation3 + $0x38] sm:$0xff]
    %v1326 = vpack.c.bf16 %v1319, %v1319
    %1328 = vrot.lane.b32.xlu0 %v1326, 32
    %v1329 = vpop.permute.xlu0 %1328
    %v1331 = vsel %vm111, %v1329, 0
    %1333 = vmatpush.bf16.msra.mxu0 0
    %1334 = vmatpush.bf16.msra.mxu0 0
    %1335 = vmatpush.bf16.msra.mxu0 0
    %1336 = vmatpush.bf16.msra.mxu0 0
    %1337 = vmatpush.bf16.msra.mxu0 0
    %1338 = vmatpush.bf16.msra.mxu0 0
    %1339 = vmatpush.bf16.msra.mxu0 %v882
    %1340 = vmatpush.bf16.msra.mxu0 %v881
    %1341 = vmatmul.bf16.gmra.mxu0 %v1331
    %v1342 = vpop.f32.mrf.mxu0
    %v1343 = vadd.f32 0.0, %v1342
    %v1344 = vpop.f32.mrf.mxu0
    %1345 = vdwg.mxu0
    %v1346 = vadd.f32 %v1325, %v1343
    %v1347 = vxor.u32 %v1346, 2147483648
    %v1348 = vmul.f32 %v1347, 1.442695
    %v1349 = vpow.pop %v1348
    %v1350 = vadd.f32 %v1349, 1.0
    %v1351 = vrcp.pop %v1350
    %v1352 = vmul.f32 %v1350, %v1351
    %v1353 = vsub.f32 1.0, %v1352
    %v1354 = vmul.f32 %v1351, %v1353
    %v1355 = vadd.f32 %v1351, %v1354
    %vm1356 = vweird.f32 %v1350
    %vm1357 = vweird.f32 %v1351
    %vm1358 = vmor %vm1356, %vm1357
    %v1359 = vsel %vm1358, %v1351, %v1355
    %v1360 = vand.u32 2147483647, %v1350
    %vm1361 = vcmp.eq.f32.partialorder %v1360, 8.507059e+37
    %v1362 = vand.u32 %v1350, 2147483648
    %v1363 = vor.u32 1.1754944e-38, %v1362
    %v1364 = vsel %vm1361, %v1363, %v1359
    %v1365 = vmul.f32 1.0, %v1364
    %v1366 = vtanh.pop %v1346
    %v1367 = vmul.f32 %v1365, %v1313
    %1369 = vrot.lane.b32.xlu0 %v1366, 64
    %v1370 = vpop.permute.xlu0 %1369
    %v1372 = vmul.f32 %v1365, %v1370
    %1374 = vrot.lane.b32.xlu0 %v1372, 32
    %v1375 = vpop.permute.xlu0 %1374
    %v1377 = vadd.f32 %v1367, %v1375
    %v1378 = vtanh.pop %v1377
    %1380 = vrot.lane.b32.xlu0 %v1378, 64
    %v1381 = vpop.permute.xlu0 %1380
    %v1383 = vmul.f32 %v1365, %v1381
    %1385 = vrot.lane.b32.xlu0 %v1383, 32
    %v1386 = vpop.permute.xlu0 %1385
    %1388 = vst.msk [vmem:[#allocation2 + $0x38] sm:$0xff] %vm111, %v1386
    %s1389 = scalar_lea.vmem %s1, 32
    %v1390 = vld [vmem:[%s1389] sm:$0xf]
    %v1391 = vld [vmem:[%s1389 + $0x4] sm:$0xf]
    %v1392 = vld [vmem:[%s1389 + $0x8] sm:$0xf]
    %v1393 = vld [vmem:[%s1389 + $0xc] sm:$0xf]
    %s1394 = scalar_lea.vmem %s2, 32
    %v1395 = vld [vmem:[%s1394] sm:$0xf]
    %v1396 = vld [vmem:[%s1394 + $0x4] sm:$0xf]
    %v1397 = vld [vmem:[%s1394 + $0x8] sm:$0xf]
    %v1398 = vld [vmem:[%s1394 + $0xc] sm:$0xf]
    %s1399 = scalar_lea.vmem [#allocation5], 32
    %v1400 = vld [vmem:[%s1399] sm:$0xf]
    %v1401 = vld [vmem:[%s1399 + $0x4] sm:$0xf]
    %v1402 = vld [vmem:[%s1399 + $0x8] sm:$0xf]
    %v1403 = vld [vmem:[%s1399 + $0xc] sm:$0xf]
    %s1404 = scalar_lea.vmem %s4, 2
    %v1405 = vld [vmem:[%s1404] sm:$0x1]
    %v1406 = vld [vmem:[#allocation2] sm:$0xff]
    %v1407 = vld [vmem:[#allocation2 + $0x8] sm:$0xff]
    %v1408 = vld [vmem:[#allocation2 + $0x10] sm:$0xff]
    %v1409 = vld [vmem:[#allocation2 + $0x18] sm:$0xff]
    %v1410 = vld [vmem:[#allocation2 + $0x20] sm:$0xff]
    %v1411 = vld [vmem:[#allocation2 + $0x28] sm:$0xff]
    %v1412 = vld [vmem:[#allocation2 + $0x30] sm:$0xff]
    %v1413 = vld [vmem:[#allocation2 + $0x38] sm:$0xff]
    %v1414 = vpack.c.bf16 %v1407, %v1406
    %v1415 = vpack.c.bf16 %v1409, %v1408
    %v1416 = vpack.c.bf16 %v1411, %v1410
    %v1417 = vpack.c.bf16 %v1413, %v1412
    %v1419 = vperm.slane %v1405, 0
    %v1425 = vunpack.c.l.b16 %v1390
    %v1426 = vunpack.c.l.b16 %v1391
    %v1427 = vunpack.c.l.b16 %v1392
    %v1428 = vunpack.c.l.b16 %v1393
    %v1429 = vpack.c.b16 %v1426, %v1425
    %v1430 = vpack.c.b16 %v1428, %v1427
    %v1434 = vsel %vm111, %v1414, 0
    %v1437 = vsel %vm111, %v1415, 0
    %v1440 = vsel %vm111, %v1416, 0
    %v1443 = vsel %vm111, %v1417, 0
    %1445 = vmatpush.bf16.msra.mxu0 0
    %1446 = vmatpush.bf16.msra.mxu0 0
    %1447 = vmatpush.bf16.msra.mxu0 0
    %1448 = vmatpush.bf16.msra.mxu0 0
    %1449 = vmatpush.bf16.msra.mxu0 0
    %1450 = vmatpush.bf16.msra.mxu0 0
    %1451 = vmatpush.bf16.msra.mxu0 %v1430
    %1452 = vmatpush.bf16.msra.mxu0 %v1429
    %1453 = vmatmul.bf16.gmra.mxu0 %v1434
    %v1454 = vpop.f32.mrf.mxu0
    %v1455 = vadd.f32 %v1419, %v1454
    %v1456 = vpop.f32.mrf.mxu0
    %v1457 = vadd.f32 %v1419, %v1456
    %1458 = vmatmul.bf16.gmra.mxu0 %v1437
    %v1459 = vpop.f32.mrf.mxu0
    %v1460 = vadd.f32 %v1419, %v1459
    %v1461 = vpop.f32.mrf.mxu0
    %v1462 = vadd.f32 %v1419, %v1461
    %1463 = vmatmul.bf16.gmra.mxu0 %v1440
    %v1464 = vpop.f32.mrf.mxu0
    %v1465 = vadd.f32 %v1419, %v1464
    %v1466 = vpop.f32.mrf.mxu0
    %v1467 = vadd.f32 %v1419, %v1466
    %1468 = vmatmul.bf16.gmra.mxu0 %v1443
    %v1469 = vpop.f32.mrf.mxu0
    %v1470 = vadd.f32 %v1419, %v1469
    %v1471 = vpop.f32.mrf.mxu0
    %v1472 = vadd.f32 %v1419, %v1471
    %1473 = vdwg.mxu0
    %v1478 = vunpack.c.l.b16 %v1395
    %v1479 = vunpack.c.l.b16 %v1396
    %v1480 = vunpack.c.l.b16 %v1397
    %v1481 = vunpack.c.l.b16 %v1398
    %v1482 = vpack.c.b16 %v1479, %v1478
    %v1483 = vpack.c.b16 %v1481, %v1480
    %1486 = vmatpush.bf16.msra.mxu0 0
    %1487 = vmatpush.bf16.msra.mxu0 0
    %1488 = vmatpush.bf16.msra.mxu0 0
    %1489 = vmatpush.bf16.msra.mxu0 0
    %1490 = vmatpush.bf16.msra.mxu0 0
    %1491 = vmatpush.bf16.msra.mxu0 0
    %1492 = vmatpush.bf16.msra.mxu0 %v1483
    %1493 = vmatpush.bf16.msra.mxu0 %v1482
    %1494 = vmatmul.bf16.gmra.mxu0 %v1434
    %v1495 = vpop.f32.mrf.mxu0
    %v1496 = vadd.f32 0.0, %v1495
    %v1497 = vpop.f32.mrf.mxu0
    %v1498 = vadd.f32 0.0, %v1497
    %1499 = vmatmul.bf16.gmra.mxu0 %v1437
    %v1500 = vpop.f32.mrf.mxu0
    %v1501 = vadd.f32 0.0, %v1500
    %v1502 = vpop.f32.mrf.mxu0
    %v1503 = vadd.f32 0.0, %v1502
    %1504 = vmatmul.bf16.gmra.mxu0 %v1440
    %v1505 = vpop.f32.mrf.mxu0
    %v1506 = vadd.f32 0.0, %v1505
    %v1507 = vpop.f32.mrf.mxu0
    %v1508 = vadd.f32 0.0, %v1507
    %1509 = vmatmul.bf16.gmra.mxu0 %v1443
    %v1510 = vpop.f32.mrf.mxu0
    %v1511 = vadd.f32 0.0, %v1510
    %v1512 = vpop.f32.mrf.mxu0
    %v1513 = vadd.f32 0.0, %v1512
    %1514 = vdwg.mxu0
    %v1515 = vadd.f32 %v1455, %v1513
    %1516 = vst [vmem:[#allocation3] sm:$0xff] %v1515
    %v1517 = vadd.f32 %v1457, %v1511
    %1518 = vst [vmem:[#allocation3 + $0x8] sm:$0xff] %v1517
    %v1519 = vadd.f32 %v1460, %v1508
    %1520 = vst [vmem:[#allocation3 + $0x10] sm:$0xff] %v1519
    %v1521 = vadd.f32 %v1462, %v1506
    %1522 = vst [vmem:[#allocation3 + $0x18] sm:$0xff] %v1521
    %v1523 = vadd.f32 %v1465, %v1503
    %1524 = vst [vmem:[#allocation3 + $0x20] sm:$0xff] %v1523
    %v1525 = vadd.f32 %v1467, %v1501
    %1526 = vst [vmem:[#allocation3 + $0x28] sm:$0xff] %v1525
    %v1527 = vadd.f32 %v1470, %v1498
    %1528 = vst [vmem:[#allocation3 + $0x30] sm:$0xff] %v1527
    %v1529 = vadd.f32 %v1472, %v1496
    %1530 = vst [vmem:[#allocation3 + $0x38] sm:$0xff] %v1529
    %v1531 = vld [vmem:[#allocation3] sm:$0xff]
    %v1536 = vunpack.c.l.b16 %v1400
    %v1537 = vunpack.c.l.b16 %v1401
    %v1538 = vunpack.c.l.b16 %v1402
    %v1539 = vunpack.c.l.b16 %v1403
    %v1540 = vpack.c.b16 %v1537, %v1536
    %v1541 = vpack.c.b16 %v1539, %v1538
    %1544 = vmatpush.bf16.msra.mxu0 0
    %1545 = vmatpush.bf16.msra.mxu0 0
    %1546 = vmatpush.bf16.msra.mxu0 0
    %1547 = vmatpush.bf16.msra.mxu0 0
    %1548 = vmatpush.bf16.msra.mxu0 0
    %1549 = vmatpush.bf16.msra.mxu0 0
    %1550 = vmatpush.bf16.msra.mxu0 %v1541
    %1551 = vmatpush.bf16.msra.mxu0 %v1540
    %1552 = vmatmul.bf16.gmra.mxu0 %v224
    %v1553 = vpop.f32.mrf.mxu0
    %v1554 = vadd.f32 0.0, %v1553
    %v1555 = vpop.f32.mrf.mxu0
    %1556 = vdwg.mxu0
    %v1557 = vadd.f32 %v1531, %v1554
    %v1558 = vxor.u32 %v1557, 2147483648
    %v1559 = vmul.f32 %v1558, 1.442695
    %v1560 = vpow.pop %v1559
    %v1561 = vadd.f32 %v1560, 1.0
    %v1562 = vrcp.pop %v1561
    %v1563 = vmul.f32 %v1561, %v1562
    %v1564 = vsub.f32 1.0, %v1563
    %v1565 = vmul.f32 %v1562, %v1564
    %v1566 = vadd.f32 %v1562, %v1565
    %vm1567 = vweird.f32 %v1561
    %vm1568 = vweird.f32 %v1562
    %vm1569 = vmor %vm1567, %vm1568
    %v1570 = vsel %vm1569, %v1562, %v1566
    %v1571 = vand.u32 2147483647, %v1561
    %vm1572 = vcmp.eq.f32.partialorder %v1571, 8.507059e+37
    %v1573 = vand.u32 %v1561, 2147483648
    %v1574 = vor.u32 1.1754944e-38, %v1573
    %v1575 = vsel %vm1572, %v1574, %v1570
    %v1576 = vmul.f32 1.0, %v1575
    %v1577 = vtanh.pop %v1557
    %v1578 = vmul.f32 %v1576, 0.0
    %1580 = vrot.lane.b32.xlu0 %v1577, 64
    %v1581 = vpop.permute.xlu0 %1580
    %v1583 = vmul.f32 %v1576, %v1581
    %1585 = vrot.lane.b32.xlu0 %v1583, 32
    %v1586 = vpop.permute.xlu0 %1585
    %v1588 = vadd.f32 %v1578, %v1586
    %v1589 = vtanh.pop %v1588
    %1591 = vrot.lane.b32.xlu0 %v1589, 64
    %v1592 = vpop.permute.xlu0 %1591
    %v1594 = vmul.f32 %v1576, %v1592
    %1596 = vrot.lane.b32.xlu0 %v1594, 32
    %v1597 = vpop.permute.xlu0 %1596
    %1599 = vst.msk [vmem:[#allocation2] sm:$0xff] %vm111, %v1597
    %v1600 = vld [vmem:[#allocation3 + $0x8] sm:$0xff]
    %v1601 = vpack.c.bf16 %v1594, %v1594
    %1603 = vrot.lane.b32.xlu0 %v1601, 32
    %v1604 = vpop.permute.xlu0 %1603
    %v1606 = vsel %vm111, %v1604, 0
    %1608 = vmatpush.bf16.msra.mxu0 0
    %1609 = vmatpush.bf16.msra.mxu0 0
    %1610 = vmatpush.bf16.msra.mxu0 0
    %1611 = vmatpush.bf16.msra.mxu0 0
    %1612 = vmatpush.bf16.msra.mxu0 0
    %1613 = vmatpush.bf16.msra.mxu0 0
    %1614 = vmatpush.bf16.msra.mxu0 %v1541
    %1615 = vmatpush.bf16.msra.mxu0 %v1540
    %1616 = vmatmul.bf16.gmra.mxu0 %v1606
    %v1617 = vpop.f32.mrf.mxu0
    %v1618 = vadd.f32 0.0, %v1617
    %v1619 = vpop.f32.mrf.mxu0
    %1620 = vdwg.mxu0
    %v1621 = vadd.f32 %v1600, %v1618
    %v1622 = vxor.u32 %v1621, 2147483648
    %v1623 = vmul.f32 %v1622, 1.442695
    %v1624 = vpow.pop %v1623
    %v1625 = vadd.f32 %v1624, 1.0
    %v1626 = vrcp.pop %v1625
    %v1627 = vmul.f32 %v1625, %v1626
    %v1628 = vsub.f32 1.0, %v1627
    %v1629 = vmul.f32 %v1626, %v1628
    %v1630 = vadd.f32 %v1626, %v1629
    %vm1631 = vweird.f32 %v1625
    %vm1632 = vweird.f32 %v1626
    %vm1633 = vmor %vm1631, %vm1632
    %v1634 = vsel %vm1633, %v1626, %v1630
    %v1635 = vand.u32 2147483647, %v1625
    %vm1636 = vcmp.eq.f32.partialorder %v1635, 8.507059e+37
    %v1637 = vand.u32 %v1625, 2147483648
    %v1638 = vor.u32 1.1754944e-38, %v1637
    %v1639 = vsel %vm1636, %v1638, %v1634
    %v1640 = vmul.f32 1.0, %v1639
    %v1641 = vtanh.pop %v1621
    %v1642 = vmul.f32 %v1640, %v1588
    %1644 = vrot.lane.b32.xlu0 %v1641, 64
    %v1645 = vpop.permute.xlu0 %1644
    %v1647 = vmul.f32 %v1640, %v1645
    %1649 = vrot.lane.b32.xlu0 %v1647, 32
    %v1650 = vpop.permute.xlu0 %1649
    %v1652 = vadd.f32 %v1642, %v1650
    %v1653 = vtanh.pop %v1652
    %1655 = vrot.lane.b32.xlu0 %v1653, 64
    %v1656 = vpop.permute.xlu0 %1655
    %v1658 = vmul.f32 %v1640, %v1656
    %1660 = vrot.lane.b32.xlu0 %v1658, 32
    %v1661 = vpop.permute.xlu0 %1660
    %1663 = vst.msk [vmem:[#allocation2 + $0x8] sm:$0xff] %vm111, %v1661
    %v1664 = vld [vmem:[#allocation3 + $0x10] sm:$0xff]
    %v1665 = vpack.c.bf16 %v1658, %v1658
    %1667 = vrot.lane.b32.xlu0 %v1665, 32
    %v1668 = vpop.permute.xlu0 %1667
    %v1670 = vsel %vm111, %v1668, 0
    %1672 = vmatpush.bf16.msra.mxu0 0
    %1673 = vmatpush.bf16.msra.mxu0 0
    %1674 = vmatpush.bf16.msra.mxu0 0
    %1675 = vmatpush.bf16.msra.mxu0 0
    %1676 = vmatpush.bf16.msra.mxu0 0
    %1677 = vmatpush.bf16.msra.mxu0 0
    %1678 = vmatpush.bf16.msra.mxu0 %v1541
    %1679 = vmatpush.bf16.msra.mxu0 %v1540
    %1680 = vmatmul.bf16.gmra.mxu0 %v1670
    %v1681 = vpop.f32.mrf.mxu0
    %v1682 = vadd.f32 0.0, %v1681
    %v1683 = vpop.f32.mrf.mxu0
    %1684 = vdwg.mxu0
    %v1685 = vadd.f32 %v1664, %v1682
    %v1686 = vxor.u32 %v1685, 2147483648
    %v1687 = vmul.f32 %v1686, 1.442695
    %v1688 = vpow.pop %v1687
    %v1689 = vadd.f32 %v1688, 1.0
    %v1690 = vrcp.pop %v1689
    %v1691 = vmul.f32 %v1689, %v1690
    %v1692 = vsub.f32 1.0, %v1691
    %v1693 = vmul.f32 %v1690, %v1692
    %v1694 = vadd.f32 %v1690, %v1693
    %vm1695 = vweird.f32 %v1689
    %vm1696 = vweird.f32 %v1690
    %vm1697 = vmor %vm1695, %vm1696
    %v1698 = vsel %vm1697, %v1690, %v1694
    %v1699 = vand.u32 2147483647, %v1689
    %vm1700 = vcmp.eq.f32.partialorder %v1699, 8.507059e+37
    %v1701 = vand.u32 %v1689, 2147483648
    %v1702 = vor.u32 1.1754944e-38, %v1701
    %v1703 = vsel %vm1700, %v1702, %v1698
    %v1704 = vmul.f32 1.0, %v1703
    %v1705 = vtanh.pop %v1685
    %v1706 = vmul.f32 %v1704, %v1652
    %1708 = vrot.lane.b32.xlu0 %v1705, 64
    %v1709 = vpop.permute.xlu0 %1708
    %v1711 = vmul.f32 %v1704, %v1709
    %1713 = vrot.lane.b32.xlu0 %v1711, 32
    %v1714 = vpop.permute.xlu0 %1713
    %v1716 = vadd.f32 %v1706, %v1714
    %v1717 = vtanh.pop %v1716
    %1719 = vrot.lane.b32.xlu0 %v1717, 64
    %v1720 = vpop.permute.xlu0 %1719
    %v1722 = vmul.f32 %v1704, %v1720
    %1724 = vrot.lane.b32.xlu0 %v1722, 32
    %v1725 = vpop.permute.xlu0 %1724
    %1727 = vst.msk [vmem:[#allocation2 + $0x10] sm:$0xff] %vm111, %v1725
    %v1728 = vld [vmem:[#allocation3 + $0x18] sm:$0xff]
    %v1729 = vpack.c.bf16 %v1722, %v1722
    %1731 = vrot.lane.b32.xlu0 %v1729, 32
    %v1732 = vpop.permute.xlu0 %1731
    %v1734 = vsel %vm111, %v1732, 0
    %1736 = vmatpush.bf16.msra.mxu0 0
    %1737 = vmatpush.bf16.msra.mxu0 0
    %1738 = vmatpush.bf16.msra.mxu0 0
    %1739 = vmatpush.bf16.msra.mxu0 0
    %1740 = vmatpush.bf16.msra.mxu0 0
    %1741 = vmatpush.bf16.msra.mxu0 0
    %1742 = vmatpush.bf16.msra.mxu0 %v1541
    %1743 = vmatpush.bf16.msra.mxu0 %v1540
    %1744 = vmatmul.bf16.gmra.mxu0 %v1734
    %v1745 = vpop.f32.mrf.mxu0
    %v1746 = vadd.f32 0.0, %v1745
    %v1747 = vpop.f32.mrf.mxu0
    %1748 = vdwg.mxu0
    %v1749 = vadd.f32 %v1728, %v1746
    %v1750 = vxor.u32 %v1749, 2147483648
    %v1751 = vmul.f32 %v1750, 1.442695
    %v1752 = vpow.pop %v1751
    %v1753 = vadd.f32 %v1752, 1.0
    %v1754 = vrcp.pop %v1753
    %v1755 = vmul.f32 %v1753, %v1754
    %v1756 = vsub.f32 1.0, %v1755
    %v1757 = vmul.f32 %v1754, %v1756
    %v1758 = vadd.f32 %v1754, %v1757
    %vm1759 = vweird.f32 %v1753
    %vm1760 = vweird.f32 %v1754
    %vm1761 = vmor %vm1759, %vm1760
    %v1762 = vsel %vm1761, %v1754, %v1758
    %v1763 = vand.u32 2147483647, %v1753
    %vm1764 = vcmp.eq.f32.partialorder %v1763, 8.507059e+37
    %v1765 = vand.u32 %v1753, 2147483648
    %v1766 = vor.u32 1.1754944e-38, %v1765
    %v1767 = vsel %vm1764, %v1766, %v1762
    %v1768 = vmul.f32 1.0, %v1767
    %v1769 = vtanh.pop %v1749
    %v1770 = vmul.f32 %v1768, %v1716
    %1772 = vrot.lane.b32.xlu0 %v1769, 64
    %v1773 = vpop.permute.xlu0 %1772
    %v1775 = vmul.f32 %v1768, %v1773
    %1777 = vrot.lane.b32.xlu0 %v1775, 32
    %v1778 = vpop.permute.xlu0 %1777
    %v1780 = vadd.f32 %v1770, %v1778
    %v1781 = vtanh.pop %v1780
    %1783 = vrot.lane.b32.xlu0 %v1781, 64
    %v1784 = vpop.permute.xlu0 %1783
    %v1786 = vmul.f32 %v1768, %v1784
    %1788 = vrot.lane.b32.xlu0 %v1786, 32
    %v1789 = vpop.permute.xlu0 %1788
    %1791 = vst.msk [vmem:[#allocation2 + $0x18] sm:$0xff] %vm111, %v1789
    %v1792 = vld [vmem:[#allocation3 + $0x20] sm:$0xff]
    %v1793 = vpack.c.bf16 %v1786, %v1786
    %1795 = vrot.lane.b32.xlu0 %v1793, 32
    %v1796 = vpop.permute.xlu0 %1795
    %v1798 = vsel %vm111, %v1796, 0
    %1800 = vmatpush.bf16.msra.mxu0 0
    %1801 = vmatpush.bf16.msra.mxu0 0
    %1802 = vmatpush.bf16.msra.mxu0 0
    %1803 = vmatpush.bf16.msra.mxu0 0
    %1804 = vmatpush.bf16.msra.mxu0 0
    %1805 = vmatpush.bf16.msra.mxu0 0
    %1806 = vmatpush.bf16.msra.mxu0 %v1541
    %1807 = vmatpush.bf16.msra.mxu0 %v1540
    %1808 = vmatmul.bf16.gmra.mxu0 %v1798
    %v1809 = vpop.f32.mrf.mxu0
    %v1810 = vadd.f32 0.0, %v1809
    %v1811 = vpop.f32.mrf.mxu0
    %1812 = vdwg.mxu0
    %v1813 = vadd.f32 %v1792, %v1810
    %v1814 = vxor.u32 %v1813, 2147483648
    %v1815 = vmul.f32 %v1814, 1.442695
    %v1816 = vpow.pop %v1815
    %v1817 = vadd.f32 %v1816, 1.0
    %v1818 = vrcp.pop %v1817
    %v1819 = vmul.f32 %v1817, %v1818
    %v1820 = vsub.f32 1.0, %v1819
    %v1821 = vmul.f32 %v1818, %v1820
    %v1822 = vadd.f32 %v1818, %v1821
    %vm1823 = vweird.f32 %v1817
    %vm1824 = vweird.f32 %v1818
    %vm1825 = vmor %vm1823, %vm1824
    %v1826 = vsel %vm1825, %v1818, %v1822
    %v1827 = vand.u32 2147483647, %v1817
    %vm1828 = vcmp.eq.f32.partialorder %v1827, 8.507059e+37
    %v1829 = vand.u32 %v1817, 2147483648
    %v1830 = vor.u32 1.1754944e-38, %v1829
    %v1831 = vsel %vm1828, %v1830, %v1826
    %v1832 = vmul.f32 1.0, %v1831
    %v1833 = vtanh.pop %v1813
    %v1834 = vmul.f32 %v1832, %v1780
    %1836 = vrot.lane.b32.xlu0 %v1833, 64
    %v1837 = vpop.permute.xlu0 %1836
    %v1839 = vmul.f32 %v1832, %v1837
    %1841 = vrot.lane.b32.xlu0 %v1839, 32
    %v1842 = vpop.permute.xlu0 %1841
    %v1844 = vadd.f32 %v1834, %v1842
    %v1845 = vtanh.pop %v1844
    %1847 = vrot.lane.b32.xlu0 %v1845, 64
    %v1848 = vpop.permute.xlu0 %1847
    %v1850 = vmul.f32 %v1832, %v1848
    %1852 = vrot.lane.b32.xlu0 %v1850, 32
    %v1853 = vpop.permute.xlu0 %1852
    %1855 = vst.msk [vmem:[#allocation2 + $0x20] sm:$0xff] %vm111, %v1853
    %v1856 = vld [vmem:[#allocation3 + $0x28] sm:$0xff]
    %v1857 = vpack.c.bf16 %v1850, %v1850
    %1859 = vrot.lane.b32.xlu0 %v1857, 32
    %v1860 = vpop.permute.xlu0 %1859
    %v1862 = vsel %vm111, %v1860, 0
    %1864 = vmatpush.bf16.msra.mxu0 0
    %1865 = vmatpush.bf16.msra.mxu0 0
    %1866 = vmatpush.bf16.msra.mxu0 0
    %1867 = vmatpush.bf16.msra.mxu0 0
    %1868 = vmatpush.bf16.msra.mxu0 0
    %1869 = vmatpush.bf16.msra.mxu0 0
    %1870 = vmatpush.bf16.msra.mxu0 %v1541
    %1871 = vmatpush.bf16.msra.mxu0 %v1540
    %1872 = vmatmul.bf16.gmra.mxu0 %v1862
    %v1873 = vpop.f32.mrf.mxu0
    %v1874 = vadd.f32 0.0, %v1873
    %v1875 = vpop.f32.mrf.mxu0
    %1876 = vdwg.mxu0
    %v1877 = vadd.f32 %v1856, %v1874
    %v1878 = vxor.u32 %v1877, 2147483648
    %v1879 = vmul.f32 %v1878, 1.442695
    %v1880 = vpow.pop %v1879
    %v1881 = vadd.f32 %v1880, 1.0
    %v1882 = vrcp.pop %v1881
    %v1883 = vmul.f32 %v1881, %v1882
    %v1884 = vsub.f32 1.0, %v1883
    %v1885 = vmul.f32 %v1882, %v1884
    %v1886 = vadd.f32 %v1882, %v1885
    %vm1887 = vweird.f32 %v1881
    %vm1888 = vweird.f32 %v1882
    %vm1889 = vmor %vm1887, %vm1888
    %v1890 = vsel %vm1889, %v1882, %v1886
    %v1891 = vand.u32 2147483647, %v1881
    %vm1892 = vcmp.eq.f32.partialorder %v1891, 8.507059e+37
    %v1893 = vand.u32 %v1881, 2147483648
    %v1894 = vor.u32 1.1754944e-38, %v1893
    %v1895 = vsel %vm1892, %v1894, %v1890
    %v1896 = vmul.f32 1.0, %v1895
    %v1897 = vtanh.pop %v1877
    %v1898 = vmul.f32 %v1896, %v1844
    %1900 = vrot.lane.b32.xlu0 %v1897, 64
    %v1901 = vpop.permute.xlu0 %1900
    %v1903 = vmul.f32 %v1896, %v1901
    %1905 = vrot.lane.b32.xlu0 %v1903, 32
    %v1906 = vpop.permute.xlu0 %1905
    %v1908 = vadd.f32 %v1898, %v1906
    %v1909 = vtanh.pop %v1908
    %1911 = vrot.lane.b32.xlu0 %v1909, 64
    %v1912 = vpop.permute.xlu0 %1911
    %v1914 = vmul.f32 %v1896, %v1912
    %1916 = vrot.lane.b32.xlu0 %v1914, 32
    %v1917 = vpop.permute.xlu0 %1916
    %1919 = vst.msk [vmem:[#allocation2 + $0x28] sm:$0xff] %vm111, %v1917
    %v1920 = vld [vmem:[#allocation3 + $0x30] sm:$0xff]
    %v1921 = vpack.c.bf16 %v1914, %v1914
    %1923 = vrot.lane.b32.xlu0 %v1921, 32
    %v1924 = vpop.permute.xlu0 %1923
    %v1926 = vsel %vm111, %v1924, 0
    %1928 = vmatpush.bf16.msra.mxu0 0
    %1929 = vmatpush.bf16.msra.mxu0 0
    %1930 = vmatpush.bf16.msra.mxu0 0
    %1931 = vmatpush.bf16.msra.mxu0 0
    %1932 = vmatpush.bf16.msra.mxu0 0
    %1933 = vmatpush.bf16.msra.mxu0 0
    %1934 = vmatpush.bf16.msra.mxu0 %v1541
    %1935 = vmatpush.bf16.msra.mxu0 %v1540
    %1936 = vmatmul.bf16.gmra.mxu0 %v1926
    %v1937 = vpop.f32.mrf.mxu0
    %v1938 = vadd.f32 0.0, %v1937
    %v1939 = vpop.f32.mrf.mxu0
    %1940 = vdwg.mxu0
    %v1941 = vadd.f32 %v1920, %v1938
    %v1942 = vxor.u32 %v1941, 2147483648
    %v1943 = vmul.f32 %v1942, 1.442695
    %v1944 = vpow.pop %v1943
    %v1945 = vadd.f32 %v1944, 1.0
    %v1946 = vrcp.pop %v1945
    %v1947 = vmul.f32 %v1945, %v1946
    %v1948 = vsub.f32 1.0, %v1947
    %v1949 = vmul.f32 %v1946, %v1948
    %v1950 = vadd.f32 %v1946, %v1949
    %vm1951 = vweird.f32 %v1945
    %vm1952 = vweird.f32 %v1946
    %vm1953 = vmor %vm1951, %vm1952
    %v1954 = vsel %vm1953, %v1946, %v1950
    %v1955 = vand.u32 2147483647, %v1945
    %vm1956 = vcmp.eq.f32.partialorder %v1955, 8.507059e+37
    %v1957 = vand.u32 %v1945, 2147483648
    %v1958 = vor.u32 1.1754944e-38, %v1957
    %v1959 = vsel %vm1956, %v1958, %v1954
    %v1960 = vmul.f32 1.0, %v1959
    %v1961 = vtanh.pop %v1941
    %v1962 = vmul.f32 %v1960, %v1908
    %1964 = vrot.lane.b32.xlu0 %v1961, 64
    %v1965 = vpop.permute.xlu0 %1964
    %v1967 = vmul.f32 %v1960, %v1965
    %1969 = vrot.lane.b32.xlu0 %v1967, 32
    %v1970 = vpop.permute.xlu0 %1969
    %v1972 = vadd.f32 %v1962, %v1970
    %v1973 = vtanh.pop %v1972
    %1975 = vrot.lane.b32.xlu0 %v1973, 64
    %v1976 = vpop.permute.xlu0 %1975
    %v1978 = vmul.f32 %v1960, %v1976
    %1980 = vrot.lane.b32.xlu0 %v1978, 32
    %v1981 = vpop.permute.xlu0 %1980
    %1983 = vst.msk [vmem:[#allocation2 + $0x30] sm:$0xff] %vm111, %v1981
    %v1984 = vld [vmem:[#allocation3 + $0x38] sm:$0xff]
    %v1985 = vpack.c.bf16 %v1978, %v1978
    %1987 = vrot.lane.b32.xlu0 %v1985, 32
    %v1988 = vpop.permute.xlu0 %1987
    %v1990 = vsel %vm111, %v1988, 0
    %1992 = vmatpush.bf16.msra.mxu0 0
    %1993 = vmatpush.bf16.msra.mxu0 0
    %1994 = vmatpush.bf16.msra.mxu0 0
    %1995 = vmatpush.bf16.msra.mxu0 0
    %1996 = vmatpush.bf16.msra.mxu0 0
    %1997 = vmatpush.bf16.msra.mxu0 0
    %1998 = vmatpush.bf16.msra.mxu0 %v1541
    %1999 = vmatpush.bf16.msra.mxu0 %v1540
    %2000 = vmatmul.bf16.gmra.mxu0 %v1990
    %v2001 = vpop.f32.mrf.mxu0
    %v2002 = vadd.f32 0.0, %v2001
    %v2003 = vpop.f32.mrf.mxu0
    %2004 = vdwg.mxu0
    %v2005 = vadd.f32 %v1984, %v2002
    %v2006 = vxor.u32 %v2005, 2147483648
    %v2007 = vmul.f32 %v2006, 1.442695
    %v2008 = vpow.pop %v2007
    %v2009 = vadd.f32 %v2008, 1.0
    %v2010 = vrcp.pop %v2009
    %v2011 = vmul.f32 %v2009, %v2010
    %v2012 = vsub.f32 1.0, %v2011
    %v2013 = vmul.f32 %v2010, %v2012
    %v2014 = vadd.f32 %v2010, %v2013
    %vm2015 = vweird.f32 %v2009
    %vm2016 = vweird.f32 %v2010
    %vm2017 = vmor %vm2015, %vm2016
    %v2018 = vsel %vm2017, %v2010, %v2014
    %v2019 = vand.u32 2147483647, %v2009
    %vm2020 = vcmp.eq.f32.partialorder %v2019, 8.507059e+37
    %v2021 = vand.u32 %v2009, 2147483648
    %v2022 = vor.u32 1.1754944e-38, %v2021
    %v2023 = vsel %vm2020, %v2022, %v2018
    %v2024 = vmul.f32 1.0, %v2023
    %v2025 = vtanh.pop %v2005
    %v2026 = vmul.f32 %v2024, %v1972
    %2028 = vrot.lane.b32.xlu0 %v2025, 64
    %v2029 = vpop.permute.xlu0 %2028
    %v2031 = vmul.f32 %v2024, %v2029
    %2033 = vrot.lane.b32.xlu0 %v2031, 32
    %v2034 = vpop.permute.xlu0 %2033
    %v2036 = vadd.f32 %v2026, %v2034
    %v2037 = vtanh.pop %v2036
    %2039 = vrot.lane.b32.xlu0 %v2037, 64
    %v2040 = vpop.permute.xlu0 %2039
    %v2042 = vmul.f32 %v2024, %v2040
    %2044 = vrot.lane.b32.xlu0 %v2042, 32
    %v2045 = vpop.permute.xlu0 %2044
    %2047 = vst.msk [vmem:[#allocation2 + $0x38] sm:$0xff] %vm111, %v2045
    %s2048 = scalar_lea.vmem %s1, 48
    %v2049 = vld [vmem:[%s2048] sm:$0xf]
    %v2050 = vld [vmem:[%s2048 + $0x4] sm:$0xf]
    %v2051 = vld [vmem:[%s2048 + $0x8] sm:$0xf]
    %v2052 = vld [vmem:[%s2048 + $0xc] sm:$0xf]
    %s2053 = scalar_lea.vmem %s2, 48
    %v2054 = vld [vmem:[%s2053] sm:$0xf]
    %v2055 = vld [vmem:[%s2053 + $0x4] sm:$0xf]
    %v2056 = vld [vmem:[%s2053 + $0x8] sm:$0xf]
    %v2057 = vld [vmem:[%s2053 + $0xc] sm:$0xf]
    %s2058 = scalar_lea.vmem [#allocation5], 48
    %v2059 = vld [vmem:[%s2058] sm:$0xf]
    %v2060 = vld [vmem:[%s2058 + $0x4] sm:$0xf]
    %v2061 = vld [vmem:[%s2058 + $0x8] sm:$0xf]
    %v2062 = vld [vmem:[%s2058 + $0xc] sm:$0xf]
    %s2063 = scalar_lea.vmem %s4, 3
    %v2064 = vld [vmem:[%s2063] sm:$0x1]
    %v2065 = vld [vmem:[#allocation2] sm:$0xff]
    %v2066 = vld [vmem:[#allocation2 + $0x8] sm:$0xff]
    %v2067 = vld [vmem:[#allocation2 + $0x10] sm:$0xff]
    %v2068 = vld [vmem:[#allocation2 + $0x18] sm:$0xff]
    %v2069 = vld [vmem:[#allocation2 + $0x20] sm:$0xff]
    %v2070 = vld [vmem:[#allocation2 + $0x28] sm:$0xff]
    %v2071 = vld [vmem:[#allocation2 + $0x30] sm:$0xff]
    %v2072 = vld [vmem:[#allocation2 + $0x38] sm:$0xff]
    %v2073 = vpack.c.bf16 %v2066, %v2065
    %v2074 = vpack.c.bf16 %v2068, %v2067
    %v2075 = vpack.c.bf16 %v2070, %v2069
    %v2076 = vpack.c.bf16 %v2072, %v2071
    %v2078 = vperm.slane %v2064, 0
    %v2084 = vunpack.c.l.b16 %v2049
    %v2085 = vunpack.c.l.b16 %v2050
    %v2086 = vunpack.c.l.b16 %v2051
    %v2087 = vunpack.c.l.b16 %v2052
    %v2088 = vpack.c.b16 %v2085, %v2084
    %v2089 = vpack.c.b16 %v2087, %v2086
    %v2093 = vsel %vm111, %v2073, 0
    %v2096 = vsel %vm111, %v2074, 0
    %v2099 = vsel %vm111, %v2075, 0
    %v2102 = vsel %vm111, %v2076, 0
    %2104 = vmatpush.bf16.msra.mxu0 0
    %2105 = vmatpush.bf16.msra.mxu0 0
    %2106 = vmatpush.bf16.msra.mxu0 0
    %2107 = vmatpush.bf16.msra.mxu0 0
    %2108 = vmatpush.bf16.msra.mxu0 0
    %2109 = vmatpush.bf16.msra.mxu0 0
    %2110 = vmatpush.bf16.msra.mxu0 %v2089
    %2111 = vmatpush.bf16.msra.mxu0 %v2088
    %2112 = vmatmul.bf16.gmra.mxu0 %v2093
    %v2113 = vpop.f32.mrf.mxu0
    %v2114 = vadd.f32 %v2078, %v2113
    %v2115 = vpop.f32.mrf.mxu0
    %v2116 = vadd.f32 %v2078, %v2115
    %2117 = vmatmul.bf16.gmra.mxu0 %v2096
    %v2118 = vpop.f32.mrf.mxu0
    %v2119 = vadd.f32 %v2078, %v2118
    %v2120 = vpop.f32.mrf.mxu0
    %v2121 = vadd.f32 %v2078, %v2120
    %2122 = vmatmul.bf16.gmra.mxu0 %v2099
    %v2123 = vpop.f32.mrf.mxu0
    %v2124 = vadd.f32 %v2078, %v2123
    %v2125 = vpop.f32.mrf.mxu0
    %v2126 = vadd.f32 %v2078, %v2125
    %2127 = vmatmul.bf16.gmra.mxu0 %v2102
    %v2128 = vpop.f32.mrf.mxu0
    %v2129 = vadd.f32 %v2078, %v2128
    %v2130 = vpop.f32.mrf.mxu0
    %v2131 = vadd.f32 %v2078, %v2130
    %2132 = vdwg.mxu0
    %v2137 = vunpack.c.l.b16 %v2054
    %v2138 = vunpack.c.l.b16 %v2055
    %v2139 = vunpack.c.l.b16 %v2056
    %v2140 = vunpack.c.l.b16 %v2057
    %v2141 = vpack.c.b16 %v2138, %v2137
    %v2142 = vpack.c.b16 %v2140, %v2139
    %2145 = vmatpush.bf16.msra.mxu0 0
    %2146 = vmatpush.bf16.msra.mxu0 0
    %2147 = vmatpush.bf16.msra.mxu0 0
    %2148 = vmatpush.bf16.msra.mxu0 0
    %2149 = vmatpush.bf16.msra.mxu0 0
    %2150 = vmatpush.bf16.msra.mxu0 0
    %2151 = vmatpush.bf16.msra.mxu0 %v2142
    %2152 = vmatpush.bf16.msra.mxu0 %v2141
    %2153 = vmatmul.bf16.gmra.mxu0 %v2093
    %v2154 = vpop.f32.mrf.mxu0
    %v2155 = vadd.f32 0.0, %v2154
    %v2156 = vpop.f32.mrf.mxu0
    %v2157 = vadd.f32 0.0, %v2156
    %2158 = vmatmul.bf16.gmra.mxu0 %v2096
    %v2159 = vpop.f32.mrf.mxu0
    %v2160 = vadd.f32 0.0, %v2159
    %v2161 = vpop.f32.mrf.mxu0
    %v2162 = vadd.f32 0.0, %v2161
    %2163 = vmatmul.bf16.gmra.mxu0 %v2099
    %v2164 = vpop.f32.mrf.mxu0
    %v2165 = vadd.f32 0.0, %v2164
    %v2166 = vpop.f32.mrf.mxu0
    %v2167 = vadd.f32 0.0, %v2166
    %2168 = vmatmul.bf16.gmra.mxu0 %v2102
    %v2169 = vpop.f32.mrf.mxu0
    %v2170 = vadd.f32 0.0, %v2169
    %v2171 = vpop.f32.mrf.mxu0
    %v2172 = vadd.f32 0.0, %v2171
    %2173 = vdwg.mxu0
    %v2174 = vadd.f32 %v2114, %v2172
    %2175 = vst [vmem:[#allocation3] sm:$0xff] %v2174
    %v2176 = vadd.f32 %v2116, %v2170
    %2177 = vst [vmem:[#allocation3 + $0x8] sm:$0xff] %v2176
    %v2178 = vadd.f32 %v2119, %v2167
    %2179 = vst [vmem:[#allocation3 + $0x10] sm:$0xff] %v2178
    %v2180 = vadd.f32 %v2121, %v2165
    %2181 = vst [vmem:[#allocation3 + $0x18] sm:$0xff] %v2180
    %v2182 = vadd.f32 %v2124, %v2162
    %2183 = vst [vmem:[#allocation3 + $0x20] sm:$0xff] %v2182
    %v2184 = vadd.f32 %v2126, %v2160
    %2185 = vst [vmem:[#allocation3 + $0x28] sm:$0xff] %v2184
    %v2186 = vadd.f32 %v2129, %v2157
    %2187 = vst [vmem:[#allocation3 + $0x30] sm:$0xff] %v2186
    %v2188 = vadd.f32 %v2131, %v2155
    %2189 = vst [vmem:[#allocation3 + $0x38] sm:$0xff] %v2188
    %v2190 = vld [vmem:[#allocation3] sm:$0xff]
    %v2195 = vunpack.c.l.b16 %v2059
    %v2196 = vunpack.c.l.b16 %v2060
    %v2197 = vunpack.c.l.b16 %v2061
    %v2198 = vunpack.c.l.b16 %v2062
    %v2199 = vpack.c.b16 %v2196, %v2195
    %v2200 = vpack.c.b16 %v2198, %v2197
    %2203 = vmatpush.bf16.msra.mxu0 0
    %2204 = vmatpush.bf16.msra.mxu0 0
    %2205 = vmatpush.bf16.msra.mxu0 0
    %2206 = vmatpush.bf16.msra.mxu0 0
    %2207 = vmatpush.bf16.msra.mxu0 0
    %2208 = vmatpush.bf16.msra.mxu0 0
    %2209 = vmatpush.bf16.msra.mxu0 %v2200
    %2210 = vmatpush.bf16.msra.mxu0 %v2199
    %2211 = vmatmul.bf16.gmra.mxu0 %v224
    %v2212 = vpop.f32.mrf.mxu0
    %v2213 = vadd.f32 0.0, %v2212
    %v2214 = vpop.f32.mrf.mxu0
    %2215 = vdwg.mxu0
    %v2216 = vadd.f32 %v2190, %v2213
    %v2217 = vxor.u32 %v2216, 2147483648
    %v2218 = vmul.f32 %v2217, 1.442695
    %v2219 = vpow.pop %v2218
    %v2220 = vadd.f32 %v2219, 1.0
    %v2221 = vrcp.pop %v2220
    %v2222 = vmul.f32 %v2220, %v2221
    %v2223 = vsub.f32 1.0, %v2222
    %v2224 = vmul.f32 %v2221, %v2223
    %v2225 = vadd.f32 %v2221, %v2224
    %vm2226 = vweird.f32 %v2220
    %vm2227 = vweird.f32 %v2221
    %vm2228 = vmor %vm2226, %vm2227
    %v2229 = vsel %vm2228, %v2221, %v2225
    %v2230 = vand.u32 2147483647, %v2220
    %vm2231 = vcmp.eq.f32.partialorder %v2230, 8.507059e+37
    %v2232 = vand.u32 %v2220, 2147483648
    %v2233 = vor.u32 1.1754944e-38, %v2232
    %v2234 = vsel %vm2231, %v2233, %v2229
    %v2235 = vmul.f32 1.0, %v2234
    %v2236 = vtanh.pop %v2216
    %v2237 = vmul.f32 %v2235, 0.0
    %2239 = vrot.lane.b32.xlu0 %v2236, 64
    %v2240 = vpop.permute.xlu0 %2239
    %v2242 = vmul.f32 %v2235, %v2240
    %2244 = vrot.lane.b32.xlu0 %v2242, 32
    %v2245 = vpop.permute.xlu0 %2244
    %v2247 = vadd.f32 %v2237, %v2245
    %v2248 = vtanh.pop %v2247
    %2250 = vrot.lane.b32.xlu0 %v2248, 64
    %v2251 = vpop.permute.xlu0 %2250
    %v2253 = vmul.f32 %v2235, %v2251
    %2255 = vrot.lane.b32.xlu0 %v2253, 32
    %v2256 = vpop.permute.xlu0 %2255
    %vm2258 = vcmask 130048
    %2259 = vst.msk [vmem:[#allocation4] sm:$0xff] %vm2258, %v2256
    %vm2260 = vcmask 261248
    %2261 = vst.msk [vmem:[#allocation4 + $0x38] sm:$0xff] %vm2260, %v2256
    %v2262 = vld [vmem:[#allocation3 + $0x8] sm:$0xff]
    %v2263 = vpack.c.bf16 %v2253, %v2253
    %2265 = vrot.lane.b32.xlu0 %v2263, 32
    %v2266 = vpop.permute.xlu0 %2265
    %v2268 = vsel %vm111, %v2266, 0
    %2270 = vmatpush.bf16.msra.mxu0 0
    %2271 = vmatpush.bf16.msra.mxu0 0
    %2272 = vmatpush.bf16.msra.mxu0 0
    %2273 = vmatpush.bf16.msra.mxu0 0
    %2274 = vmatpush.bf16.msra.mxu0 0
    %2275 = vmatpush.bf16.msra.mxu0 0
    %2276 = vmatpush.bf16.msra.mxu0 %v2200
    %2277 = vmatpush.bf16.msra.mxu0 %v2199
    %2278 = vmatmul.bf16.gmra.mxu0 %v2268
    %v2279 = vpop.f32.mrf.mxu0
    %v2280 = vadd.f32 0.0, %v2279
    %v2281 = vpop.f32.mrf.mxu0
    %2282 = vdwg.mxu0
    %v2283 = vadd.f32 %v2262, %v2280
    %v2284 = vxor.u32 %v2283, 2147483648
    %v2285 = vmul.f32 %v2284, 1.442695
    %v2286 = vpow.pop %v2285
    %v2287 = vadd.f32 %v2286, 1.0
    %v2288 = vrcp.pop %v2287
    %v2289 = vmul.f32 %v2287, %v2288
    %v2290 = vsub.f32 1.0, %v2289
    %v2291 = vmul.f32 %v2288, %v2290
    %v2292 = vadd.f32 %v2288, %v2291
    %vm2293 = vweird.f32 %v2287
    %vm2294 = vweird.f32 %v2288
    %vm2295 = vmor %vm2293, %vm2294
    %v2296 = vsel %vm2295, %v2288, %v2292
    %v2297 = vand.u32 2147483647, %v2287
    %vm2298 = vcmp.eq.f32.partialorder %v2297, 8.507059e+37
    %v2299 = vand.u32 %v2287, 2147483648
    %v2300 = vor.u32 1.1754944e-38, %v2299
    %v2301 = vsel %vm2298, %v2300, %v2296
    %v2302 = vmul.f32 1.0, %v2301
    %v2303 = vtanh.pop %v2283
    %v2304 = vmul.f32 %v2302, %v2247
    %2306 = vrot.lane.b32.xlu0 %v2303, 64
    %v2307 = vpop.permute.xlu0 %2306
    %v2309 = vmul.f32 %v2302, %v2307
    %2311 = vrot.lane.b32.xlu0 %v2309, 32
    %v2312 = vpop.permute.xlu0 %2311
    %v2314 = vadd.f32 %v2304, %v2312
    %v2315 = vtanh.pop %v2314
    %2317 = vrot.lane.b32.xlu0 %v2315, 64
    %v2318 = vpop.permute.xlu0 %2317
    %v2320 = vmul.f32 %v2302, %v2318
    %2322 = vrot.lane.b32.xlu0 %v2320, 32
    %v2323 = vpop.permute.xlu0 %2322
    %2325 = vst.msk [vmem:[#allocation4 + $0x8] sm:$0xff] %vm2258, %v2323
    %2326 = vst.msk [vmem:[#allocation4 + $0x30] sm:$0xff] %vm2260, %v2323
    %v2327 = vld [vmem:[#allocation3 + $0x10] sm:$0xff]
    %v2328 = vpack.c.bf16 %v2320, %v2320
    %2330 = vrot.lane.b32.xlu0 %v2328, 32
    %v2331 = vpop.permute.xlu0 %2330
    %v2333 = vsel %vm111, %v2331, 0
    %2335 = vmatpush.bf16.msra.mxu0 0
    %2336 = vmatpush.bf16.msra.mxu0 0
    %2337 = vmatpush.bf16.msra.mxu0 0
    %2338 = vmatpush.bf16.msra.mxu0 0
    %2339 = vmatpush.bf16.msra.mxu0 0
    %2340 = vmatpush.bf16.msra.mxu0 0
    %2341 = vmatpush.bf16.msra.mxu0 %v2200
    %2342 = vmatpush.bf16.msra.mxu0 %v2199
    %2343 = vmatmul.bf16.gmra.mxu0 %v2333
    %v2344 = vpop.f32.mrf.mxu0
    %v2345 = vadd.f32 0.0, %v2344
    %v2346 = vpop.f32.mrf.mxu0
    %2347 = vdwg.mxu0
    %v2348 = vadd.f32 %v2327, %v2345
    %v2349 = vxor.u32 %v2348, 2147483648
    %v2350 = vmul.f32 %v2349, 1.442695
    %v2351 = vpow.pop %v2350
    %v2352 = vadd.f32 %v2351, 1.0
    %v2353 = vrcp.pop %v2352
    %v2354 = vmul.f32 %v2352, %v2353
    %v2355 = vsub.f32 1.0, %v2354
    %v2356 = vmul.f32 %v2353, %v2355
    %v2357 = vadd.f32 %v2353, %v2356
    %vm2358 = vweird.f32 %v2352
    %vm2359 = vweird.f32 %v2353
    %vm2360 = vmor %vm2358, %vm2359
    %v2361 = vsel %vm2360, %v2353, %v2357
    %v2362 = vand.u32 2147483647, %v2352
    %vm2363 = vcmp.eq.f32.partialorder %v2362, 8.507059e+37
    %v2364 = vand.u32 %v2352, 2147483648
    %v2365 = vor.u32 1.1754944e-38, %v2364
    %v2366 = vsel %vm2363, %v2365, %v2361
    %v2367 = vmul.f32 1.0, %v2366
    %v2368 = vtanh.pop %v2348
    %v2369 = vmul.f32 %v2367, %v2314
    %2371 = vrot.lane.b32.xlu0 %v2368, 64
    %v2372 = vpop.permute.xlu0 %2371
    %v2374 = vmul.f32 %v2367, %v2372
    %2376 = vrot.lane.b32.xlu0 %v2374, 32
    %v2377 = vpop.permute.xlu0 %2376
    %v2379 = vadd.f32 %v2369, %v2377
    %v2380 = vtanh.pop %v2379
    %2382 = vrot.lane.b32.xlu0 %v2380, 64
    %v2383 = vpop.permute.xlu0 %2382
    %v2385 = vmul.f32 %v2367, %v2383
    %2387 = vrot.lane.b32.xlu0 %v2385, 32
    %v2388 = vpop.permute.xlu0 %2387
    %2390 = vst.msk [vmem:[#allocation4 + $0x10] sm:$0xff] %vm2258, %v2388
    %2391 = vst.msk [vmem:[#allocation4 + $0x28] sm:$0xff] %vm2260, %v2388
    %v2392 = vld [vmem:[#allocation3 + $0x18] sm:$0xff]
    %v2393 = vpack.c.bf16 %v2385, %v2385
    %2395 = vrot.lane.b32.xlu0 %v2393, 32
    %v2396 = vpop.permute.xlu0 %2395
    %v2398 = vsel %vm111, %v2396, 0
    %2400 = vmatpush.bf16.msra.mxu0 0
    %2401 = vmatpush.bf16.msra.mxu0 0
    %2402 = vmatpush.bf16.msra.mxu0 0
    %2403 = vmatpush.bf16.msra.mxu0 0
    %2404 = vmatpush.bf16.msra.mxu0 0
    %2405 = vmatpush.bf16.msra.mxu0 0
    %2406 = vmatpush.bf16.msra.mxu0 %v2200
    %2407 = vmatpush.bf16.msra.mxu0 %v2199
    %2408 = vmatmul.bf16.gmra.mxu0 %v2398
    %v2409 = vpop.f32.mrf.mxu0
    %v2410 = vadd.f32 0.0, %v2409
    %v2411 = vpop.f32.mrf.mxu0
    %2412 = vdwg.mxu0
    %v2413 = vadd.f32 %v2392, %v2410
    %v2414 = vxor.u32 %v2413, 2147483648
    %v2415 = vmul.f32 %v2414, 1.442695
    %v2416 = vpow.pop %v2415
    %v2417 = vadd.f32 %v2416, 1.0
    %v2418 = vrcp.pop %v2417
    %v2419 = vmul.f32 %v2417, %v2418
    %v2420 = vsub.f32 1.0, %v2419
    %v2421 = vmul.f32 %v2418, %v2420
    %v2422 = vadd.f32 %v2418, %v2421
    %vm2423 = vweird.f32 %v2417
    %vm2424 = vweird.f32 %v2418
    %vm2425 = vmor %vm2423, %vm2424
    %v2426 = vsel %vm2425, %v2418, %v2422
    %v2427 = vand.u32 2147483647, %v2417
    %vm2428 = vcmp.eq.f32.partialorder %v2427, 8.507059e+37
    %v2429 = vand.u32 %v2417, 2147483648
    %v2430 = vor.u32 1.1754944e-38, %v2429
    %v2431 = vsel %vm2428, %v2430, %v2426
    %v2432 = vmul.f32 1.0, %v2431
    %v2433 = vtanh.pop %v2413
    %v2434 = vmul.f32 %v2432, %v2379
    %2436 = vrot.lane.b32.xlu0 %v2433, 64
    %v2437 = vpop.permute.xlu0 %2436
    %v2439 = vmul.f32 %v2432, %v2437
    %2441 = vrot.lane.b32.xlu0 %v2439, 32
    %v2442 = vpop.permute.xlu0 %2441
    %v2444 = vadd.f32 %v2434, %v2442
    %v2445 = vtanh.pop %v2444
    %2447 = vrot.lane.b32.xlu0 %v2445, 64
    %v2448 = vpop.permute.xlu0 %2447
    %v2450 = vmul.f32 %v2432, %v2448
    %2452 = vrot.lane.b32.xlu0 %v2450, 32
    %v2453 = vpop.permute.xlu0 %2452
    %2455 = vst.msk [vmem:[#allocation4 + $0x18] sm:$0xff] %vm2258, %v2453
    %2456 = vst.msk [vmem:[#allocation4 + $0x20] sm:$0xff] %vm2260, %v2453
    %v2457 = vld [vmem:[#allocation3 + $0x20] sm:$0xff]
    %v2458 = vpack.c.bf16 %v2450, %v2450
    %2460 = vrot.lane.b32.xlu0 %v2458, 32
    %v2461 = vpop.permute.xlu0 %2460
    %v2463 = vsel %vm111, %v2461, 0
    %2465 = vmatpush.bf16.msra.mxu0 0
    %2466 = vmatpush.bf16.msra.mxu0 0
    %2467 = vmatpush.bf16.msra.mxu0 0
    %2468 = vmatpush.bf16.msra.mxu0 0
    %2469 = vmatpush.bf16.msra.mxu0 0
    %2470 = vmatpush.bf16.msra.mxu0 0
    %2471 = vmatpush.bf16.msra.mxu0 %v2200
    %2472 = vmatpush.bf16.msra.mxu0 %v2199
    %2473 = vmatmul.bf16.gmra.mxu0 %v2463
    %v2474 = vpop.f32.mrf.mxu0
    %v2475 = vadd.f32 0.0, %v2474
    %v2476 = vpop.f32.mrf.mxu0
    %2477 = vdwg.mxu0
    %v2478 = vadd.f32 %v2457, %v2475
    %v2479 = vxor.u32 %v2478, 2147483648
    %v2480 = vmul.f32 %v2479, 1.442695
    %v2481 = vpow.pop %v2480
    %v2482 = vadd.f32 %v2481, 1.0
    %v2483 = vrcp.pop %v2482
    %v2484 = vmul.f32 %v2482, %v2483
    %v2485 = vsub.f32 1.0, %v2484
    %v2486 = vmul.f32 %v2483, %v2485
    %v2487 = vadd.f32 %v2483, %v2486
    %vm2488 = vweird.f32 %v2482
    %vm2489 = vweird.f32 %v2483
    %vm2490 = vmor %vm2488, %vm2489
    %v2491 = vsel %vm2490, %v2483, %v2487
    %v2492 = vand.u32 2147483647, %v2482
    %vm2493 = vcmp.eq.f32.partialorder %v2492, 8.507059e+37
    %v2494 = vand.u32 %v2482, 2147483648
    %v2495 = vor.u32 1.1754944e-38, %v2494
    %v2496 = vsel %vm2493, %v2495, %v2491
    %v2497 = vmul.f32 1.0, %v2496
    %v2498 = vtanh.pop %v2478
    %v2499 = vmul.f32 %v2497, %v2444
    %2501 = vrot.lane.b32.xlu0 %v2498, 64
    %v2502 = vpop.permute.xlu0 %2501
    %v2504 = vmul.f32 %v2497, %v2502
    %2506 = vrot.lane.b32.xlu0 %v2504, 32
    %v2507 = vpop.permute.xlu0 %2506
    %v2509 = vadd.f32 %v2499, %v2507
    %v2510 = vtanh.pop %v2509
    %2512 = vrot.lane.b32.xlu0 %v2510, 64
    %v2513 = vpop.permute.xlu0 %2512
    %v2515 = vmul.f32 %v2497, %v2513
    %2517 = vrot.lane.b32.xlu0 %v2515, 32
    %v2518 = vpop.permute.xlu0 %2517
    %2520 = vst.msk [vmem:[#allocation4 + $0x20] sm:$0xff] %vm2258, %v2518
    %2521 = vst.msk [vmem:[#allocation4 + $0x18] sm:$0xff] %vm2260, %v2518
    %v2522 = vld [vmem:[#allocation3 + $0x28] sm:$0xff]
    %v2523 = vpack.c.bf16 %v2515, %v2515
    %2525 = vrot.lane.b32.xlu0 %v2523, 32
    %v2526 = vpop.permute.xlu0 %2525
    %v2528 = vsel %vm111, %v2526, 0
    %2530 = vmatpush.bf16.msra.mxu0 0
    %2531 = vmatpush.bf16.msra.mxu0 0
    %2532 = vmatpush.bf16.msra.mxu0 0
    %2533 = vmatpush.bf16.msra.mxu0 0
    %2534 = vmatpush.bf16.msra.mxu0 0
    %2535 = vmatpush.bf16.msra.mxu0 0
    %2536 = vmatpush.bf16.msra.mxu0 %v2200
    %2537 = vmatpush.bf16.msra.mxu0 %v2199
    %2538 = vmatmul.bf16.gmra.mxu0 %v2528
    %v2539 = vpop.f32.mrf.mxu0
    %v2540 = vadd.f32 0.0, %v2539
    %v2541 = vpop.f32.mrf.mxu0
    %2542 = vdwg.mxu0
    %v2543 = vadd.f32 %v2522, %v2540
    %v2544 = vxor.u32 %v2543, 2147483648
    %v2545 = vmul.f32 %v2544, 1.442695
    %v2546 = vpow.pop %v2545
    %v2547 = vadd.f32 %v2546, 1.0
    %v2548 = vrcp.pop %v2547
    %v2549 = vmul.f32 %v2547, %v2548
    %v2550 = vsub.f32 1.0, %v2549
    %v2551 = vmul.f32 %v2548, %v2550
    %v2552 = vadd.f32 %v2548, %v2551
    %vm2553 = vweird.f32 %v2547
    %vm2554 = vweird.f32 %v2548
    %vm2555 = vmor %vm2553, %vm2554
    %v2556 = vsel %vm2555, %v2548, %v2552
    %v2557 = vand.u32 2147483647, %v2547
    %vm2558 = vcmp.eq.f32.partialorder %v2557, 8.507059e+37
    %v2559 = vand.u32 %v2547, 2147483648
    %v2560 = vor.u32 1.1754944e-38, %v2559
    %v2561 = vsel %vm2558, %v2560, %v2556
    %v2562 = vmul.f32 1.0, %v2561
    %v2563 = vtanh.pop %v2543
    %v2564 = vmul.f32 %v2562, %v2509
    %2566 = vrot.lane.b32.xlu0 %v2563, 64
    %v2567 = vpop.permute.xlu0 %2566
    %v2569 = vmul.f32 %v2562, %v2567
    %2571 = vrot.lane.b32.xlu0 %v2569, 32
    %v2572 = vpop.permute.xlu0 %2571
    %v2574 = vadd.f32 %v2564, %v2572
    %v2575 = vtanh.pop %v2574
    %2577 = vrot.lane.b32.xlu0 %v2575, 64
    %v2578 = vpop.permute.xlu0 %2577
    %v2580 = vmul.f32 %v2562, %v2578
    %2582 = vrot.lane.b32.xlu0 %v2580, 32
    %v2583 = vpop.permute.xlu0 %2582
    %2585 = vst.msk [vmem:[#allocation4 + $0x28] sm:$0xff] %vm2258, %v2583
    %2586 = vst.msk [vmem:[#allocation4 + $0x10] sm:$0xff] %vm2260, %v2583
    %v2587 = vld [vmem:[#allocation3 + $0x30] sm:$0xff]
    %v2588 = vpack.c.bf16 %v2580, %v2580
    %2590 = vrot.lane.b32.xlu0 %v2588, 32
    %v2591 = vpop.permute.xlu0 %2590
    %v2593 = vsel %vm111, %v2591, 0
    %2595 = vmatpush.bf16.msra.mxu0 0
    %2596 = vmatpush.bf16.msra.mxu0 0
    %2597 = vmatpush.bf16.msra.mxu0 0
    %2598 = vmatpush.bf16.msra.mxu0 0
    %2599 = vmatpush.bf16.msra.mxu0 0
    %2600 = vmatpush.bf16.msra.mxu0 0
    %2601 = vmatpush.bf16.msra.mxu0 %v2200
    %2602 = vmatpush.bf16.msra.mxu0 %v2199
    %2603 = vmatmul.bf16.gmra.mxu0 %v2593
    %v2604 = vpop.f32.mrf.mxu0
    %v2605 = vadd.f32 0.0, %v2604
    %v2606 = vpop.f32.mrf.mxu0
    %2607 = vdwg.mxu0
    %v2608 = vadd.f32 %v2587, %v2605
    %v2609 = vxor.u32 %v2608, 2147483648
    %v2610 = vmul.f32 %v2609, 1.442695
    %v2611 = vpow.pop %v2610
    %v2612 = vadd.f32 %v2611, 1.0
    %v2613 = vrcp.pop %v2612
    %v2614 = vmul.f32 %v2612, %v2613
    %v2615 = vsub.f32 1.0, %v2614
    %v2616 = vmul.f32 %v2613, %v2615
    %v2617 = vadd.f32 %v2613, %v2616
    %vm2618 = vweird.f32 %v2612
    %vm2619 = vweird.f32 %v2613
    %vm2620 = vmor %vm2618, %vm2619
    %v2621 = vsel %vm2620, %v2613, %v2617
    %v2622 = vand.u32 2147483647, %v2612
    %vm2623 = vcmp.eq.f32.partialorder %v2622, 8.507059e+37
    %v2624 = vand.u32 %v2612, 2147483648
    %v2625 = vor.u32 1.1754944e-38, %v2624
    %v2626 = vsel %vm2623, %v2625, %v2621
    %v2627 = vmul.f32 1.0, %v2626
    %v2628 = vtanh.pop %v2608
    %v2629 = vmul.f32 %v2627, %v2574
    %2631 = vrot.lane.b32.xlu0 %v2628, 64
    %v2632 = vpop.permute.xlu0 %2631
    %v2634 = vmul.f32 %v2627, %v2632
    %2636 = vrot.lane.b32.xlu0 %v2634, 32
    %v2637 = vpop.permute.xlu0 %2636
    %v2639 = vadd.f32 %v2629, %v2637
    %v2640 = vtanh.pop %v2639
    %2642 = vrot.lane.b32.xlu0 %v2640, 64
    %v2643 = vpop.permute.xlu0 %2642
    %v2645 = vmul.f32 %v2627, %v2643
    %2647 = vrot.lane.b32.xlu0 %v2645, 32
    %v2648 = vpop.permute.xlu0 %2647
    %2650 = vst.msk [vmem:[#allocation4 + $0x30] sm:$0xff] %vm2258, %v2648
    %2651 = vst.msk [vmem:[#allocation4 + $0x8] sm:$0xff] %vm2260, %v2648
    %v2652 = vld [vmem:[#allocation3 + $0x38] sm:$0xff]
    %v2653 = vpack.c.bf16 %v2645, %v2645
    %2655 = vrot.lane.b32.xlu0 %v2653, 32
    %v2656 = vpop.permute.xlu0 %2655
    %v2658 = vsel %vm111, %v2656, 0
    %2660 = vmatpush.bf16.msra.mxu0 0
    %2661 = vmatpush.bf16.msra.mxu0 0
    %2662 = vmatpush.bf16.msra.mxu0 0
    %2663 = vmatpush.bf16.msra.mxu0 0
    %2664 = vmatpush.bf16.msra.mxu0 0
    %2665 = vmatpush.bf16.msra.mxu0 0
    %2666 = vmatpush.bf16.msra.mxu0 %v2200
    %2667 = vmatpush.bf16.msra.mxu0 %v2199
    %2668 = vmatmul.bf16.gmra.mxu0 %v2658
    %v2669 = vpop.f32.mrf.mxu0
    %v2670 = vadd.f32 0.0, %v2669
    %v2671 = vpop.f32.mrf.mxu0
    %2672 = vdwg.mxu0
    %v2673 = vadd.f32 %v2652, %v2670
    %v2674 = vxor.u32 %v2673, 2147483648
    %v2675 = vmul.f32 %v2674, 1.442695
    %v2676 = vpow.pop %v2675
    %v2677 = vadd.f32 %v2676, 1.0
    %v2678 = vrcp.pop %v2677
    %v2679 = vmul.f32 %v2677, %v2678
    %v2680 = vsub.f32 1.0, %v2679
    %v2681 = vmul.f32 %v2678, %v2680
    %v2682 = vadd.f32 %v2678, %v2681
    %vm2683 = vweird.f32 %v2677
    %vm2684 = vweird.f32 %v2678
    %vm2685 = vmor %vm2683, %vm2684
    %v2686 = vsel %vm2685, %v2678, %v2682
    %v2687 = vand.u32 2147483647, %v2677
    %vm2688 = vcmp.eq.f32.partialorder %v2687, 8.507059e+37
    %v2689 = vand.u32 %v2677, 2147483648
    %v2690 = vor.u32 1.1754944e-38, %v2689
    %v2691 = vsel %vm2688, %v2690, %v2686
    %v2692 = vmul.f32 1.0, %v2691
    %v2693 = vtanh.pop %v2673
    %v2694 = vmul.f32 %v2692, %v2639
    %2696 = vrot.lane.b32.xlu0 %v2693, 64
    %v2697 = vpop.permute.xlu0 %2696
    %v2699 = vmul.f32 %v2692, %v2697
    %2701 = vrot.lane.b32.xlu0 %v2699, 32
    %v2702 = vpop.permute.xlu0 %2701
    %v2704 = vadd.f32 %v2694, %v2702
    %v2705 = vtanh.pop %v2704
    %2707 = vrot.lane.b32.xlu0 %v2705, 64
    %v2708 = vpop.permute.xlu0 %2707
    %v2710 = vmul.f32 %v2692, %v2708
    %2712 = vrot.lane.b32.xlu0 %v2710, 32
    %v2713 = vpop.permute.xlu0 %2712
    %2715 = vst.msk [vmem:[#allocation4 + $0x38] sm:$0xff] %vm2258, %v2713
    %2716 = vst.msk [vmem:[#allocation4] sm:$0xff] %vm2260, %v2713
    %v2717 = vld [vmem:[#allocation4] sm:$0xff]
    %v2718 = vld [vmem:[#allocation4 + $0x8] sm:$0xff]
    %v2719 = vld [vmem:[#allocation4 + $0x10] sm:$0xff]
    %v2720 = vld [vmem:[#allocation4 + $0x18] sm:$0xff]
    %v2721 = vld [vmem:[#allocation4 + $0x20] sm:$0xff]
    %v2722 = vld [vmem:[#allocation4 + $0x28] sm:$0xff]
    %v2723 = vld [vmem:[#allocation4 + $0x30] sm:$0xff]
    %v2724 = vld [vmem:[#allocation4 + $0x38] sm:$0xff]
    %v2725 = vld [vmem:[%s5] sm:$0xff]
    %v2726 = vld [vmem:[%s5 + $0x8] sm:$0xff]
    %v2727 = vld [vmem:[%s5 + $0x10] sm:$0xff]
    %v2728 = vld [vmem:[%s5 + $0x18] sm:$0xff]
    %v2729 = vld [vmem:[%s6] sm:$0x1]
    %v2731 = vperm.slane %v2729, 0
    %v2734 = vsel %vm111, %v2717, 0
    %v2737 = vsel %vm111, %v2718, 0
    %v2740 = vsel %vm111, %v2719, 0
    %v2743 = vsel %vm111, %v2720, 0
    %v2746 = vsel %vm111, %v2721, 0
    %v2749 = vsel %vm111, %v2722, 0
    %v2752 = vsel %vm111, %v2723, 0
    %v2755 = vsel %vm111, %v2724, 0
    %2757 = vmatpush.msra.mxu0 0.0
    %2758 = vmatpush.msra.mxu0 0.0
    %2759 = vmatpush.msra.mxu0 0.0
    %2760 = vmatpush.msra.mxu0 0.0
    %2761 = vmatpush.msra.mxu0 0.0
    %2762 = vmatpush.msra.mxu0 0.0
    %2763 = vmatpush.msra.mxu0 0.0
    %2764 = vmatpush.msra.mxu0 0.0
    %2765 = vmatpush.msra.mxu0 0.0
    %2766 = vmatpush.msra.mxu0 0.0
    %2767 = vmatpush.msra.mxu0 0.0
    %2768 = vmatpush.msra.mxu0 0.0
    %2769 = vmatpush.msra.mxu0 %v2728
    %2770 = vmatpush.msra.mxu0 %v2727
    %2771 = vmatpush.msra.mxu0 %v2726
    %2772 = vmatpush.msra.mxu0 %v2725
    %2773 = vmatmul.f32.gmra.mxu0 %v2734
    %v2774 = vpop.f32.mrf.mxu0
    %v2775 = vadd.f32 %v2731, %v2774
    %2776 = vmatmul.f32.gmra.mxu0 %v2737
    %v2777 = vpop.f32.mrf.mxu0
    %v2778 = vadd.f32 %v2731, %v2777
    %2779 = vmatmul.f32.gmra.mxu0 %v2740
    %v2780 = vpop.f32.mrf.mxu0
    %v2781 = vadd.f32 %v2731, %v2780
    %2782 = vmatmul.f32.gmra.mxu0 %v2743
    %v2783 = vpop.f32.mrf.mxu0
    %v2784 = vadd.f32 %v2731, %v2783
    %2785 = vmatmul.f32.gmra.mxu0 %v2746
    %v2786 = vpop.f32.mrf.mxu0
    %v2787 = vadd.f32 %v2731, %v2786
    %2788 = vmatmul.f32.gmra.mxu0 %v2749
    %v2789 = vpop.f32.mrf.mxu0
    %v2790 = vadd.f32 %v2731, %v2789
    %2791 = vmatmul.f32.gmra.mxu0 %v2752
    %v2792 = vpop.f32.mrf.mxu0
    %v2793 = vadd.f32 %v2731, %v2792
    %2794 = vmatmul.f32.gmra.mxu0 %v2755
    %v2795 = vpop.f32.mrf.mxu0
    %v2796 = vadd.f32 %v2731, %v2795
    %2797 = vdwg.mxu0
    %v2798 = vmax.f32 %v2775, 0.0
    %v2799 = vmax.f32 %v2778, 0.0
    %v2800 = vmax.f32 %v2781, 0.0
    %v2801 = vmax.f32 %v2784, 0.0
    %v2802 = vmax.f32 %v2787, 0.0
    %v2803 = vmax.f32 %v2790, 0.0
    %v2804 = vmax.f32 %v2793, 0.0
    %v2805 = vmax.f32 %v2796, 0.0
    %v2806 = vld [vmem:[#allocation7] sm:$0xff]
    %v2807 = vld [vmem:[#allocation7 + $0x8] sm:$0xff]
    %v2808 = vld [vmem:[#allocation7 + $0x10] sm:$0xff]
    %v2809 = vld [vmem:[#allocation7 + $0x18] sm:$0xff]
    %v2810 = vld [vmem:[%s8] sm:$0x1]
    %v2812 = vperm.slane %v2810, 0
    %v2815 = vsel %vm111, %v2798, 0
    %v2818 = vsel %vm111, %v2799, 0
    %v2821 = vsel %vm111, %v2800, 0
    %v2824 = vsel %vm111, %v2801, 0
    %v2827 = vsel %vm111, %v2802, 0
    %v2830 = vsel %vm111, %v2803, 0
    %v2833 = vsel %vm111, %v2804, 0
    %v2836 = vsel %vm111, %v2805, 0
    %2838 = vmatpush.msra.mxu0 0.0
    %2839 = vmatpush.msra.mxu0 0.0
    %2840 = vmatpush.msra.mxu0 0.0
    %2841 = vmatpush.msra.mxu0 0.0
    %2842 = vmatpush.msra.mxu0 0.0
    %2843 = vmatpush.msra.mxu0 0.0
    %2844 = vmatpush.msra.mxu0 0.0
    %2845 = vmatpush.msra.mxu0 0.0
    %2846 = vmatpush.msra.mxu0 0.0
    %2847 = vmatpush.msra.mxu0 0.0
    %2848 = vmatpush.msra.mxu0 0.0
    %2849 = vmatpush.msra.mxu0 0.0
    %2850 = vmatpush.msra.mxu0 %v2809
    %2851 = vmatpush.msra.mxu0 %v2808
    %2852 = vmatpush.msra.mxu0 %v2807
    %2853 = vmatpush.msra.mxu0 %v2806
    %2854 = vmatmul.f32.gmra.mxu0 %v2815
    %v2855 = vpop.f32.mrf.mxu0
    %v2856 = vadd.f32 %v2812, %v2855
    %2857 = vmatmul.f32.gmra.mxu0 %v2818
    %v2858 = vpop.f32.mrf.mxu0
    %v2859 = vadd.f32 %v2812, %v2858
    %2860 = vmatmul.f32.gmra.mxu0 %v2821
    %v2861 = vpop.f32.mrf.mxu0
    %v2862 = vadd.f32 %v2812, %v2861
    %2863 = vmatmul.f32.gmra.mxu0 %v2824
    %v2864 = vpop.f32.mrf.mxu0
    %v2865 = vadd.f32 %v2812, %v2864
    %2866 = vmatmul.f32.gmra.mxu0 %v2827
    %v2867 = vpop.f32.mrf.mxu0
    %v2868 = vadd.f32 %v2812, %v2867
    %2869 = vmatmul.f32.gmra.mxu0 %v2830
    %v2870 = vpop.f32.mrf.mxu0
    %v2871 = vadd.f32 %v2812, %v2870
    %2872 = vmatmul.f32.gmra.mxu0 %v2833
    %v2873 = vpop.f32.mrf.mxu0
    %v2874 = vadd.f32 %v2812, %v2873
    %2875 = vmatmul.f32.gmra.mxu0 %v2836
    %v2876 = vpop.f32.mrf.mxu0
    %v2877 = vadd.f32 %v2812, %v2876
    %2878 = vdwg.mxu0
    %v2879 = vmax.f32 %v2856, 0.0
    %v2880 = vmax.f32 %v2859, 0.0
    %v2881 = vmax.f32 %v2862, 0.0
    %v2882 = vmax.f32 %v2865, 0.0
    %v2883 = vmax.f32 %v2868, 0.0
    %v2884 = vmax.f32 %v2871, 0.0
    %v2885 = vmax.f32 %v2874, 0.0
    %v2886 = vmax.f32 %v2877, 0.0
    %v2887 = vld [vmem:[%s9] sm:$0xff]
    %v2888 = vld [vmem:[%s9 + $0x8] sm:$0xff]
    %v2889 = vld [vmem:[%s9 + $0x10] sm:$0xff]
    %v2890 = vld [vmem:[%s9 + $0x18] sm:$0xff]
    %v2891 = vld [vmem:[%s10] sm:$0x1]
    %v2893 = vperm.slane %v2891, 0
    %v2896 = vsel %vm111, %v2879, 0
    %v2899 = vsel %vm111, %v2880, 0
    %v2902 = vsel %vm111, %v2881, 0
    %v2905 = vsel %vm111, %v2882, 0
    %v2908 = vsel %vm111, %v2883, 0
    %v2911 = vsel %vm111, %v2884, 0
    %v2914 = vsel %vm111, %v2885, 0
    %v2917 = vsel %vm111, %v2886, 0
    %2919 = vmatpush.msra.mxu0 0.0
    %2920 = vmatpush.msra.mxu0 0.0
    %2921 = vmatpush.msra.mxu0 0.0
    %2922 = vmatpush.msra.mxu0 0.0
    %2923 = vmatpush.msra.mxu0 0.0
    %2924 = vmatpush.msra.mxu0 0.0
    %2925 = vmatpush.msra.mxu0 0.0
    %2926 = vmatpush.msra.mxu0 0.0
    %2927 = vmatpush.msra.mxu0 0.0
    %2928 = vmatpush.msra.mxu0 0.0
    %2929 = vmatpush.msra.mxu0 0.0
    %2930 = vmatpush.msra.mxu0 0.0
    %2931 = vmatpush.msra.mxu0 %v2890
    %2932 = vmatpush.msra.mxu0 %v2889
    %2933 = vmatpush.msra.mxu0 %v2888
    %2934 = vmatpush.msra.mxu0 %v2887
    %2935 = vmatmul.f32.gmra.mxu0 %v2896
    %v2936 = vpop.f32.mrf.mxu0
    %v2937 = vadd.f32 %v2893, %v2936
    %2938 = vmatmul.f32.gmra.mxu0 %v2899
    %v2939 = vpop.f32.mrf.mxu0
    %v2940 = vadd.f32 %v2893, %v2939
    %2941 = vmatmul.f32.gmra.mxu0 %v2902
    %v2942 = vpop.f32.mrf.mxu0
    %v2943 = vadd.f32 %v2893, %v2942
    %2944 = vmatmul.f32.gmra.mxu0 %v2905
    %v2945 = vpop.f32.mrf.mxu0
    %v2946 = vadd.f32 %v2893, %v2945
    %2947 = vmatmul.f32.gmra.mxu0 %v2908
    %v2948 = vpop.f32.mrf.mxu0
    %v2949 = vadd.f32 %v2893, %v2948
    %2950 = vmatmul.f32.gmra.mxu0 %v2911
    %v2951 = vpop.f32.mrf.mxu0
    %v2952 = vadd.f32 %v2893, %v2951
    %2953 = vmatmul.f32.gmra.mxu0 %v2914
    %v2954 = vpop.f32.mrf.mxu0
    %v2955 = vadd.f32 %v2893, %v2954
    %2956 = vmatmul.f32.gmra.mxu0 %v2917
    %v2957 = vpop.f32.mrf.mxu0
    %v2958 = vadd.f32 %v2893, %v2957
    %2959 = vdwg.mxu0
    %vm2960 = vcmask 31744
    %v2961 = vsel %vm2960, %v2937, -inf
    %2962 = vmax.xlane.f32.xlu0 %v2961
    %v2963 = vpop.xlane.xlu0 %2962
    %v2964 = vsel %vm2960, %v2940, -inf
    %2965 = vmax.xlane.f32.xlu0 %v2964
    %v2966 = vpop.xlane.xlu0 %2965
    %v2967 = vsel %vm2960, %v2943, -inf
    %2968 = vmax.xlane.f32.xlu0 %v2967
    %v2969 = vpop.xlane.xlu0 %2968
    %v2970 = vsel %vm2960, %v2946, -inf
    %2971 = vmax.xlane.f32.xlu0 %v2970
    %v2972 = vpop.xlane.xlu0 %2971
    %v2973 = vsel %vm2960, %v2949, -inf
    %2974 = vmax.xlane.f32.xlu0 %v2973
    %v2975 = vpop.xlane.xlu0 %2974
    %v2976 = vsel %vm2960, %v2952, -inf
    %2977 = vmax.xlane.f32.xlu0 %v2976
    %v2978 = vpop.xlane.xlu0 %2977
    %v2979 = vsel %vm2960, %v2955, -inf
    %2980 = vmax.xlane.f32.xlu0 %v2979
    %v2981 = vpop.xlane.xlu0 %2980
    %v2982 = vsel %vm2960, %v2958, -inf
    %2983 = vmax.xlane.f32.xlu0 %v2982
    %v2984 = vpop.xlane.xlu0 %2983
    %v2985 = vsub.f32 %v2937, %v2963
    %v2986 = vsub.f32 %v2940, %v2966
    %v2987 = vsub.f32 %v2943, %v2969
    %v2988 = vsub.f32 %v2946, %v2972
    %v2989 = vsub.f32 %v2949, %v2975
    %v2990 = vsub.f32 %v2952, %v2978
    %v2991 = vsub.f32 %v2955, %v2981
    %v2992 = vsub.f32 %v2958, %v2984
    %v2993 = vmul.f32 %v2985, 1.442695
    %v2994 = vpow.pop %v2993
    %v2995 = vmul.f32 %v2986, 1.442695
    %v2996 = vpow.pop %v2995
    %v2997 = vmul.f32 %v2987, 1.442695
    %v2998 = vpow.pop %v2997
    %v2999 = vmul.f32 %v2988, 1.442695
    %v3000 = vpow.pop %v2999
    %v3001 = vmul.f32 %v2989, 1.442695
    %v3002 = vpow.pop %v3001
    %v3003 = vmul.f32 %v2990, 1.442695
    %v3004 = vpow.pop %v3003
    %v3005 = vmul.f32 %v2991, 1.442695
    %v3006 = vpow.pop %v3005
    %v3007 = vmul.f32 %v2992, 1.442695
    %v3008 = vpow.pop %v3007
    %v3009 = vsel %vm2960, %v2994, 0.0
    %3010 = vadd.xlane.f32.xlu0 %v3009
    %v3011 = vpop.xlane.xlu0 %3010
    %v3012 = vsel %vm2960, %v2996, 0.0
    %3013 = vadd.xlane.f32.xlu0 %v3012
    %v3014 = vpop.xlane.xlu0 %3013
    %v3015 = vsel %vm2960, %v2998, 0.0
    %3016 = vadd.xlane.f32.xlu0 %v3015
    %v3017 = vpop.xlane.xlu0 %3016
    %v3018 = vsel %vm2960, %v3000, 0.0
    %3019 = vadd.xlane.f32.xlu0 %v3018
    %v3020 = vpop.xlane.xlu0 %3019
    %v3021 = vsel %vm2960, %v3002, 0.0
    %3022 = vadd.xlane.f32.xlu0 %v3021
    %v3023 = vpop.xlane.xlu0 %3022
    %v3024 = vsel %vm2960, %v3004, 0.0
    %3025 = vadd.xlane.f32.xlu0 %v3024
    %v3026 = vpop.xlane.xlu0 %3025
    %v3027 = vsel %vm2960, %v3006, 0.0
    %3028 = vadd.xlane.f32.xlu0 %v3027
    %v3029 = vpop.xlane.xlu0 %3028
    %v3030 = vsel %vm2960, %v3008, 0.0
    %3031 = vadd.xlane.f32.xlu0 %v3030
    %v3032 = vpop.xlane.xlu0 %3031
    %v3033 = vlog2.pop %v3011
    %v3034 = vmul.f32 %v3033, 0.6931472
    %v3035 = vlog2.pop %v3014
    %v3036 = vmul.f32 %v3035, 0.6931472
    %v3037 = vlog2.pop %v3017
    %v3038 = vmul.f32 %v3037, 0.6931472
    %v3039 = vlog2.pop %v3020
    %v3040 = vmul.f32 %v3039, 0.6931472
    %v3041 = vlog2.pop %v3023
    %v3042 = vmul.f32 %v3041, 0.6931472
    %v3043 = vlog2.pop %v3026
    %v3044 = vmul.f32 %v3043, 0.6931472
    %v3045 = vlog2.pop %v3029
    %v3046 = vmul.f32 %v3045, 0.6931472
    %v3047 = vlog2.pop %v3032
    %v3048 = vmul.f32 %v3047, 0.6931472
    %v3049 = vsub.f32 %v2985, %v3034
    %v3050 = vsub.f32 %v2986, %v3036
    %v3051 = vsub.f32 %v2987, %v3038
    %v3052 = vsub.f32 %v2988, %v3040
    %v3053 = vsub.f32 %v2989, %v3042
    %v3054 = vsub.f32 %v2990, %v3044
    %v3055 = vsub.f32 %v2991, %v3046
    %v3056 = vsub.f32 %v2992, %v3048
    %3057 = vst.msk [vmem:[%s11] sm:$0xff] %vm2960, %v3049
    %3058 = vst.msk [vmem:[%s11 + $0x8] sm:$0xff] %vm2960, %v3050
    %3059 = vst.msk [vmem:[%s11 + $0x10] sm:$0xff] %vm2960, %v3051
    %3060 = vst.msk [vmem:[%s11 + $0x18] sm:$0xff] %vm2960, %v3052
    %3061 = vst.msk [vmem:[%s11 + $0x20] sm:$0xff] %vm2960, %v3053
    %3062 = vst.msk [vmem:[%s11 + $0x28] sm:$0xff] %vm2960, %v3054
    %3063 = vst.msk [vmem:[%s11 + $0x30] sm:$0xff] %vm2960, %v3055
    %3064 = vst.msk [vmem:[%s11 + $0x38] sm:$0xff] %vm2960, %v3056
    // Predicated region
    $region54: #{lstm_tagger_forward.1} parent=1 // pred_check
      _
    $region55: #{lstm_tagger_forward.1} parent=1 // pred_check_branch
      %3066 = sbr.rel (0) target = $region57
    $region56: #{lstm_tagger_forward.1} parent=1 // pred_region
      _
    $region57: #{lstm_tagger_forward.1} parent=1 // pred_fallthru
      _
    // Predicated region
    $region58: #{lstm_tagger_forward.1} parent=1 // pred_check
      _
    $region59: #{lstm_tagger_forward.1} parent=1 // pred_check_branch
      %3068 = sbr.rel (0) target = $region61
    $region60: #{lstm_tagger_forward.1} parent=1 // pred_region
      _
    $region61: #{lstm_tagger_forward.1} parent=1 // pred_fallthru
      _
    %3069 = vsyncpa [#allocation6], 1
    %3070 = vsyncpa [#allocation8], 1

</llo_original>
